<compile_context>
chip_gen: v7x
topology: tpu7x:2x2x1
jax: 0.10.0
libtpu: 0.0.40
codegen_flags: <defaults>
</compile_context>

<pallas_src>
import functools

import jax
import jax.numpy as jnp
from jax.experimental import pallas as pl
from jax.experimental.pallas import tpu as pltpu


def _sab_lstm_kernel(top_k, time_block, hist_chunk,
                     x_ref, wx_ref, wh_ref, bg_ref, wp_ref, bp_ref, wa_ref,
                     wfc_ref, bfc_ref,
                     merged_ref,
                     h_scr, c_scr, hold_scr, s2_scr, acc_scr):
    T, Bp, H = hold_scr.shape
    C = bfc_ref.shape[-1]
    P = merged_ref.shape[-1]
    tb = pl.program_id(0)

    @pl.when(tb == 0)
    def _():
        h_scr[...] = jnp.zeros_like(h_scr)
        c_scr[...] = jnp.zeros_like(c_scr)
        hold_scr[...] = jnp.zeros_like(hold_scr)   # slot 0 == initial zero h_t
        s2_scr[...] = jnp.zeros_like(s2_scr)       # tanh(0) @ w_o == 0

    # ---- loop-invariant values hoisted out of the unrolled time loop ----
    wx = wx_ref[...]                       # (I, 4H)  fused gate weights [i|f|g|o]
    wh = wh_ref[...]                       # (H, 4H)
    bg = bg_ref[...]                       # (1, 4H)
    wp = wp_ref[...]                       # (H, H)   predict head
    bp = bp_ref[...]                       # (1, H)
    w_h = wa_ref[0:1, :]                   # (1, H)   w_t half acting on h_t
    w_o = wa_ref[1:2, :]                   # (1, H)   w_t half acting on h_old
    wfc_h = wfc_ref[0]                     # (H, C)
    wfc_a = wfc_ref[1]                     # (H, C)
    bfc = bfc_ref[...]                     # (1, C)
    mm = wx.dtype                          # matmul operand dtype (f32 / bf16)
    # history index lives on the LANE axis -> dense vregs for score / top-k
    col_idx = jax.lax.broadcasted_iota(jnp.int32, (Bp, T), 1)
    lane4h = jax.lax.broadcasted_iota(jnp.int32, (1, 4 * H), 1)
    g_lane = (lane4h >= 2 * H) & (lane4h < 3 * H)  # tanh-gate lanes
    # NEG sentinel is safe: |scores| <= ||w_t||_1 since tanh is bounded.
    NEG = jnp.float32(-1e30)
    eps = jnp.float32(1e-7)

    # ---- whole-block input projection: pulled off the recurrent critical
    #      path, M = time_block*Bp rows instead of Bp ----
    xg_blk = (jnp.dot(x_ref[...].astype(mm), wx,
                      preferred_element_type=jnp.float32)
              + bg)                                          # (time_block*Bp, 4H)

    h_prev = h_scr[...]                    # (Bp, H)
    c_prev = c_scr[...]                    # (Bp, H)
    s2 = s2_scr[...]                       # (Bp, T) cached tanh(h_old) @ w_o

    hnew_l, attn_l, hout_l = [], [], []

    for tt in range(time_block):
        t = tb * time_block + tt

        # ---- LSTMCell: only h_prev @ wh stays on the serial MXU chain ----
        gates = xg_blk[tt * Bp:(tt + 1) * Bp, :] + jnp.dot(
            h_prev.astype(mm), wh, preferred_element_type=jnp.float32)
        # full-width transcendentals + lane-mask blend instead of 4 narrow
        # per-gate EUP calls (gate order i | f | g | o)
        act = jnp.where(g_lane, jnp.tanh(gates), jax.nn.sigmoid(gates))
        i_g = act[:, 0 * H:1 * H]
        f_g = act[:, 1 * H:2 * H]
        g_g = act[:, 2 * H:3 * H]
        o_g = act[:, 3 * H:4 * H]
        c_new = f_g * c_prev + i_g * g_g
        h_new = o_g * jnp.tanh(c_new)

        # ---- sparse self attention over the history (remember = t + 1) ----
        # tanh(cat(h_t, h_old_r)) @ w_t == tanh(h_t)@w_h + tanh(h_old_r)@w_o;
        # the per-row second term is cached in s2 -> O(T*B) per step, all in a
        # lane-dense (Bp, T) layout.
        s1 = jnp.sum(jnp.tanh(h_new) * w_h, axis=-1, keepdims=True)   # (Bp, 1)
        attn = s1 + s2                                                 # (Bp, T)
        remember = t + 1
        valid = col_idx < remember

        # exact iterative top-k: k-th largest among valid entries, per row.
        # NOTE: tie-break relies on exact float equality; kth is taken from
        # cur itself, so this is exact in f32 (attention math is always f32).
        cur = jnp.where(valid, attn, NEG)
        kth = jnp.full((Bp, 1), NEG, dtype=jnp.float32)
        for _ in range(top_k):
            kth = jnp.max(cur, axis=1, keepdims=True)
            first = jnp.min(jnp.where(cur == kth, col_idx, T), axis=1,
                            keepdims=True)
            cur = jnp.where(col_idx == first, NEG, cur)
        # sentinel -> 0 keeps the (discarded) sparse branch finite/small when
        # remember <= top_k
        kth = jnp.where(kth <= NEG * 0.5, 0.0, kth)
        delta = kth + eps
        w_sp = jnp.where(valid, jnp.maximum(attn - delta, 0.0), 0.0)
        w_sp = w_sp / (jnp.sum(w_sp, axis=1, keepdims=True) + eps)
        # non-sparse branch keeps the raw, unnormalized scores (as in PyTorch)
        w_plain = jnp.where(valid, attn, 0.0)
        sel = (remember > top_k).astype(jnp.float32)
        attn_w = sel * w_sp + (1.0 - sel) * w_plain                    # (Bp, T)

        # ---- weighted history sum, chunked; zero tail (rows > t) skipped ----
        aw = attn_w.T                                                  # (T, Bp)
        c1 = min(T, hist_chunk)
        acc_scr[...] = jnp.sum(aw[0:c1, :, None] *
                               hold_scr[0:c1].astype(jnp.float32), axis=0)
        for c0 in range(hist_chunk, T, hist_chunk):
            c1 = min(T, c0 + hist_chunk)

            @pl.when(c0 <= t)
            def _(c0=c0, c1=c1):
                acc_scr[...] += jnp.sum(aw[c0:c1, :, None] *
                                        hold_scr[c0:c1].astype(jnp.float32),
                                        axis=0)
        attn_c = acc_scr[...]                                          # (Bp, H)
        h_out = h_new + attn_c

        hnew_l.append(h_new)
        attn_l.append(attn_c)
        hout_l.append(h_out)

        # ---- append h_out (and its cached score term) as history row t+1 ----
        @pl.when(t + 1 < T)
        def _():
            hold_scr[t + 1] = h_out.astype(hold_scr.dtype)
        s2_new = jnp.sum(jnp.tanh(h_out) * w_o, axis=-1, keepdims=True)  # (Bp,1)
        s2 = jnp.where(col_idx == (t + 1), s2_new, s2)     # no-op when t+1 >= T

        h_prev = h_out
        c_prev = c_new

    # ---- persist recurrent state / score cache across grid blocks ----
    h_scr[...] = h_prev
    c_scr[...] = c_prev
    s2_scr[...] = s2

    # ---- batched per-block matmuls (predict head + fc), off the serial chain
    hnew_all = jnp.concatenate(hnew_l, axis=0)         # (time_block*Bp, H)
    hout_all = jnp.concatenate(hout_l, axis=0)
    attn_all = jnp.concatenate(attn_l, axis=0)
    pred_all = (jnp.dot(hnew_all.astype(mm), wp,
                        preferred_element_type=jnp.float32) + bp)
    out_all = (jnp.dot(hout_all.astype(mm), wfc_h,
                       preferred_element_type=jnp.float32)
               + jnp.dot(attn_all.astype(mm), wfc_a,
                         preferred_element_type=jnp.float32)
               + bfc)

    # ---- single lane-dense writeback: [pred | h_out | fc_out | zero pad] ----
    pad = P - (2 * H + C)
    pieces = [pred_all, hout_all, out_all]
    if pad > 0:
        pieces.append(jnp.zeros((hout_all.shape[0], pad), jnp.float32))
    merged_ref[...] = jnp.concatenate(pieces, axis=1)


def sab_lstm_forward(x, params, top_k, *, time_block=4, hist_chunk=8,
                     matmul_dtype=jnp.float32, history_dtype=jnp.float32):
    """x: (B, T, I) float32.  params in PyTorch layout (see __main__).

    time_block    : timesteps processed per grid step (must divide T);
                    sweep 4..16 per chip (recurrence is serial anyway).
    hist_chunk    : history rows per chunk of the weighted sum (tail skipping).
    matmul_dtype  : MXU operand dtype (jnp.bfloat16 for v6e/v7x throughput);
                    state and attention math stay float32.
    history_dtype : storage dtype of the (T, Bp, H) history (bfloat16 halves
                    VMEM on v7x); accumulation stays float32.
    """
    (w_ih, w_hh, b_ih, b_hh, w_pred, b_pred, w_t, w_fc, b_fc) = params
    B, T, I = x.shape
    H = w_hh.shape[1]
    C = w_fc.shape[0]
    f32 = jnp.float32
    assert T % time_block == 0, "time_block must divide the sequence length"
    Bp = max(8, ((B + 7) // 8) * 8)          # pad batch to the f32 sublane count
    P = ((2 * H + C + 127) // 128) * 128     # lane-dense merged output width

    # Repack PyTorch-convention parameters for the kernel (glue, plain JAX).
    wx = w_ih.T.astype(matmul_dtype)                              # (I, 4H)
    wh = w_hh.T.astype(matmul_dtype)                              # (H, 4H)
    bg = (b_ih + b_hh).reshape(1, 4 * H).astype(f32)              # (1, 4H)
    wp = w_pred.T.astype(matmul_dtype)                            # (H, H)
    bp = b_pred.reshape(1, H).astype(f32)
    wa = jnp.stack([w_t[:H, 0], w_t[H:, 0]]).astype(f32)          # (2, H)
    wfc = jnp.stack([w_fc[:, :H].T, w_fc[:, H:].T]).astype(matmul_dtype)  # (2,H,C)
    bfc = b_fc.reshape(1, C).astype(f32)

    # time-major, batch padded to Bp, flattened to (T*Bp, I) so the kernel can
    # run one tall batched input-projection matmul per block.
    x_tm = jnp.transpose(x, (1, 0, 2)).astype(f32)                # (T, B, I)
    x_p = jnp.zeros((T, Bp, I), f32).at[:, :B, :].set(x_tm).reshape(T * Bp, I)

    kernel = functools.partial(_sab_lstm_kernel, int(top_k), int(time_block),
                               int(hist_chunk))

    def full(shape):
        return pl.BlockSpec(shape, lambda tb: (0,) * len(shape))

    # ---- explicit VMEM budget (v7x has only 64 MiB physical) ----
    mm_b = jnp.dtype(matmul_dtype).itemsize
    hi_b = jnp.dtype(history_dtype).itemsize
    est = (2 * (wx.size + wh.size + wp.size + wfc.size) * mm_b          # weights (2-buf)
           + 2 * (bg.size + bp.size + wa.size + bfc.size) * 4
           + 2 * time_block * Bp * (I + P) * 4                          # in/out blocks
           + (3 * Bp * H + Bp * T) * 4 + T * Bp * H * hi_b)             # scratch
    vmem_limit = int(min(max(est + (8 << 20), 32 << 20), 100 << 20))

    merged = pl.pallas_call(
        kernel,
        out_shape=jax.ShapeDtypeStruct((T * Bp, P), f32),
        grid_spec=pltpu.PrefetchScalarGridSpec(
            num_scalar_prefetch=0,
            grid=(T // time_block,),
            in_specs=[
                pl.BlockSpec((time_block * Bp, I), lambda tb: (tb, 0)),
                full(wx.shape), full(wh.shape), full(bg.shape),
                full(wp.shape), full(bp.shape), full(wa.shape),
                full(wfc.shape), full(bfc.shape),
            ],
            out_specs=pl.BlockSpec((time_block * Bp, P), lambda tb: (tb, 0)),
            scratch_shapes=[
                pltpu.VMEM((Bp, H), f32),               # h_t
                pltpu.VMEM((Bp, H), f32),               # c_t
                pltpu.VMEM((T, Bp, H), history_dtype),  # hidden-state history
                pltpu.VMEM((Bp, T), f32),               # cached tanh(h_old)@w_t[H:]
                pltpu.VMEM((Bp, H), f32),               # chunked attn_c accumulator
            ],
        ),
        compiler_params=pltpu.CompilerParams(
            dimension_semantics=("arbitrary",),         # recurrence -> serial grid
            vmem_limit_bytes=vmem_limit),
    )(x_p, wx, wh, bg, wp, bp, wa, wfc, bfc)

    # un-merge the lane-dense output slab: [pred | h_out | fc_out | pad]
    merged = merged.reshape(T, Bp, P)[:, :B, :]
    merged = jnp.transpose(merged, (1, 0, 2))                  # (B, T, P)
    predicted_all = merged[..., :H]                            # (B, T, H)
    h_outs = merged[..., H:2 * H]                              # (B, T, H)
    out = merged[..., 2 * H:2 * H + C]                         # (B, T, num_classes)
    attn_w_viz = []  # module only appends for timesteps i >= 100; T < 101 here
    return out, attn_w_viz, predicted_all, h_outs


def _reference_forward(x, params, top_k):
    """Pure-JAX translation of the PyTorch forward (per-row sparse attention)."""
    (w_ih, w_hh, b_ih, b_hh, w_pred, b_pred, w_t, w_fc, b_fc) = params
    B, T, I = x.shape
    H = w_hh.shape[1]
    eps = 1e-7
    h = jnp.zeros((B, H), jnp.float32)
    c = jnp.zeros((B, H), jnp.float32)
    h_old = jnp.zeros((B, 1, H), jnp.float32)
    outs, attns, preds = [], [], []
    for i in range(T):
        xt = x[:, i, :]
        gates = xt @ w_ih.T + b_ih + h @ w_hh.T + b_hh
        ig = jax.nn.sigmoid(gates[:, :H])
        fg = jax.nn.sigmoid(gates[:, H:2 * H])
        gg = jnp.tanh(gates[:, 2 * H:3 * H])
        og = jax.nn.sigmoid(gates[:, 3 * H:])
        c = fg * c + ig * gg
        h = og * jnp.tanh(c)
        preds.append(h @ w_pred.T + b_pred)
        R = h_old.shape[1]
        h_rep = jnp.repeat(h[:, None, :], R, axis=1)
        mlp = jnp.tanh(jnp.concatenate([h_rep, h_old], axis=2))
        aw = (mlp.reshape(B * R, 2 * H) @ w_t).reshape(B, R)
        if R > top_k:
            delta = jnp.sort(aw, axis=1)[:, -top_k] + eps
            w = jnp.maximum(aw - delta[:, None], 0.0)
            w = w / (jnp.sum(w, axis=1, keepdims=True) + eps)
        else:
            w = aw
        attn_c = jnp.sum(w[:, :, None] * h_old, axis=1)
        h = h + attn_c
        h_old = jnp.concatenate([h_old, h[:, None, :]], axis=1)
        outs.append(h)
        attns.append(attn_c)
    outputs = jnp.stack(outs, 1)
    attn_all = jnp.stack(attns, 1)
    preds = jnp.stack(preds, 1)
    oc = jnp.concatenate([outputs, attn_all], axis=2)
    out = (oc.reshape(B * T, 2 * H) @ w_fc.T + b_fc).reshape(B, T, -1)
    return out, preds, outputs


if __name__ == "__main__":
    B, T, I, H, C = 2, 8, 16, 32, 4
    top_k = 3

    key = jax.random.PRNGKey(0)
    k = jax.random.split(key, 10)
    std = 1.0 / float(H) ** 0.5

    def u(kk, shape):
        return jax.random.uniform(kk, shape, jnp.float32, -std, std)

    params = (
        u(k[0], (4 * H, I)),                                    # lstm1 W_ih
        u(k[1], (4 * H, H)),                                    # lstm1 W_hh
        u(k[2], (4 * H,)),                                      # lstm1 b_ih
        u(k[3], (4 * H,)),                                      # lstm1 b_hh
        u(k[4], (H, H)),                                        # predict_m weight
        u(k[5], (H,)),                                          # predict_m bias
        (0.01 * jax.random.normal(k[6], (2 * H, 1))).astype(jnp.float32),  # w_t
        u(k[7], (C, 2 * H)),                                    # fc weight
        u(k[8], (C,)),                                          # fc bias
    )
    x = jax.random.normal(k[9], (B, T, I), jnp.float32)

    # time_block=4 -> grid of 2 (exercises cross-block scratch persistence);
    # hist_chunk=4 -> 2 history chunks (exercises the zero-tail skip path).
    out, attn_w_viz, predicted_all, h_outs = sab_lstm_forward(
        x, params, top_k, time_block=4, hist_chunk=4,
        matmul_dtype=jnp.float32, history_dtype=jnp.float32)
    jax.block_until_ready((out, predicted_all, h_outs))

    ref_out, ref_pred, ref_houts = _reference_forward(x, params, top_k)
    assert jnp.allclose(out, ref_out, atol=1e-3, rtol=1e-3), "fc output mismatch"
    assert jnp.allclose(predicted_all, ref_pred, atol=1e-3, rtol=1e-3), \
        "predict head mismatch"
    assert jnp.allclose(h_outs, ref_houts, atol=1e-3, rtol=1e-3), \
        "hidden outputs mismatch"
    assert out.shape == (B, T, C) and predicted_all.shape == (B, T, H)
    assert h_outs.shape == (B, T, H) and attn_w_viz == []

    print("KERNEL_OK")
</pallas_src>

<mosaic_0001>
module attributes {stable_mosaic.version = 11 : i64} {
  func.func @_sab_lstm_kernel(%arg0: i32, %arg1: memref<32x16xf32, #tpu.memory_space<vmem>>, %arg2: memref<16x128xf32, #tpu.memory_space<vmem>>, %arg3: memref<32x128xf32, #tpu.memory_space<vmem>>, %arg4: memref<1x128xf32, #tpu.memory_space<vmem>>, %arg5: memref<32x32xf32, #tpu.memory_space<vmem>>, %arg6: memref<1x32xf32, #tpu.memory_space<vmem>>, %arg7: memref<2x32xf32, #tpu.memory_space<vmem>>, %arg8: memref<2x32x4xf32, #tpu.memory_space<vmem>>, %arg9: memref<1x4xf32, #tpu.memory_space<vmem>>, %arg10: memref<32x128xf32, #tpu.memory_space<vmem>>, %arg11: memref<8x32xf32, #tpu.memory_space<vmem>>, %arg12: memref<8x32xf32, #tpu.memory_space<vmem>>, %arg13: memref<8x8x32xf32, #tpu.memory_space<vmem>>, %arg14: memref<8x8xf32, #tpu.memory_space<vmem>>, %arg15: memref<8x32xf32, #tpu.memory_space<vmem>>) attributes {dimension_semantics = [#tpu.dimension_semantics<arbitrary>], iteration_bounds = array<i64: 2>, scalar_prefetch = 0 : i64, scratch_operands = 5 : i64, tpu.core_type = #tpu.core_type<tc>, window_params = [{transform_indices = @transform_0, window_bounds = array<i64: 32, 16>}, {pipeline_mode = #tpu.pipeline_mode<synchronous>, transform_indices = @transform_1, window_bounds = array<i64: 16, 128>}, {pipeline_mode = #tpu.pipeline_mode<synchronous>, transform_indices = @transform_2, window_bounds = array<i64: 32, 128>}, {pipeline_mode = #tpu.pipeline_mode<synchronous>, transform_indices = @transform_3, window_bounds = array<i64: 1, 128>}, {pipeline_mode = #tpu.pipeline_mode<synchronous>, transform_indices = @transform_4, window_bounds = array<i64: 32, 32>}, {pipeline_mode = #tpu.pipeline_mode<synchronous>, transform_indices = @transform_5, window_bounds = array<i64: 1, 32>}, {pipeline_mode = #tpu.pipeline_mode<synchronous>, transform_indices = @transform_6, window_bounds = array<i64: 2, 32>}, {pipeline_mode = #tpu.pipeline_mode<synchronous>, transform_indices = @transform_7, window_bounds = array<i64: 2, 32, 4>}, {pipeline_mode = #tpu.pipeline_mode<synchronous>, transform_indices = @transform_8, window_bounds = array<i64: 1, 4>}, {transform_indices = @transform_9, window_bounds = array<i64: 32, 128>}]} {
    %c0_i32 = arith.constant 0 : i32
    %0 = arith.cmpi eq, %arg0, %c0_i32 : i32
    %1 = arith.extui %0 : i1 to i32
    %c0_i32_0 = arith.constant 0 : i32
    %2 = arith.cmpi ne, %1, %c0_i32_0 : i32
    scf.if %2 {
      %cst_204 = arith.constant 0.000000e+00 : f32
      %522 = vector.broadcast %cst_204 : f32 to vector<8x32xf32>
      %c0_205 = arith.constant 0 : index
      %c0_206 = arith.constant 0 : index
      %523 = vector.load %arg11[%c0_205, %c0_206] : memref<8x32xf32, #tpu.memory_space<vmem>>, vector<8x32xf32>
      tpu.vector_store %arg11[%c0_205, %c0_206], %522 {strides = array<i32>} : memref<8x32xf32, #tpu.memory_space<vmem>>, vector<8x32xf32>,
      %cst_207 = arith.constant 0.000000e+00 : f32
      %524 = vector.broadcast %cst_207 : f32 to vector<8x32xf32>
      %c0_208 = arith.constant 0 : index
      %c0_209 = arith.constant 0 : index
      %525 = vector.load %arg12[%c0_208, %c0_209] : memref<8x32xf32, #tpu.memory_space<vmem>>, vector<8x32xf32>
      tpu.vector_store %arg12[%c0_208, %c0_209], %524 {strides = array<i32>} : memref<8x32xf32, #tpu.memory_space<vmem>>, vector<8x32xf32>,
      %cst_210 = arith.constant 0.000000e+00 : f32
      %526 = vector.broadcast %cst_210 : f32 to vector<8x8x32xf32>
      %c0_211 = arith.constant 0 : index
      %c0_212 = arith.constant 0 : index
      %c0_213 = arith.constant 0 : index
      %527 = vector.load %arg13[%c0_211, %c0_212, %c0_213] : memref<8x8x32xf32, #tpu.memory_space<vmem>>, vector<8x8x32xf32>
      tpu.vector_store %arg13[%c0_211, %c0_212, %c0_213], %526 {strides = array<i32>} : memref<8x8x32xf32, #tpu.memory_space<vmem>>, vector<8x8x32xf32>,
      %cst_214 = arith.constant 0.000000e+00 : f32
      %528 = vector.broadcast %cst_214 : f32 to vector<8x8xf32>
      %c0_215 = arith.constant 0 : index
      %c0_216 = arith.constant 0 : index
      %529 = vector.load %arg14[%c0_215, %c0_216] : memref<8x8xf32, #tpu.memory_space<vmem>>, vector<8x8xf32>
      tpu.vector_store %arg14[%c0_215, %c0_216], %528 {strides = array<i32>} : memref<8x8xf32, #tpu.memory_space<vmem>>, vector<8x8xf32>,
    } else {
    }
    %c0 = arith.constant 0 : index
    %c0_1 = arith.constant 0 : index
    %3 = vector.load %arg2[%c0, %c0_1] : memref<16x128xf32, #tpu.memory_space<vmem>>, vector<16x128xf32>
    %c0_2 = arith.constant 0 : index
    %c0_3 = arith.constant 0 : index
    %4 = vector.load %arg3[%c0_2, %c0_3] : memref<32x128xf32, #tpu.memory_space<vmem>>, vector<32x128xf32>
    %c0_4 = arith.constant 0 : index
    %c0_5 = arith.constant 0 : index
    %5 = vector.load %arg4[%c0_4, %c0_5] : memref<1x128xf32, #tpu.memory_space<vmem>>, vector<1x128xf32>
    %c0_6 = arith.constant 0 : index
    %c0_7 = arith.constant 0 : index
    %6 = vector.load %arg5[%c0_6, %c0_7] : memref<32x32xf32, #tpu.memory_space<vmem>>, vector<32x32xf32>
    %c0_8 = arith.constant 0 : index
    %c0_9 = arith.constant 0 : index
    %7 = vector.load %arg6[%c0_8, %c0_9] : memref<1x32xf32, #tpu.memory_space<vmem>>, vector<1x32xf32>
    %c0_10 = arith.constant 0 : index
    %c0_11 = arith.constant 0 : index
    %8 = vector.load %arg7[%c0_10, %c0_11] : memref<2x32xf32, #tpu.memory_space<vmem>>, vector<1x32xf32>
    %c1 = arith.constant 1 : index
    %c0_12 = arith.constant 0 : index
    %9 = vector.load %arg7[%c1, %c0_12] : memref<2x32xf32, #tpu.memory_space<vmem>>, vector<1x32xf32>
    %c0_13 = arith.constant 0 : index
    %c0_14 = arith.constant 0 : index
    %c0_15 = arith.constant 0 : index
    %10 = vector.load %arg8[%c0_13, %c0_14, %c0_15] : memref<2x32x4xf32, #tpu.memory_space<vmem>>, vector<1x32x4xf32>
    %11 = vector.shape_cast %10 : vector<1x32x4xf32> to vector<32x4xf32>
    %c1_16 = arith.constant 1 : index
    %c0_17 = arith.constant 0 : index
    %c0_18 = arith.constant 0 : index
    %12 = vector.load %arg8[%c1_16, %c0_17, %c0_18] : memref<2x32x4xf32, #tpu.memory_space<vmem>>, vector<1x32x4xf32>
    %13 = vector.shape_cast %12 : vector<1x32x4xf32> to vector<32x4xf32>
    %c0_19 = arith.constant 0 : index
    %c0_20 = arith.constant 0 : index
    %14 = vector.load %arg9[%c0_19, %c0_20] : memref<1x4xf32, #tpu.memory_space<vmem>>, vector<1x4xf32>
    %15 = tpu.iota {dimensions = array<i32: 1>} : vector<8x8xi32>
    %16 = tpu.iota {dimensions = array<i32: 1>} : vector<1x128xi32>
    %c64_i32 = arith.constant 64 : i32
    %17 = vector.broadcast %c64_i32 : i32 to vector<1x128xi32>
    %18 = arith.cmpi sge, %16, %17 : vector<1x128xi32>
    %c96_i32 = arith.constant 96 : i32
    %19 = vector.broadcast %c96_i32 : i32 to vector<1x128xi32>
    %20 = arith.cmpi slt, %16, %19 : vector<1x128xi32>
    %21 = arith.andi %18, %20 : vector<1x128xi1>
    %c0_21 = arith.constant 0 : index
    %c0_22 = arith.constant 0 : index
    %22 = vector.load %arg1[%c0_21, %c0_22] : memref<32x16xf32, #tpu.memory_space<vmem>>, vector<32x16xf32>
    %cst = arith.constant dense<0.000000e+00> : vector<32x128xf32>
    %23 = tpu.matmul %22, %3, %cst {dimension_numbers = #tpu.dot_dimension_numbers<[1], [0], [0], [1], [0, 0, 1, 1], [], []>} : vector<32x16xf32>, vector<16x128xf32>, vector<32x128xf32> -> vector<32x128xf32>
    %24 = vector.broadcast %5 : vector<1x128xf32> to vector<32x128xf32>
    %25 = arith.addf %23, %24 : vector<32x128xf32>
    %c0_23 = arith.constant 0 : index
    %c0_24 = arith.constant 0 : index
    %26 = vector.load %arg11[%c0_23, %c0_24] : memref<8x32xf32, #tpu.memory_space<vmem>>, vector<8x32xf32>
    %c0_25 = arith.constant 0 : index
    %c0_26 = arith.constant 0 : index
    %27 = vector.load %arg12[%c0_25, %c0_26] : memref<8x32xf32, #tpu.memory_space<vmem>>, vector<8x32xf32>
    %c0_27 = arith.constant 0 : index
    %c0_28 = arith.constant 0 : index
    %28 = vector.load %arg14[%c0_27, %c0_28] : memref<8x8xf32, #tpu.memory_space<vmem>>, vector<8x8xf32>
    %c4_i32 = arith.constant 4 : i32
    %29 = arith.muli %arg0, %c4_i32 : i32
    %c0_i32_29 = arith.constant 0 : i32
    %30 = arith.addi %29, %c0_i32_29 : i32
    %31 = vector.extract_strided_slice %25 {offsets = [0, 0], sizes = [8, 128], strides = [1, 1]} : vector<32x128xf32> to vector<8x128xf32>
    %cst_30 = arith.constant dense<0.000000e+00> : vector<8x128xf32>
    %32 = tpu.matmul %26, %4, %cst_30 {dimension_numbers = #tpu.dot_dimension_numbers<[1], [0], [0], [1], [0, 0, 1, 1], [], []>} : vector<8x32xf32>, vector<32x128xf32>, vector<8x128xf32> -> vector<8x128xf32>
    %33 = arith.addf %31, %32 : vector<8x128xf32>
    %34 = math.tanh %33 : vector<8x128xf32>
    %35 = arith.negf %33 : vector<8x128xf32>
    %36 = math.exp %35 : vector<8x128xf32>
    %cst_31 = arith.constant 1.000000e+00 : f32
    %37 = vector.broadcast %cst_31 : f32 to vector<8x128xf32>
    %38 = arith.addf %37, %36 : vector<8x128xf32>
    %39 = arith.divf %37, %38 : vector<8x128xf32>
    %40 = vector.shape_cast %21 : vector<1x128xi1> to vector<1x128xi1>
    %41 = vector.broadcast %40 : vector<1x128xi1> to vector<8x128xi1>
    %42 = arith.select %41, %34, %39 : vector<8x128xi1>, vector<8x128xf32>
    %43 = vector.extract_strided_slice %42 {offsets = [0, 0], sizes = [8, 32], strides = [1, 1]} : vector<8x128xf32> to vector<8x32xf32>
    %44 = vector.extract_strided_slice %42 {offsets = [0, 32], sizes = [8, 32], strides = [1, 1]} : vector<8x128xf32> to vector<8x32xf32>
    %45 = vector.extract_strided_slice %42 {offsets = [0, 64], sizes = [8, 32], strides = [1, 1]} : vector<8x128xf32> to vector<8x32xf32>
    %46 = vector.extract_strided_slice %42 {offsets = [0, 96], sizes = [8, 32], strides = [1, 1]} : vector<8x128xf32> to vector<8x32xf32>
    %47 = arith.mulf %44, %27 : vector<8x32xf32>
    %48 = arith.mulf %43, %45 : vector<8x32xf32>
    %49 = arith.addf %47, %48 : vector<8x32xf32>
    %50 = math.tanh %49 : vector<8x32xf32>
    %51 = arith.mulf %46, %50 : vector<8x32xf32>
    %52 = math.tanh %51 : vector<8x32xf32>
    %53 = vector.broadcast %8 : vector<1x32xf32> to vector<8x32xf32>
    %54 = arith.mulf %52, %53 : vector<8x32xf32>
    %cst_32 = arith.constant dense<0.000000e+00> : vector<8xf32>
    %55 = vector.multi_reduction <add>, %54, %cst_32 [1] : vector<8x32xf32> to vector<8xf32>
    %56 = vector.shape_cast %55 : vector<8xf32> to vector<8x1xf32>
    %57 = vector.broadcast %56 : vector<8x1xf32> to vector<8x8xf32>
    %58 = arith.addf %57, %28 : vector<8x8xf32>
    %c1_i32 = arith.constant 1 : i32
    %59 = arith.addi %30, %c1_i32 : i32
    %60 = vector.broadcast %59 : i32 to vector<8x8xi32>
    %61 = arith.cmpi slt, %15, %60 : vector<8x8xi32>
    %cst_33 = arith.constant -1.000000e+30 : f32
    %62 = vector.broadcast %cst_33 : f32 to vector<8x8xf32>
    %63 = arith.select %61, %58, %62 : vector<8x8xi1>, vector<8x8xf32>
    %cst_34 = arith.constant dense<0xFF800000> : vector<8xf32>
    %64 = vector.multi_reduction <maximumf>, %63, %cst_34 [1] : vector<8x8xf32> to vector<8xf32>
    %65 = vector.shape_cast %64 : vector<8xf32> to vector<8x1xf32>
    %66 = vector.broadcast %65 : vector<8x1xf32> to vector<8x8xf32>
    %67 = arith.cmpf oeq, %63, %66 : vector<8x8xf32>
    %c8_i32 = arith.constant 8 : i32
    %68 = vector.broadcast %c8_i32 : i32 to vector<8x8xi32>
    %69 = arith.select %67, %15, %68 : vector<8x8xi1>, vector<8x8xi32>
    %cst_35 = arith.constant dense<2147483647> : vector<8xi32>
    %70 = vector.multi_reduction <minsi>, %69, %cst_35 [1] : vector<8x8xi32> to vector<8xi32>
    %71 = vector.shape_cast %70 : vector<8xi32> to vector<8x1xi32>
    %72 = vector.broadcast %71 : vector<8x1xi32> to vector<8x8xi32>
    %73 = arith.cmpi eq, %15, %72 : vector<8x8xi32>
    %cst_36 = arith.constant -1.000000e+30 : f32
    %74 = vector.broadcast %cst_36 : f32 to vector<8x8xf32>
    %75 = arith.select %73, %74, %63 : vector<8x8xi1>, vector<8x8xf32>
    %cst_37 = arith.constant dense<0xFF800000> : vector<8xf32>
    %76 = vector.multi_reduction <maximumf>, %75, %cst_37 [1] : vector<8x8xf32> to vector<8xf32>
    %77 = vector.shape_cast %76 : vector<8xf32> to vector<8x1xf32>
    %78 = vector.broadcast %77 : vector<8x1xf32> to vector<8x8xf32>
    %79 = arith.cmpf oeq, %75, %78 : vector<8x8xf32>
    %c8_i32_38 = arith.constant 8 : i32
    %80 = vector.broadcast %c8_i32_38 : i32 to vector<8x8xi32>
    %81 = arith.select %79, %15, %80 : vector<8x8xi1>, vector<8x8xi32>
    %cst_39 = arith.constant dense<2147483647> : vector<8xi32>
    %82 = vector.multi_reduction <minsi>, %81, %cst_39 [1] : vector<8x8xi32> to vector<8xi32>
    %83 = vector.shape_cast %82 : vector<8xi32> to vector<8x1xi32>
    %84 = vector.broadcast %83 : vector<8x1xi32> to vector<8x8xi32>
    %85 = arith.cmpi eq, %15, %84 : vector<8x8xi32>
    %cst_40 = arith.constant -1.000000e+30 : f32
    %86 = vector.broadcast %cst_40 : f32 to vector<8x8xf32>
    %87 = arith.select %85, %86, %75 : vector<8x8xi1>, vector<8x8xf32>
    %cst_41 = arith.constant dense<0xFF800000> : vector<8xf32>
    %88 = vector.multi_reduction <maximumf>, %87, %cst_41 [1] : vector<8x8xf32> to vector<8xf32>
    %89 = vector.shape_cast %88 : vector<8xf32> to vector<8x1xf32>
    %cst_42 = arith.constant -1.000000e+30 : f32
    %cst_43 = arith.constant 5.000000e-01 : f32
    %90 = arith.mulf %cst_42, %cst_43 : f32
    %91 = vector.broadcast %90 : f32 to vector<8x1xf32>
    %92 = arith.cmpf ole, %89, %91 : vector<8x1xf32>
    %cst_44 = arith.constant 0.000000e+00 : f32
    %93 = vector.broadcast %cst_44 : f32 to vector<8x1xf32>
    %94 = arith.select %92, %93, %89 : vector<8x1xi1>, vector<8x1xf32>
    %cst_45 = arith.constant 1.000000e-07 : f32
    %95 = vector.broadcast %cst_45 : f32 to vector<8x1xf32>
    %96 = arith.addf %94, %95 : vector<8x1xf32>
    %97 = vector.broadcast %96 : vector<8x1xf32> to vector<8x8xf32>
    %98 = arith.subf %58, %97 : vector<8x8xf32>
    %cst_46 = arith.constant 0.000000e+00 : f32
    %99 = vector.broadcast %cst_46 : f32 to vector<8x8xf32>
    %100 = arith.maximumf %98, %99 : vector<8x8xf32>
    %cst_47 = arith.constant 0.000000e+00 : f32
    %101 = vector.broadcast %cst_47 : f32 to vector<8x8xf32>
    %102 = arith.select %61, %100, %101 : vector<8x8xi1>, vector<8x8xf32>
    %cst_48 = arith.constant dense<0.000000e+00> : vector<8xf32>
    %103 = vector.multi_reduction <add>, %102, %cst_48 [1] : vector<8x8xf32> to vector<8xf32>
    %104 = vector.shape_cast %103 : vector<8xf32> to vector<8x1xf32>
    %cst_49 = arith.constant 1.000000e-07 : f32
    %105 = vector.broadcast %cst_49 : f32 to vector<8x1xf32>
    %106 = arith.addf %104, %105 : vector<8x1xf32>
    %107 = vector.broadcast %106 : vector<8x1xf32> to vector<8x8xf32>
    %108 = arith.divf %102, %107 : vector<8x8xf32>
    %cst_50 = arith.constant 0.000000e+00 : f32
    %109 = vector.broadcast %cst_50 : f32 to vector<8x8xf32>
    %110 = arith.select %61, %58, %109 : vector<8x8xi1>, vector<8x8xf32>
    %c3_i32 = arith.constant 3 : i32
    %111 = arith.cmpi sgt, %59, %c3_i32 : i32
    %112 = arith.extui %111 : i1 to i32
    %113 = arith.sitofp %112 : i32 to f32
    %114 = vector.broadcast %113 : f32 to vector<8x8xf32>
    %115 = arith.mulf %114, %108 : vector<8x8xf32>
    %cst_51 = arith.constant 1.000000e+00 : f32
    %116 = arith.subf %cst_51, %113 : f32
    %117 = vector.broadcast %116 : f32 to vector<8x8xf32>
    %118 = arith.mulf %117, %110 : vector<8x8xf32>
    %119 = arith.addf %115, %118 : vector<8x8xf32>
    %120 = tpu.transpose %119, [1, 0] : vector<8x8xf32> -> vector<8x8xf32>
    %121 = vector.extract_strided_slice %120 {offsets = [0, 0], sizes = [4, 8], strides = [1, 1]} : vector<8x8xf32> to vector<4x8xf32>
    %122 = vector.shape_cast %121 : vector<4x8xf32> to vector<4x8x1xf32>
    %c0_52 = arith.constant 0 : index
    %c0_53 = arith.constant 0 : index
    %c0_54 = arith.constant 0 : index
    %123 = vector.load %arg13[%c0_52, %c0_53, %c0_54] : memref<8x8x32xf32, #tpu.memory_space<vmem>>, vector<4x8x32xf32>
    %124 = vector.broadcast %122 : vector<4x8x1xf32> to vector<4x8x32xf32>
    %125 = arith.mulf %124, %123 : vector<4x8x32xf32>
    %cst_55 = arith.constant dense<0.000000e+00> : vector<8x32xf32>
    %126 = vector.multi_reduction <add>, %125, %cst_55 [0] : vector<4x8x32xf32> to vector<8x32xf32>
    %c0_56 = arith.constant 0 : index
    %c0_57 = arith.constant 0 : index
    %127 = vector.load %arg15[%c0_56, %c0_57] : memref<8x32xf32, #tpu.memory_space<vmem>>, vector<8x32xf32>
    tpu.vector_store %arg15[%c0_56, %c0_57], %126 {strides = array<i32>} : memref<8x32xf32, #tpu.memory_space<vmem>>, vector<8x32xf32>,
    %c4_i32_58 = arith.constant 4 : i32
    %128 = arith.cmpi sge, %30, %c4_i32_58 : i32
    %129 = arith.extui %128 : i1 to i32
    %c0_i32_59 = arith.constant 0 : i32
    %130 = arith.cmpi ne, %129, %c0_i32_59 : i32
    scf.if %130 {
      %c0_204 = arith.constant 0 : index
      %c0_205 = arith.constant 0 : index
      %522 = vector.load %arg15[%c0_204, %c0_205] : memref<8x32xf32, #tpu.memory_space<vmem>>, vector<8x32xf32>
      %523 = vector.extract_strided_slice %120 {offsets = [4, 0], sizes = [4, 8], strides = [1, 1]} : vector<8x8xf32> to vector<4x8xf32>
      %524 = vector.shape_cast %523 : vector<4x8xf32> to vector<4x8x1xf32>
      %c4 = arith.constant 4 : index
      %c0_206 = arith.constant 0 : index
      %c0_207 = arith.constant 0 : index
      %525 = vector.load %arg13[%c4, %c0_206, %c0_207] : memref<8x8x32xf32, #tpu.memory_space<vmem>>, vector<4x8x32xf32>
      %526 = vector.broadcast %524 : vector<4x8x1xf32> to vector<4x8x32xf32>
      %527 = arith.mulf %526, %525 : vector<4x8x32xf32>
      %cst_208 = arith.constant dense<0.000000e+00> : vector<8x32xf32>
      %528 = vector.multi_reduction <add>, %527, %cst_208 [0] : vector<4x8x32xf32> to vector<8x32xf32>
      %529 = arith.addf %522, %528 : vector<8x32xf32>
      %c0_209 = arith.constant 0 : index
      %c0_210 = arith.constant 0 : index
      %530 = vector.load %arg15[%c0_209, %c0_210] : memref<8x32xf32, #tpu.memory_space<vmem>>, vector<8x32xf32>
      tpu.vector_store %arg15[%c0_209, %c0_210], %529 {strides = array<i32>} : memref<8x32xf32, #tpu.memory_space<vmem>>, vector<8x32xf32>,
    } else {
    }
    %c0_60 = arith.constant 0 : index
    %c0_61 = arith.constant 0 : index
    %131 = vector.load %arg15[%c0_60, %c0_61] : memref<8x32xf32, #tpu.memory_space<vmem>>, vector<8x32xf32>
    %132 = arith.addf %51, %131 : vector<8x32xf32>
    %c1_i32_62 = arith.constant 1 : i32
    %133 = arith.addi %30, %c1_i32_62 : i32
    %c8_i32_63 = arith.constant 8 : i32
    %134 = arith.cmpi slt, %133, %c8_i32_63 : i32
    %135 = arith.extui %134 : i1 to i32
    %c0_i32_64 = arith.constant 0 : i32
    %136 = arith.cmpi ne, %135, %c0_i32_64 : i32
    scf.if %136 {
      %c1_i32_204 = arith.constant 1 : i32
      %522 = arith.addi %30, %c1_i32_204 : i32
      %523 = arith.index_cast %522 : i32 to index
      %c0_205 = arith.constant 0 : index
      %c0_206 = arith.constant 0 : index
      %524 = vector.load %arg13[%523, %c0_205, %c0_206] : memref<8x8x32xf32, #tpu.memory_space<vmem>>, vector<1x8x32xf32>
      %525 = vector.shape_cast %524 : vector<1x8x32xf32> to vector<8x32xf32>
      %526 = vector.shape_cast %132 : vector<8x32xf32> to vector<1x8x32xf32>
      tpu.vector_store %arg13[%523, %c0_205, %c0_206], %526 {strides = array<i32>} : memref<8x8x32xf32, #tpu.memory_space<vmem>>, vector<1x8x32xf32>,
    } else {
    }
    %137 = math.tanh %132 : vector<8x32xf32>
    %138 = vector.broadcast %9 : vector<1x32xf32> to vector<8x32xf32>
    %139 = arith.mulf %137, %138 : vector<8x32xf32>
    %cst_65 = arith.constant dense<0.000000e+00> : vector<8xf32>
    %140 = vector.multi_reduction <add>, %139, %cst_65 [1] : vector<8x32xf32> to vector<8xf32>
    %141 = vector.shape_cast %140 : vector<8xf32> to vector<8x1xf32>
    %c1_i32_66 = arith.constant 1 : i32
    %142 = arith.addi %30, %c1_i32_66 : i32
    %143 = vector.broadcast %142 : i32 to vector<8x8xi32>
    %144 = arith.cmpi eq, %15, %143 : vector<8x8xi32>
    %145 = vector.shape_cast %141 : vector<8x1xf32> to vector<8x1xf32>
    %146 = vector.broadcast %145 : vector<8x1xf32> to vector<8x8xf32>
    %147 = arith.select %144, %146, %28 : vector<8x8xi1>, vector<8x8xf32>
    %c4_i32_67 = arith.constant 4 : i32
    %148 = arith.muli %arg0, %c4_i32_67 : i32
    %c1_i32_68 = arith.constant 1 : i32
    %149 = arith.addi %148, %c1_i32_68 : i32
    %150 = vector.extract_strided_slice %25 {offsets = [8, 0], sizes = [8, 128], strides = [1, 1]} : vector<32x128xf32> to vector<8x128xf32>
    %cst_69 = arith.constant dense<0.000000e+00> : vector<8x128xf32>
    %151 = tpu.matmul %132, %4, %cst_69 {dimension_numbers = #tpu.dot_dimension_numbers<[1], [0], [0], [1], [0, 0, 1, 1], [], []>} : vector<8x32xf32>, vector<32x128xf32>, vector<8x128xf32> -> vector<8x128xf32>
    %152 = arith.addf %150, %151 : vector<8x128xf32>
    %153 = math.tanh %152 : vector<8x128xf32>
    %154 = arith.negf %152 : vector<8x128xf32>
    %155 = math.exp %154 : vector<8x128xf32>
    %cst_70 = arith.constant 1.000000e+00 : f32
    %156 = vector.broadcast %cst_70 : f32 to vector<8x128xf32>
    %157 = arith.addf %156, %155 : vector<8x128xf32>
    %158 = arith.divf %156, %157 : vector<8x128xf32>
    %159 = vector.shape_cast %21 : vector<1x128xi1> to vector<1x128xi1>
    %160 = vector.broadcast %159 : vector<1x128xi1> to vector<8x128xi1>
    %161 = arith.select %160, %153, %158 : vector<8x128xi1>, vector<8x128xf32>
    %162 = vector.extract_strided_slice %161 {offsets = [0, 0], sizes = [8, 32], strides = [1, 1]} : vector<8x128xf32> to vector<8x32xf32>
    %163 = vector.extract_strided_slice %161 {offsets = [0, 32], sizes = [8, 32], strides = [1, 1]} : vector<8x128xf32> to vector<8x32xf32>
    %164 = vector.extract_strided_slice %161 {offsets = [0, 64], sizes = [8, 32], strides = [1, 1]} : vector<8x128xf32> to vector<8x32xf32>
    %165 = vector.extract_strided_slice %161 {offsets = [0, 96], sizes = [8, 32], strides = [1, 1]} : vector<8x128xf32> to vector<8x32xf32>
    %166 = arith.mulf %163, %49 : vector<8x32xf32>
    %167 = arith.mulf %162, %164 : vector<8x32xf32>
    %168 = arith.addf %166, %167 : vector<8x32xf32>
    %169 = math.tanh %168 : vector<8x32xf32>
    %170 = arith.mulf %165, %169 : vector<8x32xf32>
    %171 = math.tanh %170 : vector<8x32xf32>
    %172 = vector.broadcast %8 : vector<1x32xf32> to vector<8x32xf32>
    %173 = arith.mulf %171, %172 : vector<8x32xf32>
    %cst_71 = arith.constant dense<0.000000e+00> : vector<8xf32>
    %174 = vector.multi_reduction <add>, %173, %cst_71 [1] : vector<8x32xf32> to vector<8xf32>
    %175 = vector.shape_cast %174 : vector<8xf32> to vector<8x1xf32>
    %176 = vector.broadcast %175 : vector<8x1xf32> to vector<8x8xf32>
    %177 = arith.addf %176, %147 : vector<8x8xf32>
    %c1_i32_72 = arith.constant 1 : i32
    %178 = arith.addi %149, %c1_i32_72 : i32
    %179 = vector.broadcast %178 : i32 to vector<8x8xi32>
    %180 = arith.cmpi slt, %15, %179 : vector<8x8xi32>
    %cst_73 = arith.constant -1.000000e+30 : f32
    %181 = vector.broadcast %cst_73 : f32 to vector<8x8xf32>
    %182 = arith.select %180, %177, %181 : vector<8x8xi1>, vector<8x8xf32>
    %cst_74 = arith.constant dense<0xFF800000> : vector<8xf32>
    %183 = vector.multi_reduction <maximumf>, %182, %cst_74 [1] : vector<8x8xf32> to vector<8xf32>
    %184 = vector.shape_cast %183 : vector<8xf32> to vector<8x1xf32>
    %185 = vector.broadcast %184 : vector<8x1xf32> to vector<8x8xf32>
    %186 = arith.cmpf oeq, %182, %185 : vector<8x8xf32>
    %c8_i32_75 = arith.constant 8 : i32
    %187 = vector.broadcast %c8_i32_75 : i32 to vector<8x8xi32>
    %188 = arith.select %186, %15, %187 : vector<8x8xi1>, vector<8x8xi32>
    %cst_76 = arith.constant dense<2147483647> : vector<8xi32>
    %189 = vector.multi_reduction <minsi>, %188, %cst_76 [1] : vector<8x8xi32> to vector<8xi32>
    %190 = vector.shape_cast %189 : vector<8xi32> to vector<8x1xi32>
    %191 = vector.broadcast %190 : vector<8x1xi32> to vector<8x8xi32>
    %192 = arith.cmpi eq, %15, %191 : vector<8x8xi32>
    %cst_77 = arith.constant -1.000000e+30 : f32
    %193 = vector.broadcast %cst_77 : f32 to vector<8x8xf32>
    %194 = arith.select %192, %193, %182 : vector<8x8xi1>, vector<8x8xf32>
    %cst_78 = arith.constant dense<0xFF800000> : vector<8xf32>
    %195 = vector.multi_reduction <maximumf>, %194, %cst_78 [1] : vector<8x8xf32> to vector<8xf32>
    %196 = vector.shape_cast %195 : vector<8xf32> to vector<8x1xf32>
    %197 = vector.broadcast %196 : vector<8x1xf32> to vector<8x8xf32>
    %198 = arith.cmpf oeq, %194, %197 : vector<8x8xf32>
    %c8_i32_79 = arith.constant 8 : i32
    %199 = vector.broadcast %c8_i32_79 : i32 to vector<8x8xi32>
    %200 = arith.select %198, %15, %199 : vector<8x8xi1>, vector<8x8xi32>
    %cst_80 = arith.constant dense<2147483647> : vector<8xi32>
    %201 = vector.multi_reduction <minsi>, %200, %cst_80 [1] : vector<8x8xi32> to vector<8xi32>
    %202 = vector.shape_cast %201 : vector<8xi32> to vector<8x1xi32>
    %203 = vector.broadcast %202 : vector<8x1xi32> to vector<8x8xi32>
    %204 = arith.cmpi eq, %15, %203 : vector<8x8xi32>
    %cst_81 = arith.constant -1.000000e+30 : f32
    %205 = vector.broadcast %cst_81 : f32 to vector<8x8xf32>
    %206 = arith.select %204, %205, %194 : vector<8x8xi1>, vector<8x8xf32>
    %cst_82 = arith.constant dense<0xFF800000> : vector<8xf32>
    %207 = vector.multi_reduction <maximumf>, %206, %cst_82 [1] : vector<8x8xf32> to vector<8xf32>
    %208 = vector.shape_cast %207 : vector<8xf32> to vector<8x1xf32>
    %cst_83 = arith.constant -1.000000e+30 : f32
    %cst_84 = arith.constant 5.000000e-01 : f32
    %209 = arith.mulf %cst_83, %cst_84 : f32
    %210 = vector.broadcast %209 : f32 to vector<8x1xf32>
    %211 = arith.cmpf ole, %208, %210 : vector<8x1xf32>
    %cst_85 = arith.constant 0.000000e+00 : f32
    %212 = vector.broadcast %cst_85 : f32 to vector<8x1xf32>
    %213 = arith.select %211, %212, %208 : vector<8x1xi1>, vector<8x1xf32>
    %cst_86 = arith.constant 1.000000e-07 : f32
    %214 = vector.broadcast %cst_86 : f32 to vector<8x1xf32>
    %215 = arith.addf %213, %214 : vector<8x1xf32>
    %216 = vector.broadcast %215 : vector<8x1xf32> to vector<8x8xf32>
    %217 = arith.subf %177, %216 : vector<8x8xf32>
    %cst_87 = arith.constant 0.000000e+00 : f32
    %218 = vector.broadcast %cst_87 : f32 to vector<8x8xf32>
    %219 = arith.maximumf %217, %218 : vector<8x8xf32>
    %cst_88 = arith.constant 0.000000e+00 : f32
    %220 = vector.broadcast %cst_88 : f32 to vector<8x8xf32>
    %221 = arith.select %180, %219, %220 : vector<8x8xi1>, vector<8x8xf32>
    %cst_89 = arith.constant dense<0.000000e+00> : vector<8xf32>
    %222 = vector.multi_reduction <add>, %221, %cst_89 [1] : vector<8x8xf32> to vector<8xf32>
    %223 = vector.shape_cast %222 : vector<8xf32> to vector<8x1xf32>
    %cst_90 = arith.constant 1.000000e-07 : f32
    %224 = vector.broadcast %cst_90 : f32 to vector<8x1xf32>
    %225 = arith.addf %223, %224 : vector<8x1xf32>
    %226 = vector.broadcast %225 : vector<8x1xf32> to vector<8x8xf32>
    %227 = arith.divf %221, %226 : vector<8x8xf32>
    %cst_91 = arith.constant 0.000000e+00 : f32
    %228 = vector.broadcast %cst_91 : f32 to vector<8x8xf32>
    %229 = arith.select %180, %177, %228 : vector<8x8xi1>, vector<8x8xf32>
    %c3_i32_92 = arith.constant 3 : i32
    %230 = arith.cmpi sgt, %178, %c3_i32_92 : i32
    %231 = arith.extui %230 : i1 to i32
    %232 = arith.sitofp %231 : i32 to f32
    %233 = vector.broadcast %232 : f32 to vector<8x8xf32>
    %234 = arith.mulf %233, %227 : vector<8x8xf32>
    %cst_93 = arith.constant 1.000000e+00 : f32
    %235 = arith.subf %cst_93, %232 : f32
    %236 = vector.broadcast %235 : f32 to vector<8x8xf32>
    %237 = arith.mulf %236, %229 : vector<8x8xf32>
    %238 = arith.addf %234, %237 : vector<8x8xf32>
    %239 = tpu.transpose %238, [1, 0] : vector<8x8xf32> -> vector<8x8xf32>
    %240 = vector.extract_strided_slice %239 {offsets = [0, 0], sizes = [4, 8], strides = [1, 1]} : vector<8x8xf32> to vector<4x8xf32>
    %241 = vector.shape_cast %240 : vector<4x8xf32> to vector<4x8x1xf32>
    %c0_94 = arith.constant 0 : index
    %c0_95 = arith.constant 0 : index
    %c0_96 = arith.constant 0 : index
    %242 = vector.load %arg13[%c0_94, %c0_95, %c0_96] : memref<8x8x32xf32, #tpu.memory_space<vmem>>, vector<4x8x32xf32>
    %243 = vector.broadcast %241 : vector<4x8x1xf32> to vector<4x8x32xf32>
    %244 = arith.mulf %243, %242 : vector<4x8x32xf32>
    %cst_97 = arith.constant dense<0.000000e+00> : vector<8x32xf32>
    %245 = vector.multi_reduction <add>, %244, %cst_97 [0] : vector<4x8x32xf32> to vector<8x32xf32>
    %c0_98 = arith.constant 0 : index
    %c0_99 = arith.constant 0 : index
    %246 = vector.load %arg15[%c0_98, %c0_99] : memref<8x32xf32, #tpu.memory_space<vmem>>, vector<8x32xf32>
    tpu.vector_store %arg15[%c0_98, %c0_99], %245 {strides = array<i32>} : memref<8x32xf32, #tpu.memory_space<vmem>>, vector<8x32xf32>,
    %c4_i32_100 = arith.constant 4 : i32
    %247 = arith.cmpi sge, %149, %c4_i32_100 : i32
    %248 = arith.extui %247 : i1 to i32
    %c0_i32_101 = arith.constant 0 : i32
    %249 = arith.cmpi ne, %248, %c0_i32_101 : i32
    scf.if %249 {
      %c0_204 = arith.constant 0 : index
      %c0_205 = arith.constant 0 : index
      %522 = vector.load %arg15[%c0_204, %c0_205] : memref<8x32xf32, #tpu.memory_space<vmem>>, vector<8x32xf32>
      %523 = vector.extract_strided_slice %239 {offsets = [4, 0], sizes = [4, 8], strides = [1, 1]} : vector<8x8xf32> to vector<4x8xf32>
      %524 = vector.shape_cast %523 : vector<4x8xf32> to vector<4x8x1xf32>
      %c4 = arith.constant 4 : index
      %c0_206 = arith.constant 0 : index
      %c0_207 = arith.constant 0 : index
      %525 = vector.load %arg13[%c4, %c0_206, %c0_207] : memref<8x8x32xf32, #tpu.memory_space<vmem>>, vector<4x8x32xf32>
      %526 = vector.broadcast %524 : vector<4x8x1xf32> to vector<4x8x32xf32>
      %527 = arith.mulf %526, %525 : vector<4x8x32xf32>
      %cst_208 = arith.constant dense<0.000000e+00> : vector<8x32xf32>
      %528 = vector.multi_reduction <add>, %527, %cst_208 [0] : vector<4x8x32xf32> to vector<8x32xf32>
      %529 = arith.addf %522, %528 : vector<8x32xf32>
      %c0_209 = arith.constant 0 : index
      %c0_210 = arith.constant 0 : index
      %530 = vector.load %arg15[%c0_209, %c0_210] : memref<8x32xf32, #tpu.memory_space<vmem>>, vector<8x32xf32>
      tpu.vector_store %arg15[%c0_209, %c0_210], %529 {strides = array<i32>} : memref<8x32xf32, #tpu.memory_space<vmem>>, vector<8x32xf32>,
    } else {
    }
    %c0_102 = arith.constant 0 : index
    %c0_103 = arith.constant 0 : index
    %250 = vector.load %arg15[%c0_102, %c0_103] : memref<8x32xf32, #tpu.memory_space<vmem>>, vector<8x32xf32>
    %251 = arith.addf %170, %250 : vector<8x32xf32>
    %c1_i32_104 = arith.constant 1 : i32
    %252 = arith.addi %149, %c1_i32_104 : i32
    %c8_i32_105 = arith.constant 8 : i32
    %253 = arith.cmpi slt, %252, %c8_i32_105 : i32
    %254 = arith.extui %253 : i1 to i32
    %c0_i32_106 = arith.constant 0 : i32
    %255 = arith.cmpi ne, %254, %c0_i32_106 : i32
    scf.if %255 {
      %c1_i32_204 = arith.constant 1 : i32
      %522 = arith.addi %149, %c1_i32_204 : i32
      %523 = arith.index_cast %522 : i32 to index
      %c0_205 = arith.constant 0 : index
      %c0_206 = arith.constant 0 : index
      %524 = vector.load %arg13[%523, %c0_205, %c0_206] : memref<8x8x32xf32, #tpu.memory_space<vmem>>, vector<1x8x32xf32>
      %525 = vector.shape_cast %524 : vector<1x8x32xf32> to vector<8x32xf32>
      %526 = vector.shape_cast %251 : vector<8x32xf32> to vector<1x8x32xf32>
      tpu.vector_store %arg13[%523, %c0_205, %c0_206], %526 {strides = array<i32>} : memref<8x8x32xf32, #tpu.memory_space<vmem>>, vector<1x8x32xf32>,
    } else {
    }
    %256 = math.tanh %251 : vector<8x32xf32>
    %257 = vector.broadcast %9 : vector<1x32xf32> to vector<8x32xf32>
    %258 = arith.mulf %256, %257 : vector<8x32xf32>
    %cst_107 = arith.constant dense<0.000000e+00> : vector<8xf32>
    %259 = vector.multi_reduction <add>, %258, %cst_107 [1] : vector<8x32xf32> to vector<8xf32>
    %260 = vector.shape_cast %259 : vector<8xf32> to vector<8x1xf32>
    %c1_i32_108 = arith.constant 1 : i32
    %261 = arith.addi %149, %c1_i32_108 : i32
    %262 = vector.broadcast %261 : i32 to vector<8x8xi32>
    %263 = arith.cmpi eq, %15, %262 : vector<8x8xi32>
    %264 = vector.shape_cast %260 : vector<8x1xf32> to vector<8x1xf32>
    %265 = vector.broadcast %264 : vector<8x1xf32> to vector<8x8xf32>
    %266 = arith.select %263, %265, %147 : vector<8x8xi1>, vector<8x8xf32>
    %c4_i32_109 = arith.constant 4 : i32
    %267 = arith.muli %arg0, %c4_i32_109 : i32
    %c2_i32 = arith.constant 2 : i32
    %268 = arith.addi %267, %c2_i32 : i32
    %269 = vector.extract_strided_slice %25 {offsets = [16, 0], sizes = [8, 128], strides = [1, 1]} : vector<32x128xf32> to vector<8x128xf32>
    %cst_110 = arith.constant dense<0.000000e+00> : vector<8x128xf32>
    %270 = tpu.matmul %251, %4, %cst_110 {dimension_numbers = #tpu.dot_dimension_numbers<[1], [0], [0], [1], [0, 0, 1, 1], [], []>} : vector<8x32xf32>, vector<32x128xf32>, vector<8x128xf32> -> vector<8x128xf32>
    %271 = arith.addf %269, %270 : vector<8x128xf32>
    %272 = math.tanh %271 : vector<8x128xf32>
    %273 = arith.negf %271 : vector<8x128xf32>
    %274 = math.exp %273 : vector<8x128xf32>
    %cst_111 = arith.constant 1.000000e+00 : f32
    %275 = vector.broadcast %cst_111 : f32 to vector<8x128xf32>
    %276 = arith.addf %275, %274 : vector<8x128xf32>
    %277 = arith.divf %275, %276 : vector<8x128xf32>
    %278 = vector.shape_cast %21 : vector<1x128xi1> to vector<1x128xi1>
    %279 = vector.broadcast %278 : vector<1x128xi1> to vector<8x128xi1>
    %280 = arith.select %279, %272, %277 : vector<8x128xi1>, vector<8x128xf32>
    %281 = vector.extract_strided_slice %280 {offsets = [0, 0], sizes = [8, 32], strides = [1, 1]} : vector<8x128xf32> to vector<8x32xf32>
    %282 = vector.extract_strided_slice %280 {offsets = [0, 32], sizes = [8, 32], strides = [1, 1]} : vector<8x128xf32> to vector<8x32xf32>
    %283 = vector.extract_strided_slice %280 {offsets = [0, 64], sizes = [8, 32], strides = [1, 1]} : vector<8x128xf32> to vector<8x32xf32>
    %284 = vector.extract_strided_slice %280 {offsets = [0, 96], sizes = [8, 32], strides = [1, 1]} : vector<8x128xf32> to vector<8x32xf32>
    %285 = arith.mulf %282, %168 : vector<8x32xf32>
    %286 = arith.mulf %281, %283 : vector<8x32xf32>
    %287 = arith.addf %285, %286 : vector<8x32xf32>
    %288 = math.tanh %287 : vector<8x32xf32>
    %289 = arith.mulf %284, %288 : vector<8x32xf32>
    %290 = math.tanh %289 : vector<8x32xf32>
    %291 = vector.broadcast %8 : vector<1x32xf32> to vector<8x32xf32>
    %292 = arith.mulf %290, %291 : vector<8x32xf32>
    %cst_112 = arith.constant dense<0.000000e+00> : vector<8xf32>
    %293 = vector.multi_reduction <add>, %292, %cst_112 [1] : vector<8x32xf32> to vector<8xf32>
    %294 = vector.shape_cast %293 : vector<8xf32> to vector<8x1xf32>
    %295 = vector.broadcast %294 : vector<8x1xf32> to vector<8x8xf32>
    %296 = arith.addf %295, %266 : vector<8x8xf32>
    %c1_i32_113 = arith.constant 1 : i32
    %297 = arith.addi %268, %c1_i32_113 : i32
    %298 = vector.broadcast %297 : i32 to vector<8x8xi32>
    %299 = arith.cmpi slt, %15, %298 : vector<8x8xi32>
    %cst_114 = arith.constant -1.000000e+30 : f32
    %300 = vector.broadcast %cst_114 : f32 to vector<8x8xf32>
    %301 = arith.select %299, %296, %300 : vector<8x8xi1>, vector<8x8xf32>
    %cst_115 = arith.constant dense<0xFF800000> : vector<8xf32>
    %302 = vector.multi_reduction <maximumf>, %301, %cst_115 [1] : vector<8x8xf32> to vector<8xf32>
    %303 = vector.shape_cast %302 : vector<8xf32> to vector<8x1xf32>
    %304 = vector.broadcast %303 : vector<8x1xf32> to vector<8x8xf32>
    %305 = arith.cmpf oeq, %301, %304 : vector<8x8xf32>
    %c8_i32_116 = arith.constant 8 : i32
    %306 = vector.broadcast %c8_i32_116 : i32 to vector<8x8xi32>
    %307 = arith.select %305, %15, %306 : vector<8x8xi1>, vector<8x8xi32>
    %cst_117 = arith.constant dense<2147483647> : vector<8xi32>
    %308 = vector.multi_reduction <minsi>, %307, %cst_117 [1] : vector<8x8xi32> to vector<8xi32>
    %309 = vector.shape_cast %308 : vector<8xi32> to vector<8x1xi32>
    %310 = vector.broadcast %309 : vector<8x1xi32> to vector<8x8xi32>
    %311 = arith.cmpi eq, %15, %310 : vector<8x8xi32>
    %cst_118 = arith.constant -1.000000e+30 : f32
    %312 = vector.broadcast %cst_118 : f32 to vector<8x8xf32>
    %313 = arith.select %311, %312, %301 : vector<8x8xi1>, vector<8x8xf32>
    %cst_119 = arith.constant dense<0xFF800000> : vector<8xf32>
    %314 = vector.multi_reduction <maximumf>, %313, %cst_119 [1] : vector<8x8xf32> to vector<8xf32>
    %315 = vector.shape_cast %314 : vector<8xf32> to vector<8x1xf32>
    %316 = vector.broadcast %315 : vector<8x1xf32> to vector<8x8xf32>
    %317 = arith.cmpf oeq, %313, %316 : vector<8x8xf32>
    %c8_i32_120 = arith.constant 8 : i32
    %318 = vector.broadcast %c8_i32_120 : i32 to vector<8x8xi32>
    %319 = arith.select %317, %15, %318 : vector<8x8xi1>, vector<8x8xi32>
    %cst_121 = arith.constant dense<2147483647> : vector<8xi32>
    %320 = vector.multi_reduction <minsi>, %319, %cst_121 [1] : vector<8x8xi32> to vector<8xi32>
    %321 = vector.shape_cast %320 : vector<8xi32> to vector<8x1xi32>
    %322 = vector.broadcast %321 : vector<8x1xi32> to vector<8x8xi32>
    %323 = arith.cmpi eq, %15, %322 : vector<8x8xi32>
    %cst_122 = arith.constant -1.000000e+30 : f32
    %324 = vector.broadcast %cst_122 : f32 to vector<8x8xf32>
    %325 = arith.select %323, %324, %313 : vector<8x8xi1>, vector<8x8xf32>
    %cst_123 = arith.constant dense<0xFF800000> : vector<8xf32>
    %326 = vector.multi_reduction <maximumf>, %325, %cst_123 [1] : vector<8x8xf32> to vector<8xf32>
    %327 = vector.shape_cast %326 : vector<8xf32> to vector<8x1xf32>
    %cst_124 = arith.constant -1.000000e+30 : f32
    %cst_125 = arith.constant 5.000000e-01 : f32
    %328 = arith.mulf %cst_124, %cst_125 : f32
    %329 = vector.broadcast %328 : f32 to vector<8x1xf32>
    %330 = arith.cmpf ole, %327, %329 : vector<8x1xf32>
    %cst_126 = arith.constant 0.000000e+00 : f32
    %331 = vector.broadcast %cst_126 : f32 to vector<8x1xf32>
    %332 = arith.select %330, %331, %327 : vector<8x1xi1>, vector<8x1xf32>
    %cst_127 = arith.constant 1.000000e-07 : f32
    %333 = vector.broadcast %cst_127 : f32 to vector<8x1xf32>
    %334 = arith.addf %332, %333 : vector<8x1xf32>
    %335 = vector.broadcast %334 : vector<8x1xf32> to vector<8x8xf32>
    %336 = arith.subf %296, %335 : vector<8x8xf32>
    %cst_128 = arith.constant 0.000000e+00 : f32
    %337 = vector.broadcast %cst_128 : f32 to vector<8x8xf32>
    %338 = arith.maximumf %336, %337 : vector<8x8xf32>
    %cst_129 = arith.constant 0.000000e+00 : f32
    %339 = vector.broadcast %cst_129 : f32 to vector<8x8xf32>
    %340 = arith.select %299, %338, %339 : vector<8x8xi1>, vector<8x8xf32>
    %cst_130 = arith.constant dense<0.000000e+00> : vector<8xf32>
    %341 = vector.multi_reduction <add>, %340, %cst_130 [1] : vector<8x8xf32> to vector<8xf32>
    %342 = vector.shape_cast %341 : vector<8xf32> to vector<8x1xf32>
    %cst_131 = arith.constant 1.000000e-07 : f32
    %343 = vector.broadcast %cst_131 : f32 to vector<8x1xf32>
    %344 = arith.addf %342, %343 : vector<8x1xf32>
    %345 = vector.broadcast %344 : vector<8x1xf32> to vector<8x8xf32>
    %346 = arith.divf %340, %345 : vector<8x8xf32>
    %cst_132 = arith.constant 0.000000e+00 : f32
    %347 = vector.broadcast %cst_132 : f32 to vector<8x8xf32>
    %348 = arith.select %299, %296, %347 : vector<8x8xi1>, vector<8x8xf32>
    %c3_i32_133 = arith.constant 3 : i32
    %349 = arith.cmpi sgt, %297, %c3_i32_133 : i32
    %350 = arith.extui %349 : i1 to i32
    %351 = arith.sitofp %350 : i32 to f32
    %352 = vector.broadcast %351 : f32 to vector<8x8xf32>
    %353 = arith.mulf %352, %346 : vector<8x8xf32>
    %cst_134 = arith.constant 1.000000e+00 : f32
    %354 = arith.subf %cst_134, %351 : f32
    %355 = vector.broadcast %354 : f32 to vector<8x8xf32>
    %356 = arith.mulf %355, %348 : vector<8x8xf32>
    %357 = arith.addf %353, %356 : vector<8x8xf32>
    %358 = tpu.transpose %357, [1, 0] : vector<8x8xf32> -> vector<8x8xf32>
    %359 = vector.extract_strided_slice %358 {offsets = [0, 0], sizes = [4, 8], strides = [1, 1]} : vector<8x8xf32> to vector<4x8xf32>
    %360 = vector.shape_cast %359 : vector<4x8xf32> to vector<4x8x1xf32>
    %c0_135 = arith.constant 0 : index
    %c0_136 = arith.constant 0 : index
    %c0_137 = arith.constant 0 : index
    %361 = vector.load %arg13[%c0_135, %c0_136, %c0_137] : memref<8x8x32xf32, #tpu.memory_space<vmem>>, vector<4x8x32xf32>
    %362 = vector.broadcast %360 : vector<4x8x1xf32> to vector<4x8x32xf32>
    %363 = arith.mulf %362, %361 : vector<4x8x32xf32>
    %cst_138 = arith.constant dense<0.000000e+00> : vector<8x32xf32>
    %364 = vector.multi_reduction <add>, %363, %cst_138 [0] : vector<4x8x32xf32> to vector<8x32xf32>
    %c0_139 = arith.constant 0 : index
    %c0_140 = arith.constant 0 : index
    %365 = vector.load %arg15[%c0_139, %c0_140] : memref<8x32xf32, #tpu.memory_space<vmem>>, vector<8x32xf32>
    tpu.vector_store %arg15[%c0_139, %c0_140], %364 {strides = array<i32>} : memref<8x32xf32, #tpu.memory_space<vmem>>, vector<8x32xf32>,
    %c4_i32_141 = arith.constant 4 : i32
    %366 = arith.cmpi sge, %268, %c4_i32_141 : i32
    %367 = arith.extui %366 : i1 to i32
    %c0_i32_142 = arith.constant 0 : i32
    %368 = arith.cmpi ne, %367, %c0_i32_142 : i32
    scf.if %368 {
      %c0_204 = arith.constant 0 : index
      %c0_205 = arith.constant 0 : index
      %522 = vector.load %arg15[%c0_204, %c0_205] : memref<8x32xf32, #tpu.memory_space<vmem>>, vector<8x32xf32>
      %523 = vector.extract_strided_slice %358 {offsets = [4, 0], sizes = [4, 8], strides = [1, 1]} : vector<8x8xf32> to vector<4x8xf32>
      %524 = vector.shape_cast %523 : vector<4x8xf32> to vector<4x8x1xf32>
      %c4 = arith.constant 4 : index
      %c0_206 = arith.constant 0 : index
      %c0_207 = arith.constant 0 : index
      %525 = vector.load %arg13[%c4, %c0_206, %c0_207] : memref<8x8x32xf32, #tpu.memory_space<vmem>>, vector<4x8x32xf32>
      %526 = vector.broadcast %524 : vector<4x8x1xf32> to vector<4x8x32xf32>
      %527 = arith.mulf %526, %525 : vector<4x8x32xf32>
      %cst_208 = arith.constant dense<0.000000e+00> : vector<8x32xf32>
      %528 = vector.multi_reduction <add>, %527, %cst_208 [0] : vector<4x8x32xf32> to vector<8x32xf32>
      %529 = arith.addf %522, %528 : vector<8x32xf32>
      %c0_209 = arith.constant 0 : index
      %c0_210 = arith.constant 0 : index
      %530 = vector.load %arg15[%c0_209, %c0_210] : memref<8x32xf32, #tpu.memory_space<vmem>>, vector<8x32xf32>
      tpu.vector_store %arg15[%c0_209, %c0_210], %529 {strides = array<i32>} : memref<8x32xf32, #tpu.memory_space<vmem>>, vector<8x32xf32>,
    } else {
    }
    %c0_143 = arith.constant 0 : index
    %c0_144 = arith.constant 0 : index
    %369 = vector.load %arg15[%c0_143, %c0_144] : memref<8x32xf32, #tpu.memory_space<vmem>>, vector<8x32xf32>
    %370 = arith.addf %289, %369 : vector<8x32xf32>
    %c1_i32_145 = arith.constant 1 : i32
    %371 = arith.addi %268, %c1_i32_145 : i32
    %c8_i32_146 = arith.constant 8 : i32
    %372 = arith.cmpi slt, %371, %c8_i32_146 : i32
    %373 = arith.extui %372 : i1 to i32
    %c0_i32_147 = arith.constant 0 : i32
    %374 = arith.cmpi ne, %373, %c0_i32_147 : i32
    scf.if %374 {
      %c1_i32_204 = arith.constant 1 : i32
      %522 = arith.addi %268, %c1_i32_204 : i32
      %523 = arith.index_cast %522 : i32 to index
      %c0_205 = arith.constant 0 : index
      %c0_206 = arith.constant 0 : index
      %524 = vector.load %arg13[%523, %c0_205, %c0_206] : memref<8x8x32xf32, #tpu.memory_space<vmem>>, vector<1x8x32xf32>
      %525 = vector.shape_cast %524 : vector<1x8x32xf32> to vector<8x32xf32>
      %526 = vector.shape_cast %370 : vector<8x32xf32> to vector<1x8x32xf32>
      tpu.vector_store %arg13[%523, %c0_205, %c0_206], %526 {strides = array<i32>} : memref<8x8x32xf32, #tpu.memory_space<vmem>>, vector<1x8x32xf32>,
    } else {
    }
    %375 = math.tanh %370 : vector<8x32xf32>
    %376 = vector.broadcast %9 : vector<1x32xf32> to vector<8x32xf32>
    %377 = arith.mulf %375, %376 : vector<8x32xf32>
    %cst_148 = arith.constant dense<0.000000e+00> : vector<8xf32>
    %378 = vector.multi_reduction <add>, %377, %cst_148 [1] : vector<8x32xf32> to vector<8xf32>
    %379 = vector.shape_cast %378 : vector<8xf32> to vector<8x1xf32>
    %c1_i32_149 = arith.constant 1 : i32
    %380 = arith.addi %268, %c1_i32_149 : i32
    %381 = vector.broadcast %380 : i32 to vector<8x8xi32>
    %382 = arith.cmpi eq, %15, %381 : vector<8x8xi32>
    %383 = vector.shape_cast %379 : vector<8x1xf32> to vector<8x1xf32>
    %384 = vector.broadcast %383 : vector<8x1xf32> to vector<8x8xf32>
    %385 = arith.select %382, %384, %266 : vector<8x8xi1>, vector<8x8xf32>
    %c4_i32_150 = arith.constant 4 : i32
    %386 = arith.muli %arg0, %c4_i32_150 : i32
    %c3_i32_151 = arith.constant 3 : i32
    %387 = arith.addi %386, %c3_i32_151 : i32
    %388 = vector.extract_strided_slice %25 {offsets = [24, 0], sizes = [8, 128], strides = [1, 1]} : vector<32x128xf32> to vector<8x128xf32>
    %cst_152 = arith.constant dense<0.000000e+00> : vector<8x128xf32>
    %389 = tpu.matmul %370, %4, %cst_152 {dimension_numbers = #tpu.dot_dimension_numbers<[1], [0], [0], [1], [0, 0, 1, 1], [], []>} : vector<8x32xf32>, vector<32x128xf32>, vector<8x128xf32> -> vector<8x128xf32>
    %390 = arith.addf %388, %389 : vector<8x128xf32>
    %391 = math.tanh %390 : vector<8x128xf32>
    %392 = arith.negf %390 : vector<8x128xf32>
    %393 = math.exp %392 : vector<8x128xf32>
    %cst_153 = arith.constant 1.000000e+00 : f32
    %394 = vector.broadcast %cst_153 : f32 to vector<8x128xf32>
    %395 = arith.addf %394, %393 : vector<8x128xf32>
    %396 = arith.divf %394, %395 : vector<8x128xf32>
    %397 = vector.shape_cast %21 : vector<1x128xi1> to vector<1x128xi1>
    %398 = vector.broadcast %397 : vector<1x128xi1> to vector<8x128xi1>
    %399 = arith.select %398, %391, %396 : vector<8x128xi1>, vector<8x128xf32>
    %400 = vector.extract_strided_slice %399 {offsets = [0, 0], sizes = [8, 32], strides = [1, 1]} : vector<8x128xf32> to vector<8x32xf32>
    %401 = vector.extract_strided_slice %399 {offsets = [0, 32], sizes = [8, 32], strides = [1, 1]} : vector<8x128xf32> to vector<8x32xf32>
    %402 = vector.extract_strided_slice %399 {offsets = [0, 64], sizes = [8, 32], strides = [1, 1]} : vector<8x128xf32> to vector<8x32xf32>
    %403 = vector.extract_strided_slice %399 {offsets = [0, 96], sizes = [8, 32], strides = [1, 1]} : vector<8x128xf32> to vector<8x32xf32>
    %404 = arith.mulf %401, %287 : vector<8x32xf32>
    %405 = arith.mulf %400, %402 : vector<8x32xf32>
    %406 = arith.addf %404, %405 : vector<8x32xf32>
    %407 = math.tanh %406 : vector<8x32xf32>
    %408 = arith.mulf %403, %407 : vector<8x32xf32>
    %409 = math.tanh %408 : vector<8x32xf32>
    %410 = vector.broadcast %8 : vector<1x32xf32> to vector<8x32xf32>
    %411 = arith.mulf %409, %410 : vector<8x32xf32>
    %cst_154 = arith.constant dense<0.000000e+00> : vector<8xf32>
    %412 = vector.multi_reduction <add>, %411, %cst_154 [1] : vector<8x32xf32> to vector<8xf32>
    %413 = vector.shape_cast %412 : vector<8xf32> to vector<8x1xf32>
    %414 = vector.broadcast %413 : vector<8x1xf32> to vector<8x8xf32>
    %415 = arith.addf %414, %385 : vector<8x8xf32>
    %c1_i32_155 = arith.constant 1 : i32
    %416 = arith.addi %387, %c1_i32_155 : i32
    %417 = vector.broadcast %416 : i32 to vector<8x8xi32>
    %418 = arith.cmpi slt, %15, %417 : vector<8x8xi32>
    %cst_156 = arith.constant -1.000000e+30 : f32
    %419 = vector.broadcast %cst_156 : f32 to vector<8x8xf32>
    %420 = arith.select %418, %415, %419 : vector<8x8xi1>, vector<8x8xf32>
    %cst_157 = arith.constant dense<0xFF800000> : vector<8xf32>
    %421 = vector.multi_reduction <maximumf>, %420, %cst_157 [1] : vector<8x8xf32> to vector<8xf32>
    %422 = vector.shape_cast %421 : vector<8xf32> to vector<8x1xf32>
    %423 = vector.broadcast %422 : vector<8x1xf32> to vector<8x8xf32>
    %424 = arith.cmpf oeq, %420, %423 : vector<8x8xf32>
    %c8_i32_158 = arith.constant 8 : i32
    %425 = vector.broadcast %c8_i32_158 : i32 to vector<8x8xi32>
    %426 = arith.select %424, %15, %425 : vector<8x8xi1>, vector<8x8xi32>
    %cst_159 = arith.constant dense<2147483647> : vector<8xi32>
    %427 = vector.multi_reduction <minsi>, %426, %cst_159 [1] : vector<8x8xi32> to vector<8xi32>
    %428 = vector.shape_cast %427 : vector<8xi32> to vector<8x1xi32>
    %429 = vector.broadcast %428 : vector<8x1xi32> to vector<8x8xi32>
    %430 = arith.cmpi eq, %15, %429 : vector<8x8xi32>
    %cst_160 = arith.constant -1.000000e+30 : f32
    %431 = vector.broadcast %cst_160 : f32 to vector<8x8xf32>
    %432 = arith.select %430, %431, %420 : vector<8x8xi1>, vector<8x8xf32>
    %cst_161 = arith.constant dense<0xFF800000> : vector<8xf32>
    %433 = vector.multi_reduction <maximumf>, %432, %cst_161 [1] : vector<8x8xf32> to vector<8xf32>
    %434 = vector.shape_cast %433 : vector<8xf32> to vector<8x1xf32>
    %435 = vector.broadcast %434 : vector<8x1xf32> to vector<8x8xf32>
    %436 = arith.cmpf oeq, %432, %435 : vector<8x8xf32>
    %c8_i32_162 = arith.constant 8 : i32
    %437 = vector.broadcast %c8_i32_162 : i32 to vector<8x8xi32>
    %438 = arith.select %436, %15, %437 : vector<8x8xi1>, vector<8x8xi32>
    %cst_163 = arith.constant dense<2147483647> : vector<8xi32>
    %439 = vector.multi_reduction <minsi>, %438, %cst_163 [1] : vector<8x8xi32> to vector<8xi32>
    %440 = vector.shape_cast %439 : vector<8xi32> to vector<8x1xi32>
    %441 = vector.broadcast %440 : vector<8x1xi32> to vector<8x8xi32>
    %442 = arith.cmpi eq, %15, %441 : vector<8x8xi32>
    %cst_164 = arith.constant -1.000000e+30 : f32
    %443 = vector.broadcast %cst_164 : f32 to vector<8x8xf32>
    %444 = arith.select %442, %443, %432 : vector<8x8xi1>, vector<8x8xf32>
    %cst_165 = arith.constant dense<0xFF800000> : vector<8xf32>
    %445 = vector.multi_reduction <maximumf>, %444, %cst_165 [1] : vector<8x8xf32> to vector<8xf32>
    %446 = vector.shape_cast %445 : vector<8xf32> to vector<8x1xf32>
    %cst_166 = arith.constant -1.000000e+30 : f32
    %cst_167 = arith.constant 5.000000e-01 : f32
    %447 = arith.mulf %cst_166, %cst_167 : f32
    %448 = vector.broadcast %447 : f32 to vector<8x1xf32>
    %449 = arith.cmpf ole, %446, %448 : vector<8x1xf32>
    %cst_168 = arith.constant 0.000000e+00 : f32
    %450 = vector.broadcast %cst_168 : f32 to vector<8x1xf32>
    %451 = arith.select %449, %450, %446 : vector<8x1xi1>, vector<8x1xf32>
    %cst_169 = arith.constant 1.000000e-07 : f32
    %452 = vector.broadcast %cst_169 : f32 to vector<8x1xf32>
    %453 = arith.addf %451, %452 : vector<8x1xf32>
    %454 = vector.broadcast %453 : vector<8x1xf32> to vector<8x8xf32>
    %455 = arith.subf %415, %454 : vector<8x8xf32>
    %cst_170 = arith.constant 0.000000e+00 : f32
    %456 = vector.broadcast %cst_170 : f32 to vector<8x8xf32>
    %457 = arith.maximumf %455, %456 : vector<8x8xf32>
    %cst_171 = arith.constant 0.000000e+00 : f32
    %458 = vector.broadcast %cst_171 : f32 to vector<8x8xf32>
    %459 = arith.select %418, %457, %458 : vector<8x8xi1>, vector<8x8xf32>
    %cst_172 = arith.constant dense<0.000000e+00> : vector<8xf32>
    %460 = vector.multi_reduction <add>, %459, %cst_172 [1] : vector<8x8xf32> to vector<8xf32>
    %461 = vector.shape_cast %460 : vector<8xf32> to vector<8x1xf32>
    %cst_173 = arith.constant 1.000000e-07 : f32
    %462 = vector.broadcast %cst_173 : f32 to vector<8x1xf32>
    %463 = arith.addf %461, %462 : vector<8x1xf32>
    %464 = vector.broadcast %463 : vector<8x1xf32> to vector<8x8xf32>
    %465 = arith.divf %459, %464 : vector<8x8xf32>
    %cst_174 = arith.constant 0.000000e+00 : f32
    %466 = vector.broadcast %cst_174 : f32 to vector<8x8xf32>
    %467 = arith.select %418, %415, %466 : vector<8x8xi1>, vector<8x8xf32>
    %c3_i32_175 = arith.constant 3 : i32
    %468 = arith.cmpi sgt, %416, %c3_i32_175 : i32
    %469 = arith.extui %468 : i1 to i32
    %470 = arith.sitofp %469 : i32 to f32
    %471 = vector.broadcast %470 : f32 to vector<8x8xf32>
    %472 = arith.mulf %471, %465 : vector<8x8xf32>
    %cst_176 = arith.constant 1.000000e+00 : f32
    %473 = arith.subf %cst_176, %470 : f32
    %474 = vector.broadcast %473 : f32 to vector<8x8xf32>
    %475 = arith.mulf %474, %467 : vector<8x8xf32>
    %476 = arith.addf %472, %475 : vector<8x8xf32>
    %477 = tpu.transpose %476, [1, 0] : vector<8x8xf32> -> vector<8x8xf32>
    %478 = vector.extract_strided_slice %477 {offsets = [0, 0], sizes = [4, 8], strides = [1, 1]} : vector<8x8xf32> to vector<4x8xf32>
    %479 = vector.shape_cast %478 : vector<4x8xf32> to vector<4x8x1xf32>
    %c0_177 = arith.constant 0 : index
    %c0_178 = arith.constant 0 : index
    %c0_179 = arith.constant 0 : index
    %480 = vector.load %arg13[%c0_177, %c0_178, %c0_179] : memref<8x8x32xf32, #tpu.memory_space<vmem>>, vector<4x8x32xf32>
    %481 = vector.broadcast %479 : vector<4x8x1xf32> to vector<4x8x32xf32>
    %482 = arith.mulf %481, %480 : vector<4x8x32xf32>
    %cst_180 = arith.constant dense<0.000000e+00> : vector<8x32xf32>
    %483 = vector.multi_reduction <add>, %482, %cst_180 [0] : vector<4x8x32xf32> to vector<8x32xf32>
    %c0_181 = arith.constant 0 : index
    %c0_182 = arith.constant 0 : index
    %484 = vector.load %arg15[%c0_181, %c0_182] : memref<8x32xf32, #tpu.memory_space<vmem>>, vector<8x32xf32>
    tpu.vector_store %arg15[%c0_181, %c0_182], %483 {strides = array<i32>} : memref<8x32xf32, #tpu.memory_space<vmem>>, vector<8x32xf32>,
    %c4_i32_183 = arith.constant 4 : i32
    %485 = arith.cmpi sge, %387, %c4_i32_183 : i32
    %486 = arith.extui %485 : i1 to i32
    %c0_i32_184 = arith.constant 0 : i32
    %487 = arith.cmpi ne, %486, %c0_i32_184 : i32
    scf.if %487 {
      %c0_204 = arith.constant 0 : index
      %c0_205 = arith.constant 0 : index
      %522 = vector.load %arg15[%c0_204, %c0_205] : memref<8x32xf32, #tpu.memory_space<vmem>>, vector<8x32xf32>
      %523 = vector.extract_strided_slice %477 {offsets = [4, 0], sizes = [4, 8], strides = [1, 1]} : vector<8x8xf32> to vector<4x8xf32>
      %524 = vector.shape_cast %523 : vector<4x8xf32> to vector<4x8x1xf32>
      %c4 = arith.constant 4 : index
      %c0_206 = arith.constant 0 : index
      %c0_207 = arith.constant 0 : index
      %525 = vector.load %arg13[%c4, %c0_206, %c0_207] : memref<8x8x32xf32, #tpu.memory_space<vmem>>, vector<4x8x32xf32>
      %526 = vector.broadcast %524 : vector<4x8x1xf32> to vector<4x8x32xf32>
      %527 = arith.mulf %526, %525 : vector<4x8x32xf32>
      %cst_208 = arith.constant dense<0.000000e+00> : vector<8x32xf32>
      %528 = vector.multi_reduction <add>, %527, %cst_208 [0] : vector<4x8x32xf32> to vector<8x32xf32>
      %529 = arith.addf %522, %528 : vector<8x32xf32>
      %c0_209 = arith.constant 0 : index
      %c0_210 = arith.constant 0 : index
      %530 = vector.load %arg15[%c0_209, %c0_210] : memref<8x32xf32, #tpu.memory_space<vmem>>, vector<8x32xf32>
      tpu.vector_store %arg15[%c0_209, %c0_210], %529 {strides = array<i32>} : memref<8x32xf32, #tpu.memory_space<vmem>>, vector<8x32xf32>,
    } else {
    }
    %c0_185 = arith.constant 0 : index
    %c0_186 = arith.constant 0 : index
    %488 = vector.load %arg15[%c0_185, %c0_186] : memref<8x32xf32, #tpu.memory_space<vmem>>, vector<8x32xf32>
    %489 = arith.addf %408, %488 : vector<8x32xf32>
    %c1_i32_187 = arith.constant 1 : i32
    %490 = arith.addi %387, %c1_i32_187 : i32
    %c8_i32_188 = arith.constant 8 : i32
    %491 = arith.cmpi slt, %490, %c8_i32_188 : i32
    %492 = arith.extui %491 : i1 to i32
    %c0_i32_189 = arith.constant 0 : i32
    %493 = arith.cmpi ne, %492, %c0_i32_189 : i32
    scf.if %493 {
      %c1_i32_204 = arith.constant 1 : i32
      %522 = arith.addi %387, %c1_i32_204 : i32
      %523 = arith.index_cast %522 : i32 to index
      %c0_205 = arith.constant 0 : index
      %c0_206 = arith.constant 0 : index
      %524 = vector.load %arg13[%523, %c0_205, %c0_206] : memref<8x8x32xf32, #tpu.memory_space<vmem>>, vector<1x8x32xf32>
      %525 = vector.shape_cast %524 : vector<1x8x32xf32> to vector<8x32xf32>
      %526 = vector.shape_cast %489 : vector<8x32xf32> to vector<1x8x32xf32>
      tpu.vector_store %arg13[%523, %c0_205, %c0_206], %526 {strides = array<i32>} : memref<8x8x32xf32, #tpu.memory_space<vmem>>, vector<1x8x32xf32>,
    } else {
    }
    %494 = math.tanh %489 : vector<8x32xf32>
    %495 = vector.broadcast %9 : vector<1x32xf32> to vector<8x32xf32>
    %496 = arith.mulf %494, %495 : vector<8x32xf32>
    %cst_190 = arith.constant dense<0.000000e+00> : vector<8xf32>
    %497 = vector.multi_reduction <add>, %496, %cst_190 [1] : vector<8x32xf32> to vector<8xf32>
    %498 = vector.shape_cast %497 : vector<8xf32> to vector<8x1xf32>
    %c1_i32_191 = arith.constant 1 : i32
    %499 = arith.addi %387, %c1_i32_191 : i32
    %500 = vector.broadcast %499 : i32 to vector<8x8xi32>
    %501 = arith.cmpi eq, %15, %500 : vector<8x8xi32>
    %502 = vector.shape_cast %498 : vector<8x1xf32> to vector<8x1xf32>
    %503 = vector.broadcast %502 : vector<8x1xf32> to vector<8x8xf32>
    %504 = arith.select %501, %503, %385 : vector<8x8xi1>, vector<8x8xf32>
    %c0_192 = arith.constant 0 : index
    %c0_193 = arith.constant 0 : index
    %505 = vector.load %arg11[%c0_192, %c0_193] : memref<8x32xf32, #tpu.memory_space<vmem>>, vector<8x32xf32>
    tpu.vector_store %arg11[%c0_192, %c0_193], %489 {strides = array<i32>} : memref<8x32xf32, #tpu.memory_space<vmem>>, vector<8x32xf32>,
    %c0_194 = arith.constant 0 : index
    %c0_195 = arith.constant 0 : index
    %506 = vector.load %arg12[%c0_194, %c0_195] : memref<8x32xf32, #tpu.memory_space<vmem>>, vector<8x32xf32>
    tpu.vector_store %arg12[%c0_194, %c0_195], %406 {strides = array<i32>} : memref<8x32xf32, #tpu.memory_space<vmem>>, vector<8x32xf32>,
    %c0_196 = arith.constant 0 : index
    %c0_197 = arith.constant 0 : index
    %507 = vector.load %arg14[%c0_196, %c0_197] : memref<8x8xf32, #tpu.memory_space<vmem>>, vector<8x8xf32>
    tpu.vector_store %arg14[%c0_196, %c0_197], %504 {strides = array<i32>} : memref<8x8xf32, #tpu.memory_space<vmem>>, vector<8x8xf32>,
    %508 = tpu.concatenate %51, %170, %289, %408 in 0 : vector<8x32xf32>, vector<8x32xf32>, vector<8x32xf32>, vector<8x32xf32> -> vector<32x32xf32>
    %509 = tpu.concatenate %132, %251, %370, %489 in 0 : vector<8x32xf32>, vector<8x32xf32>, vector<8x32xf32>, vector<8x32xf32> -> vector<32x32xf32>
    %510 = tpu.concatenate %131, %250, %369, %488 in 0 : vector<8x32xf32>, vector<8x32xf32>, vector<8x32xf32>, vector<8x32xf32> -> vector<32x32xf32>
    %cst_198 = arith.constant dense<0.000000e+00> : vector<32x32xf32>
    %511 = tpu.matmul %508, %6, %cst_198 {dimension_numbers = #tpu.dot_dimension_numbers<[1], [0], [0], [1], [0, 0, 1, 1], [], []>} : vector<32x32xf32>, vector<32x32xf32>, vector<32x32xf32> -> vector<32x32xf32>
    %512 = vector.broadcast %7 : vector<1x32xf32> to vector<32x32xf32>
    %513 = arith.addf %511, %512 : vector<32x32xf32>
    %cst_199 = arith.constant dense<0.000000e+00> : vector<32x4xf32>
    %514 = tpu.matmul %509, %11, %cst_199 {dimension_numbers = #tpu.dot_dimension_numbers<[1], [0], [0], [1], [0, 0, 1, 1], [], []>} : vector<32x32xf32>, vector<32x4xf32>, vector<32x4xf32> -> vector<32x4xf32>
    %cst_200 = arith.constant dense<0.000000e+00> : vector<32x4xf32>
    %515 = tpu.matmul %510, %13, %cst_200 {dimension_numbers = #tpu.dot_dimension_numbers<[1], [0], [0], [1], [0, 0, 1, 1], [], []>} : vector<32x32xf32>, vector<32x4xf32>, vector<32x4xf32> -> vector<32x4xf32>
    %516 = arith.addf %514, %515 : vector<32x4xf32>
    %517 = vector.broadcast %14 : vector<1x4xf32> to vector<32x4xf32>
    %518 = arith.addf %516, %517 : vector<32x4xf32>
    %cst_201 = arith.constant 0.000000e+00 : f32
    %519 = vector.broadcast %cst_201 : f32 to vector<32x60xf32>
    %520 = tpu.concatenate %513, %509, %518, %519 in 1 : vector<32x32xf32>, vector<32x32xf32>, vector<32x4xf32>, vector<32x60xf32> -> vector<32x128xf32>
    %c0_202 = arith.constant 0 : index
    %c0_203 = arith.constant 0 : index
    %521 = vector.load %arg10[%c0_202, %c0_203] : memref<32x128xf32, #tpu.memory_space<vmem>>, vector<32x128xf32>
    tpu.vector_store %arg10[%c0_202, %c0_203], %520 {strides = array<i32>} : memref<32x128xf32, #tpu.memory_space<vmem>>, vector<32x128xf32>,
    return
  }
  func.func @transform_0(%arg0: i32) -> (i32, i32) {
    %c0_i32 = arith.constant 0 : i32
    %c0_i32_0 = arith.constant 0 : i32
    return %arg0, %c0_i32 : i32, i32
  }
  func.func @transform_1(%arg0: i32) -> (i32, i32) {
    %c0_i32 = arith.constant 0 : i32
    %c0_i32_0 = arith.constant 0 : i32
    %c0_i32_1 = arith.constant 0 : i32
    return %c0_i32, %c0_i32_0 : i32, i32
  }
  func.func @transform_2(%arg0: i32) -> (i32, i32) {
    %c0_i32 = arith.constant 0 : i32
    %c0_i32_0 = arith.constant 0 : i32
    %c0_i32_1 = arith.constant 0 : i32
    return %c0_i32, %c0_i32_0 : i32, i32
  }
  func.func @transform_3(%arg0: i32) -> (i32, i32) {
    %c0_i32 = arith.constant 0 : i32
    %c0_i32_0 = arith.constant 0 : i32
    %c0_i32_1 = arith.constant 0 : i32
    return %c0_i32, %c0_i32_0 : i32, i32
  }
  func.func @transform_4(%arg0: i32) -> (i32, i32) {
    %c0_i32 = arith.constant 0 : i32
    %c0_i32_0 = arith.constant 0 : i32
    %c0_i32_1 = arith.constant 0 : i32
    return %c0_i32, %c0_i32_0 : i32, i32
  }
  func.func @transform_5(%arg0: i32) -> (i32, i32) {
    %c0_i32 = arith.constant 0 : i32
    %c0_i32_0 = arith.constant 0 : i32
    %c0_i32_1 = arith.constant 0 : i32
    return %c0_i32, %c0_i32_0 : i32, i32
  }
  func.func @transform_6(%arg0: i32) -> (i32, i32) {
    %c0_i32 = arith.constant 0 : i32
    %c0_i32_0 = arith.constant 0 : i32
    %c0_i32_1 = arith.constant 0 : i32
    return %c0_i32, %c0_i32_0 : i32, i32
  }
  func.func @transform_7(%arg0: i32) -> (i32, i32, i32) {
    %c0_i32 = arith.constant 0 : i32
    %c0_i32_0 = arith.constant 0 : i32
    %c0_i32_1 = arith.constant 0 : i32
    %c0_i32_2 = arith.constant 0 : i32
    return %c0_i32, %c0_i32_0, %c0_i32_1 : i32, i32, i32
  }
  func.func @transform_8(%arg0: i32) -> (i32, i32) {
    %c0_i32 = arith.constant 0 : i32
    %c0_i32_0 = arith.constant 0 : i32
    %c0_i32_1 = arith.constant 0 : i32
    return %c0_i32, %c0_i32_0 : i32, i32
  }
  func.func @transform_9(%arg0: i32) -> (i32, i32) {
    %c0_i32 = arith.constant 0 : i32
    %c0_i32_0 = arith.constant 0 : i32
    return %arg0, %c0_i32 : i32, i32
  }
}

</mosaic_0001>

<llo_original>
// kernel: tpu_custom_call.1
$region0: #{tpu_custom_call.1}
  #allocation0 [shape = 'u32[]', space=smem, size = 0x4, offset = 0x4, fixed_abs, tag = 'smem constant byte address 0x4 - core index']
  #allocation1 [shape = 'u32[144,128]{1,0:T(1,128)}', space=vmem, size = 0x12000, scoped, tag = 'internal scratch']
  #allocation2 [shape = 'f32[8,32]{1,0:T(8,128)}', space=vmem, size = 0x1000, scoped, tag = 'scratch operand']
  #allocation3 [shape = 'f32[8,32]{1,0:T(8,128)}', space=vmem, size = 0x1000, scoped, tag = 'scratch operand']
  #allocation4 [shape = 'f32[8,8,32]{2,1,0:T(8,128)}', space=vmem, size = 0x8000, scoped, tag = 'scratch operand']
  #allocation5 [shape = 'f32[8,8]{1,0:T(8,128)}', space=vmem, size = 0x1000, scoped, tag = 'scratch operand']
  #allocation6 [shape = 'f32[8,32]{1,0:T(8,128)}', space=vmem, size = 0x1000, scoped, tag = 'scratch operand']
  %s0 = inlined_call_operand.vmem [shape: f32[64,16], index: 0, kind: input, shape index: {}]
  %s1 = inlined_call_operand.vmem [shape: f32[16,128], index: 1, kind: input, shape index: {}]
  %s2 = inlined_call_operand.vmem [shape: f32[32,128], index: 2, kind: input, shape index: {}]
  %s3 = inlined_call_operand.vmem [shape: f32[1,128], index: 3, kind: input, shape index: {}]
  %s4 = inlined_call_operand.vmem [shape: f32[32,32], index: 4, kind: input, shape index: {}]
  %s5 = inlined_call_operand.vmem [shape: f32[1,32], index: 5, kind: input, shape index: {}]
  %s6 = inlined_call_operand.vmem [shape: f32[2,32], index: 6, kind: input, shape index: {}]
  %s7 = inlined_call_operand.vmem [shape: f32[2,32,4], index: 7, kind: input, shape index: {}]
  %s8 = inlined_call_operand.vmem [shape: f32[1,4], index: 8, kind: input, shape index: {}]
  %s9 = inlined_call_operand.hbm [shape: f32[64,128], index: 9, kind: output, shape index: {}]
  %s10 = sld [smem:[#allocation0]]
  $region105: #{tpu_custom_call.1} parent=0
    _
  %s12 = ssub.s32 1, %s10
  %s13 = scalar_select 0, %s12, %s10
  $region1: #{tpu_custom_call.1} parent=0
    #allocation7 [shape = 'u8[32768]{0}', space=vmem, size = 0x8000, scoped, tag = 'output window, operand 0']
    #allocation8 [shape = 's32[2]{0}', space=sflag, size = 0x8, scoped, tag = 'scoped memory for tpu_custom_call.1']
    %14 = vsyncpa [#allocation8], 0
    %s15 = scalar_lea.sflag [#allocation8], 1
    %16 = vsyncpa %s15, 0
    loop: start=0, step=1, limit=4
    $region2: #{tpu_custom_call.1} parent=1 // loop_pre_header
      _
    $region3: #{tpu_custom_call.1} parent=1 // loop_header
      %s18 = sphi 0, %s22
      %p19 = scmp.ge.s32.totalorder %s18, 4
      %s28 = sphi 0, %s30
      %s31 = sphi 0, %s28
      %s32 = sphi 0, %s31
      %s48 = sphi 0, %s32
      %s52 = sphi 0, %s52
      %s54 = sphi 0, %s52
      %s55 = sphi 0, %s54
      %s69 = sphi 0, %s55
      %s73 = sphi 0, %s73
      %s75 = sphi 0, %s73
      %s76 = sphi 0, %s75
      %s90 = sphi 0, %s76
      %s94 = sphi 0, %s94
      %s96 = sphi 0, %s94
      %s97 = sphi 0, %s96
      %s111 = sphi 0, %s97
      %s115 = sphi 0, %s115
      %s117 = sphi 0, %s115
      %s118 = sphi 0, %s117
      %s132 = sphi 0, %s118
      %s136 = sphi 0, %s136
      %s138 = sphi 0, %s136
      %s139 = sphi 0, %s138
      %s153 = sphi 0, %s139
      %s157 = sphi 0, %s157
      %s159 = sphi 0, %s157
      %s160 = sphi 0, %s159
      %s174 = sphi 0, %s160
      %s178 = sphi 0, %s178
      %s180 = sphi 0, %s178
      %s181 = sphi 0, %s180
      %s195 = sphi 0, %s181
      %s199 = sphi 0, %s199
      %s201 = sphi 0, %s199
      %s202 = sphi 0, %s201
      %s216 = sphi 0, %s202
      %s222 = sphi 0, %s224
      %s225 = sphi 0, %s222
      %s226 = sphi 0, %s225
      %s242 = sphi 0, %s226
    $region4: #{tpu_custom_call.1} parent=1 // loop_header_branch
      %21 = sbr.rel (%p19) target = $region8
    $region5: #{tpu_custom_call.1} parent=1 // loop_body
      %s23 = ssub.s32 %s18, 1
      %s24 = ssub.s32 %s18, 2
      %s25 = sadd.s32 %s18, 1
      %s26 = ssub.s32 %s18, %s25
      %p27 = scmp.eq.s32.totalorder %s26, 0
      %s29 = sadd.s32 %s28, 1
      %s30 = scalar_select %p27, %s28, %s29
      %p33 = pneg %p27
      %p34 = scmp.eq.s32.totalorder %s18, 1
      %p35 = por %p33, %p34
      %p36 = scmp.ne.s32.totalorder %s28, %s31
      %p37 = scmp.eq.s32.totalorder %s18, 0
      %p38 = por %p36, %p37
      %p39 = scmp.ne.s32.totalorder %s28, %s31
      %p40 = scmp.eq.s32.totalorder %s23, 1
      %p41 = por %p39, %p40
      %p42 = scmp.ne.s32.totalorder %s31, %s32
      %p43 = scmp.eq.s32.totalorder %s23, 0
      %p44 = por %p42, %p43
      %p45 = scmp.ne.s32.totalorder %s31, %s32
      %p46 = scmp.eq.s32.totalorder %s24, 1
      %p47 = por %p45, %p46
      %p49 = scmp.ne.s32.totalorder %s32, %s48
      %p50 = scmp.eq.s32.totalorder %s24, 0
      %p51 = por %p49, %p50
      %s53 = sadd.s32 %s52, 1
      %p56 = scmp.eq.s32.totalorder %s18, 1
      %p57 = scmp.ne.s32.totalorder %s52, %s54
      %p58 = scmp.eq.s32.totalorder %s18, 0
      %p59 = por %p57, %p58
      %p60 = scmp.ne.s32.totalorder %s52, %s54
      %p61 = scmp.eq.s32.totalorder %s23, 1
      %p62 = por %p60, %p61
      %p63 = scmp.ne.s32.totalorder %s54, %s55
      %p64 = scmp.eq.s32.totalorder %s23, 0
      %p65 = por %p63, %p64
      %p66 = scmp.ne.s32.totalorder %s54, %s55
      %p67 = scmp.eq.s32.totalorder %s24, 1
      %p68 = por %p66, %p67
      %p70 = scmp.ne.s32.totalorder %s55, %s69
      %p71 = scmp.eq.s32.totalorder %s24, 0
      %p72 = por %p70, %p71
      %s74 = sadd.s32 %s73, 1
      %p77 = scmp.eq.s32.totalorder %s18, 1
      %p78 = scmp.ne.s32.totalorder %s73, %s75
      %p79 = scmp.eq.s32.totalorder %s18, 0
      %p80 = por %p78, %p79
      %p81 = scmp.ne.s32.totalorder %s73, %s75
      %p82 = scmp.eq.s32.totalorder %s23, 1
      %p83 = por %p81, %p82
      %p84 = scmp.ne.s32.totalorder %s75, %s76
      %p85 = scmp.eq.s32.totalorder %s23, 0
      %p86 = por %p84, %p85
      %p87 = scmp.ne.s32.totalorder %s75, %s76
      %p88 = scmp.eq.s32.totalorder %s24, 1
      %p89 = por %p87, %p88
      %p91 = scmp.ne.s32.totalorder %s76, %s90
      %p92 = scmp.eq.s32.totalorder %s24, 0
      %p93 = por %p91, %p92
      %s95 = sadd.s32 %s94, 1
      %p98 = scmp.eq.s32.totalorder %s18, 1
      %p99 = scmp.ne.s32.totalorder %s94, %s96
      %p100 = scmp.eq.s32.totalorder %s18, 0
      %p101 = por %p99, %p100
      %p102 = scmp.ne.s32.totalorder %s94, %s96
      %p103 = scmp.eq.s32.totalorder %s23, 1
      %p104 = por %p102, %p103
      %p105 = scmp.ne.s32.totalorder %s96, %s97
      %p106 = scmp.eq.s32.totalorder %s23, 0
      %p107 = por %p105, %p106
      %p108 = scmp.ne.s32.totalorder %s96, %s97
      %p109 = scmp.eq.s32.totalorder %s24, 1
      %p110 = por %p108, %p109
      %p112 = scmp.ne.s32.totalorder %s97, %s111
      %p113 = scmp.eq.s32.totalorder %s24, 0
      %p114 = por %p112, %p113
      %s116 = sadd.s32 %s115, 1
      %p119 = scmp.eq.s32.totalorder %s18, 1
      %p120 = scmp.ne.s32.totalorder %s115, %s117
      %p121 = scmp.eq.s32.totalorder %s18, 0
      %p122 = por %p120, %p121
      %p123 = scmp.ne.s32.totalorder %s115, %s117
      %p124 = scmp.eq.s32.totalorder %s23, 1
      %p125 = por %p123, %p124
      %p126 = scmp.ne.s32.totalorder %s117, %s118
      %p127 = scmp.eq.s32.totalorder %s23, 0
      %p128 = por %p126, %p127
      %p129 = scmp.ne.s32.totalorder %s117, %s118
      %p130 = scmp.eq.s32.totalorder %s24, 1
      %p131 = por %p129, %p130
      %p133 = scmp.ne.s32.totalorder %s118, %s132
      %p134 = scmp.eq.s32.totalorder %s24, 0
      %p135 = por %p133, %p134
      %s137 = sadd.s32 %s136, 1
      %p140 = scmp.eq.s32.totalorder %s18, 1
      %p141 = scmp.ne.s32.totalorder %s136, %s138
      %p142 = scmp.eq.s32.totalorder %s18, 0
      %p143 = por %p141, %p142
      %p144 = scmp.ne.s32.totalorder %s136, %s138
      %p145 = scmp.eq.s32.totalorder %s23, 1
      %p146 = por %p144, %p145
      %p147 = scmp.ne.s32.totalorder %s138, %s139
      %p148 = scmp.eq.s32.totalorder %s23, 0
      %p149 = por %p147, %p148
      %p150 = scmp.ne.s32.totalorder %s138, %s139
      %p151 = scmp.eq.s32.totalorder %s24, 1
      %p152 = por %p150, %p151
      %p154 = scmp.ne.s32.totalorder %s139, %s153
      %p155 = scmp.eq.s32.totalorder %s24, 0
      %p156 = por %p154, %p155
      %s158 = sadd.s32 %s157, 1
      %p161 = scmp.eq.s32.totalorder %s18, 1
      %p162 = scmp.ne.s32.totalorder %s157, %s159
      %p163 = scmp.eq.s32.totalorder %s18, 0
      %p164 = por %p162, %p163
      %p165 = scmp.ne.s32.totalorder %s157, %s159
      %p166 = scmp.eq.s32.totalorder %s23, 1
      %p167 = por %p165, %p166
      %p168 = scmp.ne.s32.totalorder %s159, %s160
      %p169 = scmp.eq.s32.totalorder %s23, 0
      %p170 = por %p168, %p169
      %p171 = scmp.ne.s32.totalorder %s159, %s160
      %p172 = scmp.eq.s32.totalorder %s24, 1
      %p173 = por %p171, %p172
      %p175 = scmp.ne.s32.totalorder %s160, %s174
      %p176 = scmp.eq.s32.totalorder %s24, 0
      %p177 = por %p175, %p176
      %s179 = sadd.s32 %s178, 1
      %p182 = scmp.eq.s32.totalorder %s18, 1
      %p183 = scmp.ne.s32.totalorder %s178, %s180
      %p184 = scmp.eq.s32.totalorder %s18, 0
      %p185 = por %p183, %p184
      %p186 = scmp.ne.s32.totalorder %s178, %s180
      %p187 = scmp.eq.s32.totalorder %s23, 1
      %p188 = por %p186, %p187
      %p189 = scmp.ne.s32.totalorder %s180, %s181
      %p190 = scmp.eq.s32.totalorder %s23, 0
      %p191 = por %p189, %p190
      %p192 = scmp.ne.s32.totalorder %s180, %s181
      %p193 = scmp.eq.s32.totalorder %s24, 1
      %p194 = por %p192, %p193
      %p196 = scmp.ne.s32.totalorder %s181, %s195
      %p197 = scmp.eq.s32.totalorder %s24, 0
      %p198 = por %p196, %p197
      %s200 = sadd.s32 %s199, 1
      %p203 = scmp.eq.s32.totalorder %s18, 1
      %p204 = scmp.ne.s32.totalorder %s199, %s201
      %p205 = scmp.eq.s32.totalorder %s18, 0
      %p206 = por %p204, %p205
      %p207 = scmp.ne.s32.totalorder %s199, %s201
      %p208 = scmp.eq.s32.totalorder %s23, 1
      %p209 = por %p207, %p208
      %p210 = scmp.ne.s32.totalorder %s201, %s202
      %p211 = scmp.eq.s32.totalorder %s23, 0
      %p212 = por %p210, %p211
      %p213 = scmp.ne.s32.totalorder %s201, %s202
      %p214 = scmp.eq.s32.totalorder %s24, 1
      %p215 = por %p213, %p214
      %p217 = scmp.ne.s32.totalorder %s202, %s216
      %p218 = scmp.eq.s32.totalorder %s24, 0
      %p219 = por %p217, %p218
      %s220 = ssub.s32 %s18, %s25
      %p221 = scmp.eq.s32.totalorder %s220, 0
      %s223 = sadd.s32 %s222, 1
      %s224 = scalar_select %p221, %s222, %s223
      %p227 = pneg %p221
      %p228 = scmp.eq.s32.totalorder %s18, 1
      %p229 = por %p227, %p228
      %p230 = scmp.ne.s32.totalorder %s222, %s225
      %p231 = scmp.eq.s32.totalorder %s18, 0
      %p232 = por %p230, %p231
      %p233 = scmp.ne.s32.totalorder %s222, %s225
      %p234 = scmp.eq.s32.totalorder %s23, 1
      %p235 = por %p233, %p234
      %p236 = scmp.ne.s32.totalorder %s225, %s226
      %p237 = scmp.eq.s32.totalorder %s23, 0
      %p238 = por %p236, %p237
      %p239 = scmp.ne.s32.totalorder %s225, %s226
      %p240 = scmp.eq.s32.totalorder %s24, 1
      %p241 = por %p239, %p240
      %p243 = scmp.ne.s32.totalorder %s226, %s242
      %p244 = scmp.eq.s32.totalorder %s24, 0
      %p245 = por %p243, %p244
      %p246 = scmp.le.s32.totalorder 1, %s18
      %p247 = scmp.lt.s32.totalorder %s18, 3
      %p248 = pnand %p246, %p247
      %p249 = pneg %p248
      // Predicated region
      $region9: #{tpu_custom_call.1} parent=5 // pred_check
        _
      $region10: #{tpu_custom_call.1} parent=5 // pred_check_branch
        %251 = sbr.rel (%p248) target = $region12
      $region11: #{tpu_custom_call.1} parent=5 // pred_region
        %s252 = ssub.s32 %s18, 1
        // Predicated region
        $region13: #{tpu_custom_call.1} parent=11 // pred_check
          %p253 = pneg %p65
        $region14: #{tpu_custom_call.1} parent=11 // pred_check_branch
          %255 = sbr.rel (%p253) target = $region16
        $region15: #{tpu_custom_call.1} parent=11 // pred_region
          _
        $region16: #{tpu_custom_call.1} parent=11 // pred_fallthru
          _
        // Predicated region
        $region17: #{tpu_custom_call.1} parent=11 // pred_check
          %p256 = pneg %p86
        $region18: #{tpu_custom_call.1} parent=11 // pred_check_branch
          %258 = sbr.rel (%p256) target = $region20
        $region19: #{tpu_custom_call.1} parent=11 // pred_region
          _
        $region20: #{tpu_custom_call.1} parent=11 // pred_fallthru
          _
        // Predicated region
        $region21: #{tpu_custom_call.1} parent=11 // pred_check
          %p259 = pneg %p107
        $region22: #{tpu_custom_call.1} parent=11 // pred_check_branch
          %261 = sbr.rel (%p259) target = $region24
        $region23: #{tpu_custom_call.1} parent=11 // pred_region
          _
        $region24: #{tpu_custom_call.1} parent=11 // pred_fallthru
          _
        // Predicated region
        $region25: #{tpu_custom_call.1} parent=11 // pred_check
          %p262 = pneg %p128
        $region26: #{tpu_custom_call.1} parent=11 // pred_check_branch
          %264 = sbr.rel (%p262) target = $region28
        $region27: #{tpu_custom_call.1} parent=11 // pred_region
          _
        $region28: #{tpu_custom_call.1} parent=11 // pred_fallthru
          _
        // Predicated region
        $region29: #{tpu_custom_call.1} parent=11 // pred_check
          %p265 = pneg %p149
        $region30: #{tpu_custom_call.1} parent=11 // pred_check_branch
          %267 = sbr.rel (%p265) target = $region32
        $region31: #{tpu_custom_call.1} parent=11 // pred_region
          _
        $region32: #{tpu_custom_call.1} parent=11 // pred_fallthru
          _
        // Predicated region
        $region33: #{tpu_custom_call.1} parent=11 // pred_check
          %p268 = pneg %p170
        $region34: #{tpu_custom_call.1} parent=11 // pred_check_branch
          %270 = sbr.rel (%p268) target = $region36
        $region35: #{tpu_custom_call.1} parent=11 // pred_region
          _
        $region36: #{tpu_custom_call.1} parent=11 // pred_fallthru
          _
        // Predicated region
        $region37: #{tpu_custom_call.1} parent=11 // pred_check
          %p271 = pneg %p191
        $region38: #{tpu_custom_call.1} parent=11 // pred_check_branch
          %273 = sbr.rel (%p271) target = $region40
        $region39: #{tpu_custom_call.1} parent=11 // pred_region
          _
        $region40: #{tpu_custom_call.1} parent=11 // pred_fallthru
          _
        // Predicated region
        $region41: #{tpu_custom_call.1} parent=11 // pred_check
          %p274 = pneg %p212
        $region42: #{tpu_custom_call.1} parent=11 // pred_check_branch
          %276 = sbr.rel (%p274) target = $region44
        $region43: #{tpu_custom_call.1} parent=11 // pred_region
          _
        $region44: #{tpu_custom_call.1} parent=11 // pred_fallthru
          _
      $region12: #{tpu_custom_call.1} parent=5 // pred_fallthru
        _
      %p277 = scmp.lt.s32.totalorder %s18, 2
      // Predicated region
      $region45: #{tpu_custom_call.1} parent=5 // pred_check
        %p278 = pneg %p277
      $region46: #{tpu_custom_call.1} parent=5 // pred_check_branch
        %280 = sbr.rel (%p278) target = $region48
      $region47: #{tpu_custom_call.1} parent=5 // pred_region
        // Predicated region
        $region49: #{tpu_custom_call.1} parent=47 // pred_check
          %p281 = pneg %p38
        $region50: #{tpu_custom_call.1} parent=47 // pred_check_branch
          %283 = sbr.rel (%p281) target = $region52
        $region51: #{tpu_custom_call.1} parent=47 // pred_region
          %s284 = smul.u32 4, %s18
          %p285 = scmp.lt.s32.totalorder %s284, 7
          %s286 = scalar_select %p285, %s284, 7
          %s287 = smul.addr %s286, 8
          %s288 = scalar_lea.vmem %s0, %s287
          %s289 = smul.u32 4, %s18
        $region52: #{tpu_custom_call.1} parent=47 // pred_fallthru
          _
      $region48: #{tpu_custom_call.1} parent=5 // pred_fallthru
        _
      %p290 = scmp.le.s32.totalorder 1, %s18
      %p291 = scmp.lt.s32.totalorder %s18, 3
      %p292 = pnand %p290, %p291
      %p293 = pneg %p292
      // Predicated region
      $region53: #{tpu_custom_call.1} parent=5 // pred_check
        _
      $region54: #{tpu_custom_call.1} parent=5 // pred_check_branch
        %295 = sbr.rel (%p292) target = $region56
      $region55: #{tpu_custom_call.1} parent=5 // pred_region
        %s296 = ssub.s32 %s18, 1
        %s297 = smul.u32 4, %s23
        %p298 = scmp.lt.s32.totalorder %s297, 7
        %s299 = scalar_select %p298, %s297, 7
        %s300 = smul.addr %s299, 8
        %s301 = scalar_lea.vmem %s0, %s300
        %p302 = pneg %p44
        %p303 = pneg %p41
        %p304 = pneg %p65
        %p305 = pneg %p62
        %p306 = pneg %p86
        %p307 = pneg %p83
        %p308 = pneg %p107
        %p309 = pneg %p104
        %p310 = pneg %p128
        %p311 = pneg %p125
        %p312 = pneg %p149
        %p313 = pneg %p146
        %p314 = pneg %p170
        %p315 = pneg %p167
        %p316 = pneg %p191
        %p317 = pneg %p188
        %p318 = pneg %p212
        %p319 = pneg %p209
        %p320 = pneg %p238
        %p321 = pneg %p235
        %s322 = sand.u32 %s225, 1
        %s323 = scalar_lea.sflag [#allocation8], %s322
        %s324 = sand.u32 %s225, 1
        %s325 = smul.addr %s324, 32
        %s326 = scalar_lea.vmem [#allocation7], %s325
        %s327 = smul.u32 4, %s23
        %p328 = scmp.lt.s32.totalorder %s327, 7
        %s329 = scalar_select %p328, %s327, 7
        %s330 = smul.addr %s329, 8
        %s331 = scalar_lea.vmem %s0, %s330
        %s332 = smul.u32 4, %s23
        %s333 = smul.u32 4, %s23
        %p334 = scmp.eq.s32.totalorder %s23, 0
        // Predicated region
        $region57: #{tpu_custom_call.1} parent=55 // pred_check
          %p335 = pneg %p334
        $region58: #{tpu_custom_call.1} parent=55 // pred_check_branch
          %337 = sbr.rel (%p335) target = $region60
        $region59: #{tpu_custom_call.1} parent=55 // pred_region
          %vm338 = vcmask 261120
          %339 = vst.msk [vmem:[#allocation2] sm:$0xff] %vm338, 0.0
          %340 = vst.msk [vmem:[#allocation3] sm:$0xff] %vm338, 0.0
          %341 = vst.msk [vmem:[#allocation4] sm:$0xff] %vm338, 0.0
          %342 = vst.msk [vmem:[#allocation4 + $0x8] sm:$0xff] %vm338, 0.0
          %343 = vst.msk [vmem:[#allocation4 + $0x10] sm:$0xff] %vm338, 0.0
          %344 = vst.msk [vmem:[#allocation4 + $0x18] sm:$0xff] %vm338, 0.0
          %345 = vst.msk [vmem:[#allocation4 + $0x20] sm:$0xff] %vm338, 0.0
          %346 = vst.msk [vmem:[#allocation4 + $0x28] sm:$0xff] %vm338, 0.0
          %347 = vst.msk [vmem:[#allocation4 + $0x30] sm:$0xff] %vm338, 0.0
          %348 = vst.msk [vmem:[#allocation4 + $0x38] sm:$0xff] %vm338, 0.0
          %vm349 = vcmask 64512
          %350 = vst.msk [vmem:[#allocation5] sm:$0xff] %vm349, 0.0
        $region60: #{tpu_custom_call.1} parent=55 // pred_fallthru
          _
        %v351 = vld [vmem:[%s1] sm:$0xff]
        %v352 = vld [vmem:[%s1 + $0x8] sm:$0xff]
        %v353 = vld [vmem:[%s2] sm:$0xff]
        %v354 = vld [vmem:[%s2 + $0x8] sm:$0xff]
        %v355 = vld [vmem:[%s2 + $0x10] sm:$0xff]
        %v356 = vld [vmem:[%s2 + $0x18] sm:$0xff]
        %v357 = vld [vmem:[%s3] sm:$0x1]
        %v358 = vld [vmem:[%s4] sm:$0xff]
        %v359 = vld [vmem:[%s4 + $0x8] sm:$0xff]
        %v360 = vld [vmem:[%s4 + $0x10] sm:$0xff]
        %v361 = vld [vmem:[%s4 + $0x18] sm:$0xff]
        %v362 = vld [vmem:[%s5] sm:$0x1]
        %v363 = vld [vmem:[%s6] sm:$0x1]
        %v364 = vld [vmem:[%s6 + $0x1] sm:$0x1]
        %v365 = vld [vmem:[%s7] sm:$0xff]
        %v366 = vld [vmem:[%s7 + $0x8] sm:$0xff]
        %v367 = vld [vmem:[%s7 + $0x10] sm:$0xff]
        %v368 = vld [vmem:[%s7 + $0x18] sm:$0xff]
        %s369 = scalar_lea.vmem %s7, 32
        %v370 = vld [vmem:[%s369] sm:$0xff]
        %v371 = vld [vmem:[%s369 + $0x8] sm:$0xff]
        %v372 = vld [vmem:[%s369 + $0x10] sm:$0xff]
        %v373 = vld [vmem:[%s369 + $0x18] sm:$0xff]
        %v374 = vld [vmem:[%s8] sm:$0x1]
        %v375 = vlaneseq
        %v376 = vand.u32 %v375, 127
        %vm377 = vcmp.ge.s32.totalorder %v376, 64
        %vm378 = vcmp.lt.s32.totalorder %v376, 96
        %vm379 = vmand %vm377, %vm378
        %v380 = vld [vmem:[%s331] sm:$0xff]
        %v381 = vld [vmem:[%s331 + $0x8] sm:$0xff]
        %v382 = vld [vmem:[%s331 + $0x10] sm:$0xff]
        %v383 = vld [vmem:[%s331 + $0x18] sm:$0xff]
        %v385 = vlaneseq
        %v386 = vshrl.u32 %v385, 7
        %v387 = vsub.s32 0, %v386
        %v388 = vrot.slane %v357, %v387
        %vm390 = vcmask 130048
        %v392 = vsel %vm390, %v380, 0
        %v395 = vsel %vm390, %v381, 0
        %v398 = vsel %vm390, %v382, 0
        %v401 = vsel %vm390, %v383, 0
        %403 = vmatprep.subr.mxu0 0.0
        %404 = vmatpush1.msra.mxu0 %v351
        %405 = vmatprep.subr.mxu0 0.0
        %406 = vmatpush1.msra.mxu0 %v352
        %407 = vmatprep.subr.mxu0 0.0
        %408 = vmatpush1.msra.mxu0 0.0
        %409 = vmatprep.subr.mxu0 0.0
        %410 = vmatpush1.msra.mxu0 0.0
        %411 = vmatprep.subr.mxu0 0.0
        %412 = vmatpush1.msra.mxu0 0.0
        %413 = vmatprep.subr.mxu0 0.0
        %414 = vmatpush1.msra.mxu0 0.0
        %415 = vmatprep.subr.mxu0 0.0
        %416 = vmatpush1.msra.mxu0 0.0
        %417 = vmatprep.subr.mxu0 0.0
        %418 = vmatpush1.msra.mxu0 0.0
        %419 = vmatprep.subr.mxu0 0.0
        %420 = vmatpush1.msra.mxu0 0.0
        %421 = vmatprep.subr.mxu0 0.0
        %422 = vmatpush1.msra.mxu0 0.0
        %423 = vmatprep.subr.mxu0 0.0
        %424 = vmatpush1.msra.mxu0 0.0
        %425 = vmatprep.subr.mxu0 0.0
        %426 = vmatpush1.msra.mxu0 0.0
        %427 = vmatprep.subr.mxu0 0.0
        %428 = vmatpush1.msra.mxu0 0.0
        %429 = vmatprep.subr.mxu0 0.0
        %430 = vmatpush1.msra.mxu0 0.0
        %431 = vmatprep.subr.mxu0 0.0
        %432 = vmatpush1.msra.mxu0 0.0
        %433 = vmatprep.subr.mxu0 0.0
        %434 = vmatpush1.msra.mxu0 0.0
        %435 = vmatprep.subr.mxu0 0.0
        %436 = vmatpush1.msra.mxu0 0.0
        %437 = vmatprep.subr.mxu0 0.0
        %438 = vmatpush1.msra.mxu0 0.0
        %439 = vmatprep.subr.mxu0 0.0
        %440 = vmatpush1.msra.mxu0 0.0
        %441 = vmatprep.subr.mxu0 0.0
        %442 = vmatpush1.msra.mxu0 0.0
        %443 = vmatprep.subr.mxu0 0.0
        %444 = vmatpush1.msra.mxu0 0.0
        %445 = vmatprep.subr.mxu0 0.0
        %446 = vmatpush1.msra.mxu0 0.0
        %447 = vmatprep.subr.mxu0 0.0
        %448 = vmatpush1.msra.mxu0 0.0
        %449 = vmatprep.subr.mxu0 0.0
        %450 = vmatpush1.msra.mxu0 0.0
        %451 = vmatprep.subr.mxu0 0.0
        %452 = vmatpush1.msra.mxu0 0.0
        %453 = vmatprep.subr.mxu0 0.0
        %454 = vmatpush1.msra.mxu0 0.0
        %455 = vmatprep.subr.mxu0 0.0
        %456 = vmatpush1.msra.mxu0 0.0
        %457 = vmatprep.subr.mxu0 0.0
        %458 = vmatpush1.msra.mxu0 0.0
        %459 = vmatprep.subr.mxu0 0.0
        %460 = vmatpush1.msra.mxu0 0.0
        %461 = vmatprep.subr.mxu0 0.0
        %462 = vmatpush1.msra.mxu0 0.0
        %463 = vmatprep.subr.mxu0 0.0
        %464 = vmatpush1.msra.mxu0 0.0
        %465 = vmatprep.subr.mxu0 0.0
        %466 = vmatpush1.msra.mxu0 0.0
        %467 = vmatprep.mubr.f32.mxu0 0.0
        %468 = vmatmul.mubr.f32.gmra.mrb[0].mxu0 %v392
        %v469 = vpop.f32.mrb[0].mxu0
        %v470 = vadd.f32 %v388, %v469
        %v471 = vpop.f32.mrb[0].mxu0
        %472 = vmatprep.mubr.f32.mxu0 0.0
        %473 = vmatmul.mubr.f32.gmra.mrb[0].mxu0 %v395
        %v474 = vpop.f32.mrb[0].mxu0
        %v475 = vadd.f32 %v388, %v474
        %v476 = vpop.f32.mrb[0].mxu0
        %477 = vmatprep.mubr.f32.mxu0 0.0
        %478 = vmatmul.mubr.f32.gmra.mrb[0].mxu0 %v398
        %v479 = vpop.f32.mrb[0].mxu0
        %v480 = vadd.f32 %v388, %v479
        %v481 = vpop.f32.mrb[0].mxu0
        %482 = vmatprep.mubr.f32.mxu0 0.0
        %483 = vmatmul.mubr.f32.gmra.mrb[0].mxu0 %v401
        %v484 = vpop.f32.mrb[0].mxu0
        %v485 = vadd.f32 %v388, %v484
        %v486 = vpop.f32.mrb[0].mxu0
        %487 = vdwg.mxu0
        %v488 = vld [vmem:[#allocation2] sm:$0xff]
        %v489 = vld [vmem:[#allocation3] sm:$0xff]
        %v490 = vld [vmem:[#allocation5] sm:$0xff]
        %s491 = smul.u32 %s23, 4
        %vm492 = vcmask 261120
        %v494 = vsel %vm492, %v488, 0
        %496 = vmatprep.subr.mxu0 0.0
        %497 = vmatpush1.msra.mxu0 %v353
        %498 = vmatprep.subr.mxu0 0.0
        %499 = vmatpush1.msra.mxu0 %v354
        %500 = vmatprep.subr.mxu0 0.0
        %501 = vmatpush1.msra.mxu0 %v355
        %502 = vmatprep.subr.mxu0 0.0
        %503 = vmatpush1.msra.mxu0 %v356
        %504 = vmatprep.subr.mxu0 0.0
        %505 = vmatpush1.msra.mxu0 0.0
        %506 = vmatprep.subr.mxu0 0.0
        %507 = vmatpush1.msra.mxu0 0.0
        %508 = vmatprep.subr.mxu0 0.0
        %509 = vmatpush1.msra.mxu0 0.0
        %510 = vmatprep.subr.mxu0 0.0
        %511 = vmatpush1.msra.mxu0 0.0
        %512 = vmatprep.subr.mxu0 0.0
        %513 = vmatpush1.msra.mxu0 0.0
        %514 = vmatprep.subr.mxu0 0.0
        %515 = vmatpush1.msra.mxu0 0.0
        %516 = vmatprep.subr.mxu0 0.0
        %517 = vmatpush1.msra.mxu0 0.0
        %518 = vmatprep.subr.mxu0 0.0
        %519 = vmatpush1.msra.mxu0 0.0
        %520 = vmatprep.subr.mxu0 0.0
        %521 = vmatpush1.msra.mxu0 0.0
        %522 = vmatprep.subr.mxu0 0.0
        %523 = vmatpush1.msra.mxu0 0.0
        %524 = vmatprep.subr.mxu0 0.0
        %525 = vmatpush1.msra.mxu0 0.0
        %526 = vmatprep.subr.mxu0 0.0
        %527 = vmatpush1.msra.mxu0 0.0
        %528 = vmatprep.subr.mxu0 0.0
        %529 = vmatpush1.msra.mxu0 0.0
        %530 = vmatprep.subr.mxu0 0.0
        %531 = vmatpush1.msra.mxu0 0.0
        %532 = vmatprep.subr.mxu0 0.0
        %533 = vmatpush1.msra.mxu0 0.0
        %534 = vmatprep.subr.mxu0 0.0
        %535 = vmatpush1.msra.mxu0 0.0
        %536 = vmatprep.subr.mxu0 0.0
        %537 = vmatpush1.msra.mxu0 0.0
        %538 = vmatprep.subr.mxu0 0.0
        %539 = vmatpush1.msra.mxu0 0.0
        %540 = vmatprep.subr.mxu0 0.0
        %541 = vmatpush1.msra.mxu0 0.0
        %542 = vmatprep.subr.mxu0 0.0
        %543 = vmatpush1.msra.mxu0 0.0
        %544 = vmatprep.subr.mxu0 0.0
        %545 = vmatpush1.msra.mxu0 0.0
        %546 = vmatprep.subr.mxu0 0.0
        %547 = vmatpush1.msra.mxu0 0.0
        %548 = vmatprep.subr.mxu0 0.0
        %549 = vmatpush1.msra.mxu0 0.0
        %550 = vmatprep.subr.mxu0 0.0
        %551 = vmatpush1.msra.mxu0 0.0
        %552 = vmatprep.subr.mxu0 0.0
        %553 = vmatpush1.msra.mxu0 0.0
        %554 = vmatprep.subr.mxu0 0.0
        %555 = vmatpush1.msra.mxu0 0.0
        %556 = vmatprep.subr.mxu0 0.0
        %557 = vmatpush1.msra.mxu0 0.0
        %558 = vmatprep.subr.mxu0 0.0
        %559 = vmatpush1.msra.mxu0 0.0
        %560 = vmatprep.mubr.f32.mxu0 0.0
        %561 = vmatmul.mubr.f32.gmra.mrb[0].mxu0 %v494
        %v562 = vpop.f32.mrb[0].mxu0
        %v563 = vadd.f32 0.0, %v562
        %v564 = vpop.f32.mrb[0].mxu0
        %565 = vdwg.mxu0
        %v566 = vadd.f32 %v470, %v563
        %v567 = vtanh.pop %v566
        %v568 = vxor.u32 %v566, 2147483648
        %v569 = vmul.f32 %v568, 1.442695
        %v570 = vpow.pop %v569
        %v571 = vadd.f32 %v570, 1.0
        %v572 = vrcp.pop %v571
        %v573 = vmul.f32 1.0, %v572
        %v574 = vsel %vm379, 1, 0
        %vm575 = vcmp.eq.s32.totalorder %v574, 1
        %v576 = vsel %vm575, %v567, %v573
        %578 = vrot.lane.b32.xlu0 %v489, 32
        %v579 = vpop.permute.xlu0 %578
        %v581 = vmul.f32 %v576, %v579
        %583 = vrot.lane.b32.xlu0 %v576, 64
        %v584 = vpop.permute.xlu0 %583
        %v586 = vmul.f32 %v576, %v584
        %588 = vrot.lane.b32.xlu0 %v586, 32
        %v589 = vpop.permute.xlu0 %588
        %v591 = vadd.f32 %v581, %v589
        %v592 = vtanh.pop %v591
        %594 = vrot.lane.b32.xlu0 %v592, 64
        %v595 = vpop.permute.xlu0 %594
        %v597 = vmul.f32 %v576, %v595
        %v598 = vtanh.pop %v597
        %v599 = vlaneseq
        %v600 = vshrl.u32 %v599, 7
        %v601 = vsub.s32 0, %v600
        %v602 = vrot.slane %v363, %v601
        %604 = vrot.lane.b32.xlu0 %v602, 96
        %v605 = vpop.permute.xlu0 %604
        %v607 = vmul.f32 %v598, %v605
        %609 = vrot.lane.b32.xlu0 %v607, 32
        %v610 = vpop.permute.xlu0 %609
        %v612 = vsel %vm492, %v610, 0.0
        %613 = vadd.xlane.f32.xlu0 %v612
        %v614 = vpop.xlane.xlu0 %613
        %v615 = vadd.f32 %v614, %v490
        %s616 = sadd.s32 %s491, 1
        %v617 = vstv %s616
        %vm618 = vcmp.lt.s32.totalorder %v376, %v617
        %v619 = vsel %vm618, %v615, -1e+30
        %vm620 = vcmask 64512
        %v621 = vsel %vm620, %v619, -inf
        %622 = vmax.xlane.f32.xlu0 %v621
        %v623 = vpop.xlane.xlu0 %622
        %vm624 = vcmp.eq.f32.partialorder %v619, %v623
        %v625 = vsel %vm624, %v376, 8
        %v626 = vsel %vm620, %v625, 2147483647
        %v627 = vand.u32 %v626, 65535
        %v628 = vshra.s32 %v626, 16
        %v629 = vcvt.s32.f32 %v627
        %v630 = vcvt.s32.f32 %v628
        %631 = vmin.xlane.f32.xlu0 %v630
        %v632 = vpop.xlane.xlu0 %631
        %vm633 = vcmp.eq.f32.partialorder %v630, %v632
        %v634 = vsel %vm633, %v629, inf
        %635 = vmin.xlane.f32.xlu0 %v634
        %v636 = vpop.xlane.xlu0 %635
        %v637 = vcvt.f32.s32 %v636
        %v638 = vcvt.f32.s32 %v632
        %v639 = vshll.u32 %v638, 16
        %v640 = vadd.s32 %v639, %v637
        %vm641 = vcmp.eq.s32.totalorder %v376, %v640
        %v642 = vsel %vm641, -1e+30, %v619
        %v643 = vsel %vm620, %v642, -inf
        %644 = vmax.xlane.f32.xlu0 %v643
        %v645 = vpop.xlane.xlu0 %644
        %vm646 = vcmp.eq.f32.partialorder %v642, %v645
        %v647 = vsel %vm646, %v376, 8
        %v648 = vsel %vm620, %v647, 2147483647
        %v649 = vand.u32 %v648, 65535
        %v650 = vshra.s32 %v648, 16
        %v651 = vcvt.s32.f32 %v649
        %v652 = vcvt.s32.f32 %v650
        %653 = vmin.xlane.f32.xlu0 %v652
        %v654 = vpop.xlane.xlu0 %653
        %vm655 = vcmp.eq.f32.partialorder %v652, %v654
        %v656 = vsel %vm655, %v651, inf
        %657 = vmin.xlane.f32.xlu0 %v656
        %v658 = vpop.xlane.xlu0 %657
        %v659 = vcvt.f32.s32 %v658
        %v660 = vcvt.f32.s32 %v654
        %v661 = vshll.u32 %v660, 16
        %v662 = vadd.s32 %v661, %v659
        %vm663 = vcmp.eq.s32.totalorder %v376, %v662
        %v664 = vsel %vm663, -1e+30, %v642
        %v665 = vsel %vm620, %v664, -inf
        %666 = vmax.xlane.f32.xlu0 %v665
        %v667 = vpop.xlane.xlu0 %666
        %vm668 = vcmp.le.f32.partialorder %v667, -5e+29
        %v669 = vsel %vm668, 0.0, %v667
        %v670 = vadd.f32 %v669, 1e-07
        %v671 = vsub.f32 %v615, %v670
        %v672 = vmax.f32 %v671, 0.0
        %v673 = vsel %vm618, %v672, 0.0
        %v674 = vsel %vm620, %v673, 0.0
        %675 = vadd.xlane.f32.xlu0 %v674
        %v676 = vpop.xlane.xlu0 %675
        %v677 = vadd.f32 %v676, 1e-07
        %v678 = vrcp.pop %v677
        %v679 = vmul.f32 %v673, %v678
        %v680 = vsel %vm618, %v615, 0.0
        %p681 = scmp.gt.s32.totalorder %s616, 3
        %s682 = scalar_select %p681, 1, 0
        %s683 = scvt.s32.f32 %s682
        %v684 = vstv %s683
        %v685 = vmul.f32 %v684, %v679
        %s686 = ssub.f32 1.0, %s683
        %v687 = vstv %s686
        %v688 = vmul.f32 %v687, %v680
        %v689 = vadd.f32 %v685, %v688
        %690 = vxpose.xlu0.b32.start [1/16] %v689, 128
        %691 = vxpose.xlu0.b32.cont [2/16] 0.0, 128
        %692 = vxpose.xlu0.b32.cont [3/16] 0.0, 128
        %693 = vxpose.xlu0.b32.cont [4/16] 0.0, 128
        %694 = vxpose.xlu0.b32.cont [5/16] 0.0, 128
        %695 = vxpose.xlu0.b32.cont [6/16] 0.0, 128
        %696 = vxpose.xlu0.b32.cont [7/16] 0.0, 128
        %697 = vxpose.xlu0.b32.cont [8/16] 0.0, 128
        %698 = vxpose.xlu0.b32.cont [9/16] 0.0, 128
        %699 = vxpose.xlu0.b32.cont [10/16] 0.0, 128
        %700 = vxpose.xlu0.b32.cont [11/16] 0.0, 128
        %701 = vxpose.xlu0.b32.cont [12/16] 0.0, 128
        %702 = vxpose.xlu0.b32.cont [13/16] 0.0, 128
        %703 = vxpose.xlu0.b32.cont [14/16] 0.0, 128
        %704 = vxpose.xlu0.b32.cont [15/16] 0.0, 128
        %705 = vxpose.xlu0.b32.end [16/16] 0.0, 128
        %v706 = vpop.trf.xlu0
        %v707 = vpop.trf.xlu0
        %v708 = vpop.trf.xlu0
        %v709 = vpop.trf.xlu0
        %v710 = vpop.trf.xlu0
        %v711 = vpop.trf.xlu0
        %v712 = vpop.trf.xlu0
        %v713 = vpop.trf.xlu0
        %v714 = vpop.trf.xlu0
        %v715 = vpop.trf.xlu0
        %v716 = vpop.trf.xlu0
        %v717 = vpop.trf.xlu0
        %v718 = vpop.trf.xlu0
        %v719 = vpop.trf.xlu0
        %v720 = vpop.trf.xlu0
        %v721 = vpop.trf.xlu0
        %v722 = vlaneseq
        %v723 = vshrl.u32 %v722, 7
        %v724 = vsub.s32 0, %v723
        %v725 = vrot.slane %v706, %v724
        %727 = vbcast.lane.b32.xlu0 %v725, 256
        %v728 = vpop.permute.xlu0 %727
        %v729 = vlaneseq
        %v730 = vshrl.u32 %v729, 7
        %v731 = vsub.s32 1, %v730
        %v732 = vrot.slane %v706, %v731
        %734 = vbcast.lane.b32.xlu0 %v732, 256
        %v735 = vpop.permute.xlu0 %734
        %v736 = vlaneseq
        %v737 = vshrl.u32 %v736, 7
        %v738 = vsub.s32 2, %v737
        %v739 = vrot.slane %v706, %v738
        %741 = vbcast.lane.b32.xlu0 %v739, 256
        %v742 = vpop.permute.xlu0 %741
        %v743 = vlaneseq
        %v744 = vshrl.u32 %v743, 7
        %v745 = vsub.s32 3, %v744
        %v746 = vrot.slane %v706, %v745
        %748 = vbcast.lane.b32.xlu0 %v746, 256
        %v749 = vpop.permute.xlu0 %748
        %v750 = vld [vmem:[#allocation4] sm:$0xff]
        %v751 = vld [vmem:[#allocation4 + $0x8] sm:$0xff]
        %v752 = vld [vmem:[#allocation4 + $0x10] sm:$0xff]
        %v753 = vld [vmem:[#allocation4 + $0x18] sm:$0xff]
        %v754 = vmul.f32 %v728, %v750
        %v755 = vmul.f32 %v735, %v751
        %v756 = vmul.f32 %v742, %v752
        %v757 = vmul.f32 %v749, %v753
        %v758 = vsel %vm492, %v754, 0.0
        %v759 = vsel %vm492, %v755, 0.0
        %v760 = vadd.f32 %v758, %v759
        %v761 = vsel %vm492, %v756, 0.0
        %v762 = vadd.f32 %v760, %v761
        %v763 = vsel %vm492, %v757, 0.0
        %v764 = vadd.f32 %v762, %v763
        %765 = vst.msk [vmem:[#allocation6] sm:$0xff] %vm492, %v764
        %p766 = scmp.ge.s32.totalorder %s491, 4
        // Predicated region
        $region61: #{tpu_custom_call.1} parent=55 // pred_check
          %p767 = pneg %p766
        $region62: #{tpu_custom_call.1} parent=55 // pred_check_branch
          %769 = sbr.rel (%p767) target = $region64
        $region63: #{tpu_custom_call.1} parent=55 // pred_region
          %v770 = vld [vmem:[#allocation6] sm:$0xff]
          %v771 = vlaneseq
          %v772 = vshrl.u32 %v771, 7
          %v773 = vsub.s32 4, %v772
          %v774 = vrot.slane %v706, %v773
          %776 = vbcast.lane.b32.xlu0 %v774, 256
          %v777 = vpop.permute.xlu0 %776
          %v778 = vlaneseq
          %v779 = vshrl.u32 %v778, 7
          %v780 = vsub.s32 5, %v779
          %v781 = vrot.slane %v706, %v780
          %783 = vbcast.lane.b32.xlu0 %v781, 256
          %v784 = vpop.permute.xlu0 %783
          %v785 = vlaneseq
          %v786 = vshrl.u32 %v785, 7
          %v787 = vsub.s32 6, %v786
          %v788 = vrot.slane %v706, %v787
          %790 = vbcast.lane.b32.xlu0 %v788, 256
          %v791 = vpop.permute.xlu0 %790
          %v792 = vlaneseq
          %v793 = vshrl.u32 %v792, 7
          %v794 = vsub.s32 7, %v793
          %v795 = vrot.slane %v706, %v794
          %797 = vbcast.lane.b32.xlu0 %v795, 256
          %v798 = vpop.permute.xlu0 %797
          %s799 = scalar_lea.vmem [#allocation4], 32
          %v800 = vld [vmem:[%s799] sm:$0xff]
          %v801 = vld [vmem:[%s799 + $0x8] sm:$0xff]
          %v802 = vld [vmem:[%s799 + $0x10] sm:$0xff]
          %v803 = vld [vmem:[%s799 + $0x18] sm:$0xff]
          %v804 = vmul.f32 %v777, %v800
          %v805 = vmul.f32 %v784, %v801
          %v806 = vmul.f32 %v791, %v802
          %v807 = vmul.f32 %v798, %v803
          %v808 = vsel %vm492, %v804, 0.0
          %v809 = vsel %vm492, %v805, 0.0
          %v810 = vadd.f32 %v808, %v809
          %v811 = vsel %vm492, %v806, 0.0
          %v812 = vadd.f32 %v810, %v811
          %v813 = vsel %vm492, %v807, 0.0
          %v814 = vadd.f32 %v812, %v813
          %v815 = vadd.f32 %v770, %v814
          %816 = vst.msk [vmem:[#allocation6] sm:$0xff] %vm492, %v815
        $region64: #{tpu_custom_call.1} parent=55 // pred_fallthru
          _
        %v817 = vld [vmem:[#allocation6] sm:$0xff]
        %819 = vrot.lane.b32.xlu0 %v817, 96
        %v820 = vpop.permute.xlu0 %819
        %v822 = vadd.f32 %v597, %v820
        %p823 = scmp.lt.s32.totalorder %s616, 8
        // Predicated region
        $region65: #{tpu_custom_call.1} parent=55 // pred_check
          %p824 = pneg %p823
        $region66: #{tpu_custom_call.1} parent=55 // pred_check_branch
          %826 = sbr.rel (%p824) target = $region68
        $region67: #{tpu_custom_call.1} parent=55 // pred_region
          %828 = vrot.lane.b32.xlu0 %v822, 32
          %v829 = vpop.permute.xlu0 %828
          %s831 = smul.u32 %s616, 8
          %s832 = scalar_lea.vmem [#allocation4], %s831
          %833 = vst.msk [vmem:[%s832] sm:$0xff] %vm492, %v829
        $region68: #{tpu_custom_call.1} parent=55 // pred_fallthru
          _
        %v834 = vtanh.pop %v822
        %v835 = vlaneseq
        %v836 = vshrl.u32 %v835, 7
        %v837 = vsub.s32 0, %v836
        %v838 = vrot.slane %v364, %v837
        %840 = vrot.lane.b32.xlu0 %v838, 96
        %v841 = vpop.permute.xlu0 %840
        %v843 = vmul.f32 %v834, %v841
        %845 = vrot.lane.b32.xlu0 %v843, 32
        %v846 = vpop.permute.xlu0 %845
        %v848 = vsel %vm492, %v846, 0.0
        %849 = vadd.xlane.f32.xlu0 %v848
        %v850 = vpop.xlane.xlu0 %849
        %vm851 = vcmp.eq.s32.totalorder %v376, %v617
        %v852 = vsel %vm851, %v850, %v490
        %854 = vrot.lane.b32.xlu0 %v822, 32
        %v855 = vpop.permute.xlu0 %854
        %v856 = vsel %vm492, %v855, 0
        %858 = vmatprep.subr.mxu0 0.0
        %859 = vmatpush1.msra.mxu0 %v353
        %860 = vmatprep.subr.mxu0 0.0
        %861 = vmatpush1.msra.mxu0 %v354
        %862 = vmatprep.subr.mxu0 0.0
        %863 = vmatpush1.msra.mxu0 %v355
        %864 = vmatprep.subr.mxu0 0.0
        %865 = vmatpush1.msra.mxu0 %v356
        %866 = vmatprep.subr.mxu0 0.0
        %867 = vmatpush1.msra.mxu0 0.0
        %868 = vmatprep.subr.mxu0 0.0
        %869 = vmatpush1.msra.mxu0 0.0
        %870 = vmatprep.subr.mxu0 0.0
        %871 = vmatpush1.msra.mxu0 0.0
        %872 = vmatprep.subr.mxu0 0.0
        %873 = vmatpush1.msra.mxu0 0.0
        %874 = vmatprep.subr.mxu0 0.0
        %875 = vmatpush1.msra.mxu0 0.0
        %876 = vmatprep.subr.mxu0 0.0
        %877 = vmatpush1.msra.mxu0 0.0
        %878 = vmatprep.subr.mxu0 0.0
        %879 = vmatpush1.msra.mxu0 0.0
        %880 = vmatprep.subr.mxu0 0.0
        %881 = vmatpush1.msra.mxu0 0.0
        %882 = vmatprep.subr.mxu0 0.0
        %883 = vmatpush1.msra.mxu0 0.0
        %884 = vmatprep.subr.mxu0 0.0
        %885 = vmatpush1.msra.mxu0 0.0
        %886 = vmatprep.subr.mxu0 0.0
        %887 = vmatpush1.msra.mxu0 0.0
        %888 = vmatprep.subr.mxu0 0.0
        %889 = vmatpush1.msra.mxu0 0.0
        %890 = vmatprep.subr.mxu0 0.0
        %891 = vmatpush1.msra.mxu0 0.0
        %892 = vmatprep.subr.mxu0 0.0
        %893 = vmatpush1.msra.mxu0 0.0
        %894 = vmatprep.subr.mxu0 0.0
        %895 = vmatpush1.msra.mxu0 0.0
        %896 = vmatprep.subr.mxu0 0.0
        %897 = vmatpush1.msra.mxu0 0.0
        %898 = vmatprep.subr.mxu0 0.0
        %899 = vmatpush1.msra.mxu0 0.0
        %900 = vmatprep.subr.mxu0 0.0
        %901 = vmatpush1.msra.mxu0 0.0
        %902 = vmatprep.subr.mxu0 0.0
        %903 = vmatpush1.msra.mxu0 0.0
        %904 = vmatprep.subr.mxu0 0.0
        %905 = vmatpush1.msra.mxu0 0.0
        %906 = vmatprep.subr.mxu0 0.0
        %907 = vmatpush1.msra.mxu0 0.0
        %908 = vmatprep.subr.mxu0 0.0
        %909 = vmatpush1.msra.mxu0 0.0
        %910 = vmatprep.subr.mxu0 0.0
        %911 = vmatpush1.msra.mxu0 0.0
        %912 = vmatprep.subr.mxu0 0.0
        %913 = vmatpush1.msra.mxu0 0.0
        %914 = vmatprep.subr.mxu0 0.0
        %915 = vmatpush1.msra.mxu0 0.0
        %916 = vmatprep.subr.mxu0 0.0
        %917 = vmatpush1.msra.mxu0 0.0
        %918 = vmatprep.subr.mxu0 0.0
        %919 = vmatpush1.msra.mxu0 0.0
        %920 = vmatprep.subr.mxu0 0.0
        %921 = vmatpush1.msra.mxu0 0.0
        %922 = vmatprep.mubr.f32.mxu0 0.0
        %923 = vmatmul.mubr.f32.gmra.mrb[0].mxu0 %v856
        %v924 = vpop.f32.mrb[0].mxu0
        %v925 = vadd.f32 0.0, %v924
        %v926 = vpop.f32.mrb[0].mxu0
        %927 = vdwg.mxu0
        %v928 = vadd.f32 %v475, %v925
        %v929 = vtanh.pop %v928
        %v930 = vxor.u32 %v928, 2147483648
        %v931 = vmul.f32 %v930, 1.442695
        %v932 = vpow.pop %v931
        %v933 = vadd.f32 %v932, 1.0
        %v934 = vrcp.pop %v933
        %v935 = vmul.f32 1.0, %v934
        %v936 = vsel %vm575, %v929, %v935
        %v937 = vmul.f32 %v936, %v591
        %939 = vrot.lane.b32.xlu0 %v936, 64
        %v940 = vpop.permute.xlu0 %939
        %v942 = vmul.f32 %v936, %v940
        %944 = vrot.lane.b32.xlu0 %v942, 32
        %v945 = vpop.permute.xlu0 %944
        %v947 = vadd.f32 %v937, %v945
        %v948 = vtanh.pop %v947
        %950 = vrot.lane.b32.xlu0 %v948, 64
        %v951 = vpop.permute.xlu0 %950
        %v953 = vmul.f32 %v936, %v951
        %v954 = vtanh.pop %v953
        %v955 = vmul.f32 %v954, %v605
        %957 = vrot.lane.b32.xlu0 %v955, 32
        %v958 = vpop.permute.xlu0 %957
        %v960 = vsel %vm492, %v958, 0.0
        %961 = vadd.xlane.f32.xlu0 %v960
        %v962 = vpop.xlane.xlu0 %961
        %v963 = vadd.f32 %v962, %v852
        %s964 = sadd.s32 %s491, 2
        %v965 = vstv %s964
        %vm966 = vcmp.lt.s32.totalorder %v376, %v965
        %v967 = vsel %vm966, %v963, -1e+30
        %v968 = vsel %vm620, %v967, -inf
        %969 = vmax.xlane.f32.xlu0 %v968
        %v970 = vpop.xlane.xlu0 %969
        %vm971 = vcmp.eq.f32.partialorder %v967, %v970
        %v972 = vsel %vm971, %v376, 8
        %v973 = vsel %vm620, %v972, 2147483647
        %v974 = vand.u32 %v973, 65535
        %v975 = vshra.s32 %v973, 16
        %v976 = vcvt.s32.f32 %v974
        %v977 = vcvt.s32.f32 %v975
        %978 = vmin.xlane.f32.xlu0 %v977
        %v979 = vpop.xlane.xlu0 %978
        %vm980 = vcmp.eq.f32.partialorder %v977, %v979
        %v981 = vsel %vm980, %v976, inf
        %982 = vmin.xlane.f32.xlu0 %v981
        %v983 = vpop.xlane.xlu0 %982
        %v984 = vcvt.f32.s32 %v983
        %v985 = vcvt.f32.s32 %v979
        %v986 = vshll.u32 %v985, 16
        %v987 = vadd.s32 %v986, %v984
        %vm988 = vcmp.eq.s32.totalorder %v376, %v987
        %v989 = vsel %vm988, -1e+30, %v967
        %v990 = vsel %vm620, %v989, -inf
        %991 = vmax.xlane.f32.xlu0 %v990
        %v992 = vpop.xlane.xlu0 %991
        %vm993 = vcmp.eq.f32.partialorder %v989, %v992
        %v994 = vsel %vm993, %v376, 8
        %v995 = vsel %vm620, %v994, 2147483647
        %v996 = vand.u32 %v995, 65535
        %v997 = vshra.s32 %v995, 16
        %v998 = vcvt.s32.f32 %v996
        %v999 = vcvt.s32.f32 %v997
        %1000 = vmin.xlane.f32.xlu0 %v999
        %v1001 = vpop.xlane.xlu0 %1000
        %vm1002 = vcmp.eq.f32.partialorder %v999, %v1001
        %v1003 = vsel %vm1002, %v998, inf
        %1004 = vmin.xlane.f32.xlu0 %v1003
        %v1005 = vpop.xlane.xlu0 %1004
        %v1006 = vcvt.f32.s32 %v1005
        %v1007 = vcvt.f32.s32 %v1001
        %v1008 = vshll.u32 %v1007, 16
        %v1009 = vadd.s32 %v1008, %v1006
        %vm1010 = vcmp.eq.s32.totalorder %v376, %v1009
        %v1011 = vsel %vm1010, -1e+30, %v989
        %v1012 = vsel %vm620, %v1011, -inf
        %1013 = vmax.xlane.f32.xlu0 %v1012
        %v1014 = vpop.xlane.xlu0 %1013
        %vm1015 = vcmp.le.f32.partialorder %v1014, -5e+29
        %v1016 = vsel %vm1015, 0.0, %v1014
        %v1017 = vadd.f32 %v1016, 1e-07
        %v1018 = vsub.f32 %v963, %v1017
        %v1019 = vmax.f32 %v1018, 0.0
        %v1020 = vsel %vm966, %v1019, 0.0
        %v1021 = vsel %vm620, %v1020, 0.0
        %1022 = vadd.xlane.f32.xlu0 %v1021
        %v1023 = vpop.xlane.xlu0 %1022
        %v1024 = vadd.f32 %v1023, 1e-07
        %v1025 = vrcp.pop %v1024
        %v1026 = vmul.f32 %v1020, %v1025
        %v1027 = vsel %vm966, %v963, 0.0
        %p1028 = scmp.gt.s32.totalorder %s964, 3
        %s1029 = scalar_select %p1028, 1, 0
        %s1030 = scvt.s32.f32 %s1029
        %v1031 = vstv %s1030
        %v1032 = vmul.f32 %v1031, %v1026
        %s1033 = ssub.f32 1.0, %s1030
        %v1034 = vstv %s1033
        %v1035 = vmul.f32 %v1034, %v1027
        %v1036 = vadd.f32 %v1032, %v1035
        %1037 = vxpose.xlu0.b32.start [1/16] %v1036, 128
        %1038 = vxpose.xlu0.b32.cont [2/16] 0.0, 128
        %1039 = vxpose.xlu0.b32.cont [3/16] 0.0, 128
        %1040 = vxpose.xlu0.b32.cont [4/16] 0.0, 128
        %1041 = vxpose.xlu0.b32.cont [5/16] 0.0, 128
        %1042 = vxpose.xlu0.b32.cont [6/16] 0.0, 128
        %1043 = vxpose.xlu0.b32.cont [7/16] 0.0, 128
        %1044 = vxpose.xlu0.b32.cont [8/16] 0.0, 128
        %1045 = vxpose.xlu0.b32.cont [9/16] 0.0, 128
        %1046 = vxpose.xlu0.b32.cont [10/16] 0.0, 128
        %1047 = vxpose.xlu0.b32.cont [11/16] 0.0, 128
        %1048 = vxpose.xlu0.b32.cont [12/16] 0.0, 128
        %1049 = vxpose.xlu0.b32.cont [13/16] 0.0, 128
        %1050 = vxpose.xlu0.b32.cont [14/16] 0.0, 128
        %1051 = vxpose.xlu0.b32.cont [15/16] 0.0, 128
        %1052 = vxpose.xlu0.b32.end [16/16] 0.0, 128
        %v1053 = vpop.trf.xlu0
        %v1054 = vpop.trf.xlu0
        %v1055 = vpop.trf.xlu0
        %v1056 = vpop.trf.xlu0
        %v1057 = vpop.trf.xlu0
        %v1058 = vpop.trf.xlu0
        %v1059 = vpop.trf.xlu0
        %v1060 = vpop.trf.xlu0
        %v1061 = vpop.trf.xlu0
        %v1062 = vpop.trf.xlu0
        %v1063 = vpop.trf.xlu0
        %v1064 = vpop.trf.xlu0
        %v1065 = vpop.trf.xlu0
        %v1066 = vpop.trf.xlu0
        %v1067 = vpop.trf.xlu0
        %v1068 = vpop.trf.xlu0
        %v1069 = vlaneseq
        %v1070 = vshrl.u32 %v1069, 7
        %v1071 = vsub.s32 0, %v1070
        %v1072 = vrot.slane %v1053, %v1071
        %1074 = vbcast.lane.b32.xlu0 %v1072, 256
        %v1075 = vpop.permute.xlu0 %1074
        %v1076 = vlaneseq
        %v1077 = vshrl.u32 %v1076, 7
        %v1078 = vsub.s32 1, %v1077
        %v1079 = vrot.slane %v1053, %v1078
        %1081 = vbcast.lane.b32.xlu0 %v1079, 256
        %v1082 = vpop.permute.xlu0 %1081
        %v1083 = vlaneseq
        %v1084 = vshrl.u32 %v1083, 7
        %v1085 = vsub.s32 2, %v1084
        %v1086 = vrot.slane %v1053, %v1085
        %1088 = vbcast.lane.b32.xlu0 %v1086, 256
        %v1089 = vpop.permute.xlu0 %1088
        %v1090 = vlaneseq
        %v1091 = vshrl.u32 %v1090, 7
        %v1092 = vsub.s32 3, %v1091
        %v1093 = vrot.slane %v1053, %v1092
        %1095 = vbcast.lane.b32.xlu0 %v1093, 256
        %v1096 = vpop.permute.xlu0 %1095
        %v1097 = vld [vmem:[#allocation4] sm:$0xff]
        %v1098 = vld [vmem:[#allocation4 + $0x8] sm:$0xff]
        %v1099 = vld [vmem:[#allocation4 + $0x10] sm:$0xff]
        %v1100 = vld [vmem:[#allocation4 + $0x18] sm:$0xff]
        %v1101 = vmul.f32 %v1075, %v1097
        %v1102 = vmul.f32 %v1082, %v1098
        %v1103 = vmul.f32 %v1089, %v1099
        %v1104 = vmul.f32 %v1096, %v1100
        %v1105 = vsel %vm492, %v1101, 0.0
        %v1106 = vsel %vm492, %v1102, 0.0
        %v1107 = vadd.f32 %v1105, %v1106
        %v1108 = vsel %vm492, %v1103, 0.0
        %v1109 = vadd.f32 %v1107, %v1108
        %v1110 = vsel %vm492, %v1104, 0.0
        %v1111 = vadd.f32 %v1109, %v1110
        %1112 = vst.msk [vmem:[#allocation6] sm:$0xff] %vm492, %v1111
        %p1113 = scmp.ge.s32.totalorder %s616, 4
        // Predicated region
        $region69: #{tpu_custom_call.1} parent=55 // pred_check
          %p1114 = pneg %p1113
        $region70: #{tpu_custom_call.1} parent=55 // pred_check_branch
          %1116 = sbr.rel (%p1114) target = $region72
        $region71: #{tpu_custom_call.1} parent=55 // pred_region
          %v1117 = vld [vmem:[#allocation6] sm:$0xff]
          %v1118 = vlaneseq
          %v1119 = vshrl.u32 %v1118, 7
          %v1120 = vsub.s32 4, %v1119
          %v1121 = vrot.slane %v1053, %v1120
          %1123 = vbcast.lane.b32.xlu0 %v1121, 256
          %v1124 = vpop.permute.xlu0 %1123
          %v1125 = vlaneseq
          %v1126 = vshrl.u32 %v1125, 7
          %v1127 = vsub.s32 5, %v1126
          %v1128 = vrot.slane %v1053, %v1127
          %1130 = vbcast.lane.b32.xlu0 %v1128, 256
          %v1131 = vpop.permute.xlu0 %1130
          %v1132 = vlaneseq
          %v1133 = vshrl.u32 %v1132, 7
          %v1134 = vsub.s32 6, %v1133
          %v1135 = vrot.slane %v1053, %v1134
          %1137 = vbcast.lane.b32.xlu0 %v1135, 256
          %v1138 = vpop.permute.xlu0 %1137
          %v1139 = vlaneseq
          %v1140 = vshrl.u32 %v1139, 7
          %v1141 = vsub.s32 7, %v1140
          %v1142 = vrot.slane %v1053, %v1141
          %1144 = vbcast.lane.b32.xlu0 %v1142, 256
          %v1145 = vpop.permute.xlu0 %1144
          %s1146 = scalar_lea.vmem [#allocation4], 32
          %v1147 = vld [vmem:[%s1146] sm:$0xff]
          %v1148 = vld [vmem:[%s1146 + $0x8] sm:$0xff]
          %v1149 = vld [vmem:[%s1146 + $0x10] sm:$0xff]
          %v1150 = vld [vmem:[%s1146 + $0x18] sm:$0xff]
          %v1151 = vmul.f32 %v1124, %v1147
          %v1152 = vmul.f32 %v1131, %v1148
          %v1153 = vmul.f32 %v1138, %v1149
          %v1154 = vmul.f32 %v1145, %v1150
          %v1155 = vsel %vm492, %v1151, 0.0
          %v1156 = vsel %vm492, %v1152, 0.0
          %v1157 = vadd.f32 %v1155, %v1156
          %v1158 = vsel %vm492, %v1153, 0.0
          %v1159 = vadd.f32 %v1157, %v1158
          %v1160 = vsel %vm492, %v1154, 0.0
          %v1161 = vadd.f32 %v1159, %v1160
          %v1162 = vadd.f32 %v1117, %v1161
          %1163 = vst.msk [vmem:[#allocation6] sm:$0xff] %vm492, %v1162
        $region72: #{tpu_custom_call.1} parent=55 // pred_fallthru
          _
        %v1164 = vld [vmem:[#allocation6] sm:$0xff]
        %1166 = vrot.lane.b32.xlu0 %v1164, 96
        %v1167 = vpop.permute.xlu0 %1166
        %v1169 = vadd.f32 %v953, %v1167
        %p1170 = scmp.lt.s32.totalorder %s964, 8
        // Predicated region
        $region73: #{tpu_custom_call.1} parent=55 // pred_check
          %p1171 = pneg %p1170
        $region74: #{tpu_custom_call.1} parent=55 // pred_check_branch
          %1173 = sbr.rel (%p1171) target = $region76
        $region75: #{tpu_custom_call.1} parent=55 // pred_region
          %1175 = vrot.lane.b32.xlu0 %v1169, 32
          %v1176 = vpop.permute.xlu0 %1175
          %s1178 = smul.u32 %s964, 8
          %s1179 = scalar_lea.vmem [#allocation4], %s1178
          %1180 = vst.msk [vmem:[%s1179] sm:$0xff] %vm492, %v1176
        $region76: #{tpu_custom_call.1} parent=55 // pred_fallthru
          _
        %v1181 = vtanh.pop %v1169
        %v1182 = vmul.f32 %v1181, %v841
        %1184 = vrot.lane.b32.xlu0 %v1182, 32
        %v1185 = vpop.permute.xlu0 %1184
        %v1187 = vsel %vm492, %v1185, 0.0
        %1188 = vadd.xlane.f32.xlu0 %v1187
        %v1189 = vpop.xlane.xlu0 %1188
        %vm1190 = vcmp.eq.s32.totalorder %v376, %v965
        %v1191 = vsel %vm1190, %v1189, %v852
        %1193 = vrot.lane.b32.xlu0 %v1169, 32
        %v1194 = vpop.permute.xlu0 %1193
        %v1195 = vsel %vm492, %v1194, 0
        %1197 = vmatprep.subr.mxu0 0.0
        %1198 = vmatpush1.msra.mxu0 %v353
        %1199 = vmatprep.subr.mxu0 0.0
        %1200 = vmatpush1.msra.mxu0 %v354
        %1201 = vmatprep.subr.mxu0 0.0
        %1202 = vmatpush1.msra.mxu0 %v355
        %1203 = vmatprep.subr.mxu0 0.0
        %1204 = vmatpush1.msra.mxu0 %v356
        %1205 = vmatprep.subr.mxu0 0.0
        %1206 = vmatpush1.msra.mxu0 0.0
        %1207 = vmatprep.subr.mxu0 0.0
        %1208 = vmatpush1.msra.mxu0 0.0
        %1209 = vmatprep.subr.mxu0 0.0
        %1210 = vmatpush1.msra.mxu0 0.0
        %1211 = vmatprep.subr.mxu0 0.0
        %1212 = vmatpush1.msra.mxu0 0.0
        %1213 = vmatprep.subr.mxu0 0.0
        %1214 = vmatpush1.msra.mxu0 0.0
        %1215 = vmatprep.subr.mxu0 0.0
        %1216 = vmatpush1.msra.mxu0 0.0
        %1217 = vmatprep.subr.mxu0 0.0
        %1218 = vmatpush1.msra.mxu0 0.0
        %1219 = vmatprep.subr.mxu0 0.0
        %1220 = vmatpush1.msra.mxu0 0.0
        %1221 = vmatprep.subr.mxu0 0.0
        %1222 = vmatpush1.msra.mxu0 0.0
        %1223 = vmatprep.subr.mxu0 0.0
        %1224 = vmatpush1.msra.mxu0 0.0
        %1225 = vmatprep.subr.mxu0 0.0
        %1226 = vmatpush1.msra.mxu0 0.0
        %1227 = vmatprep.subr.mxu0 0.0
        %1228 = vmatpush1.msra.mxu0 0.0
        %1229 = vmatprep.subr.mxu0 0.0
        %1230 = vmatpush1.msra.mxu0 0.0
        %1231 = vmatprep.subr.mxu0 0.0
        %1232 = vmatpush1.msra.mxu0 0.0
        %1233 = vmatprep.subr.mxu0 0.0
        %1234 = vmatpush1.msra.mxu0 0.0
        %1235 = vmatprep.subr.mxu0 0.0
        %1236 = vmatpush1.msra.mxu0 0.0
        %1237 = vmatprep.subr.mxu0 0.0
        %1238 = vmatpush1.msra.mxu0 0.0
        %1239 = vmatprep.subr.mxu0 0.0
        %1240 = vmatpush1.msra.mxu0 0.0
        %1241 = vmatprep.subr.mxu0 0.0
        %1242 = vmatpush1.msra.mxu0 0.0
        %1243 = vmatprep.subr.mxu0 0.0
        %1244 = vmatpush1.msra.mxu0 0.0
        %1245 = vmatprep.subr.mxu0 0.0
        %1246 = vmatpush1.msra.mxu0 0.0
        %1247 = vmatprep.subr.mxu0 0.0
        %1248 = vmatpush1.msra.mxu0 0.0
        %1249 = vmatprep.subr.mxu0 0.0
        %1250 = vmatpush1.msra.mxu0 0.0
        %1251 = vmatprep.subr.mxu0 0.0
        %1252 = vmatpush1.msra.mxu0 0.0
        %1253 = vmatprep.subr.mxu0 0.0
        %1254 = vmatpush1.msra.mxu0 0.0
        %1255 = vmatprep.subr.mxu0 0.0
        %1256 = vmatpush1.msra.mxu0 0.0
        %1257 = vmatprep.subr.mxu0 0.0
        %1258 = vmatpush1.msra.mxu0 0.0
        %1259 = vmatprep.subr.mxu0 0.0
        %1260 = vmatpush1.msra.mxu0 0.0
        %1261 = vmatprep.mubr.f32.mxu0 0.0
        %1262 = vmatmul.mubr.f32.gmra.mrb[0].mxu0 %v1195
        %v1263 = vpop.f32.mrb[0].mxu0
        %v1264 = vadd.f32 0.0, %v1263
        %v1265 = vpop.f32.mrb[0].mxu0
        %1266 = vdwg.mxu0
        %v1267 = vadd.f32 %v480, %v1264
        %v1268 = vtanh.pop %v1267
        %v1269 = vxor.u32 %v1267, 2147483648
        %v1270 = vmul.f32 %v1269, 1.442695
        %v1271 = vpow.pop %v1270
        %v1272 = vadd.f32 %v1271, 1.0
        %v1273 = vrcp.pop %v1272
        %v1274 = vmul.f32 1.0, %v1273
        %v1275 = vsel %vm575, %v1268, %v1274
        %v1276 = vmul.f32 %v1275, %v947
        %1278 = vrot.lane.b32.xlu0 %v1275, 64
        %v1279 = vpop.permute.xlu0 %1278
        %v1281 = vmul.f32 %v1275, %v1279
        %1283 = vrot.lane.b32.xlu0 %v1281, 32
        %v1284 = vpop.permute.xlu0 %1283
        %v1286 = vadd.f32 %v1276, %v1284
        %v1287 = vtanh.pop %v1286
        %1289 = vrot.lane.b32.xlu0 %v1287, 64
        %v1290 = vpop.permute.xlu0 %1289
        %v1292 = vmul.f32 %v1275, %v1290
        %v1293 = vtanh.pop %v1292
        %v1294 = vmul.f32 %v1293, %v605
        %1296 = vrot.lane.b32.xlu0 %v1294, 32
        %v1297 = vpop.permute.xlu0 %1296
        %v1299 = vsel %vm492, %v1297, 0.0
        %1300 = vadd.xlane.f32.xlu0 %v1299
        %v1301 = vpop.xlane.xlu0 %1300
        %v1302 = vadd.f32 %v1301, %v1191
        %s1303 = sadd.s32 %s491, 3
        %v1304 = vstv %s1303
        %vm1305 = vcmp.lt.s32.totalorder %v376, %v1304
        %v1306 = vsel %vm1305, %v1302, -1e+30
        %v1307 = vsel %vm620, %v1306, -inf
        %1308 = vmax.xlane.f32.xlu0 %v1307
        %v1309 = vpop.xlane.xlu0 %1308
        %vm1310 = vcmp.eq.f32.partialorder %v1306, %v1309
        %v1311 = vsel %vm1310, %v376, 8
        %v1312 = vsel %vm620, %v1311, 2147483647
        %v1313 = vand.u32 %v1312, 65535
        %v1314 = vshra.s32 %v1312, 16
        %v1315 = vcvt.s32.f32 %v1313
        %v1316 = vcvt.s32.f32 %v1314
        %1317 = vmin.xlane.f32.xlu0 %v1316
        %v1318 = vpop.xlane.xlu0 %1317
        %vm1319 = vcmp.eq.f32.partialorder %v1316, %v1318
        %v1320 = vsel %vm1319, %v1315, inf
        %1321 = vmin.xlane.f32.xlu0 %v1320
        %v1322 = vpop.xlane.xlu0 %1321
        %v1323 = vcvt.f32.s32 %v1322
        %v1324 = vcvt.f32.s32 %v1318
        %v1325 = vshll.u32 %v1324, 16
        %v1326 = vadd.s32 %v1325, %v1323
        %vm1327 = vcmp.eq.s32.totalorder %v376, %v1326
        %v1328 = vsel %vm1327, -1e+30, %v1306
        %v1329 = vsel %vm620, %v1328, -inf
        %1330 = vmax.xlane.f32.xlu0 %v1329
        %v1331 = vpop.xlane.xlu0 %1330
        %vm1332 = vcmp.eq.f32.partialorder %v1328, %v1331
        %v1333 = vsel %vm1332, %v376, 8
        %v1334 = vsel %vm620, %v1333, 2147483647
        %v1335 = vand.u32 %v1334, 65535
        %v1336 = vshra.s32 %v1334, 16
        %v1337 = vcvt.s32.f32 %v1335
        %v1338 = vcvt.s32.f32 %v1336
        %1339 = vmin.xlane.f32.xlu0 %v1338
        %v1340 = vpop.xlane.xlu0 %1339
        %vm1341 = vcmp.eq.f32.partialorder %v1338, %v1340
        %v1342 = vsel %vm1341, %v1337, inf
        %1343 = vmin.xlane.f32.xlu0 %v1342
        %v1344 = vpop.xlane.xlu0 %1343
        %v1345 = vcvt.f32.s32 %v1344
        %v1346 = vcvt.f32.s32 %v1340
        %v1347 = vshll.u32 %v1346, 16
        %v1348 = vadd.s32 %v1347, %v1345
        %vm1349 = vcmp.eq.s32.totalorder %v376, %v1348
        %v1350 = vsel %vm1349, -1e+30, %v1328
        %v1351 = vsel %vm620, %v1350, -inf
        %1352 = vmax.xlane.f32.xlu0 %v1351
        %v1353 = vpop.xlane.xlu0 %1352
        %vm1354 = vcmp.le.f32.partialorder %v1353, -5e+29
        %v1355 = vsel %vm1354, 0.0, %v1353
        %v1356 = vadd.f32 %v1355, 1e-07
        %v1357 = vsub.f32 %v1302, %v1356
        %v1358 = vmax.f32 %v1357, 0.0
        %v1359 = vsel %vm1305, %v1358, 0.0
        %v1360 = vsel %vm620, %v1359, 0.0
        %1361 = vadd.xlane.f32.xlu0 %v1360
        %v1362 = vpop.xlane.xlu0 %1361
        %v1363 = vadd.f32 %v1362, 1e-07
        %v1364 = vrcp.pop %v1363
        %v1365 = vmul.f32 %v1359, %v1364
        %v1366 = vsel %vm1305, %v1302, 0.0
        %p1367 = scmp.gt.s32.totalorder %s1303, 3
        %s1368 = scalar_select %p1367, 1, 0
        %s1369 = scvt.s32.f32 %s1368
        %v1370 = vstv %s1369
        %v1371 = vmul.f32 %v1370, %v1365
        %s1372 = ssub.f32 1.0, %s1369
        %v1373 = vstv %s1372
        %v1374 = vmul.f32 %v1373, %v1366
        %v1375 = vadd.f32 %v1371, %v1374
        %1376 = vxpose.xlu0.b32.start [1/16] %v1375, 128
        %1377 = vxpose.xlu0.b32.cont [2/16] 0.0, 128
        %1378 = vxpose.xlu0.b32.cont [3/16] 0.0, 128
        %1379 = vxpose.xlu0.b32.cont [4/16] 0.0, 128
        %1380 = vxpose.xlu0.b32.cont [5/16] 0.0, 128
        %1381 = vxpose.xlu0.b32.cont [6/16] 0.0, 128
        %1382 = vxpose.xlu0.b32.cont [7/16] 0.0, 128
        %1383 = vxpose.xlu0.b32.cont [8/16] 0.0, 128
        %1384 = vxpose.xlu0.b32.cont [9/16] 0.0, 128
        %1385 = vxpose.xlu0.b32.cont [10/16] 0.0, 128
        %1386 = vxpose.xlu0.b32.cont [11/16] 0.0, 128
        %1387 = vxpose.xlu0.b32.cont [12/16] 0.0, 128
        %1388 = vxpose.xlu0.b32.cont [13/16] 0.0, 128
        %1389 = vxpose.xlu0.b32.cont [14/16] 0.0, 128
        %1390 = vxpose.xlu0.b32.cont [15/16] 0.0, 128
        %1391 = vxpose.xlu0.b32.end [16/16] 0.0, 128
        %v1392 = vpop.trf.xlu0
        %v1393 = vpop.trf.xlu0
        %v1394 = vpop.trf.xlu0
        %v1395 = vpop.trf.xlu0
        %v1396 = vpop.trf.xlu0
        %v1397 = vpop.trf.xlu0
        %v1398 = vpop.trf.xlu0
        %v1399 = vpop.trf.xlu0
        %v1400 = vpop.trf.xlu0
        %v1401 = vpop.trf.xlu0
        %v1402 = vpop.trf.xlu0
        %v1403 = vpop.trf.xlu0
        %v1404 = vpop.trf.xlu0
        %v1405 = vpop.trf.xlu0
        %v1406 = vpop.trf.xlu0
        %v1407 = vpop.trf.xlu0
        %v1408 = vlaneseq
        %v1409 = vshrl.u32 %v1408, 7
        %v1410 = vsub.s32 0, %v1409
        %v1411 = vrot.slane %v1392, %v1410
        %1413 = vbcast.lane.b32.xlu0 %v1411, 256
        %v1414 = vpop.permute.xlu0 %1413
        %v1415 = vlaneseq
        %v1416 = vshrl.u32 %v1415, 7
        %v1417 = vsub.s32 1, %v1416
        %v1418 = vrot.slane %v1392, %v1417
        %1420 = vbcast.lane.b32.xlu0 %v1418, 256
        %v1421 = vpop.permute.xlu0 %1420
        %v1422 = vlaneseq
        %v1423 = vshrl.u32 %v1422, 7
        %v1424 = vsub.s32 2, %v1423
        %v1425 = vrot.slane %v1392, %v1424
        %1427 = vbcast.lane.b32.xlu0 %v1425, 256
        %v1428 = vpop.permute.xlu0 %1427
        %v1429 = vlaneseq
        %v1430 = vshrl.u32 %v1429, 7
        %v1431 = vsub.s32 3, %v1430
        %v1432 = vrot.slane %v1392, %v1431
        %1434 = vbcast.lane.b32.xlu0 %v1432, 256
        %v1435 = vpop.permute.xlu0 %1434
        %v1436 = vld [vmem:[#allocation4] sm:$0xff]
        %v1437 = vld [vmem:[#allocation4 + $0x8] sm:$0xff]
        %v1438 = vld [vmem:[#allocation4 + $0x10] sm:$0xff]
        %v1439 = vld [vmem:[#allocation4 + $0x18] sm:$0xff]
        %v1440 = vmul.f32 %v1414, %v1436
        %v1441 = vmul.f32 %v1421, %v1437
        %v1442 = vmul.f32 %v1428, %v1438
        %v1443 = vmul.f32 %v1435, %v1439
        %v1444 = vsel %vm492, %v1440, 0.0
        %v1445 = vsel %vm492, %v1441, 0.0
        %v1446 = vadd.f32 %v1444, %v1445
        %v1447 = vsel %vm492, %v1442, 0.0
        %v1448 = vadd.f32 %v1446, %v1447
        %v1449 = vsel %vm492, %v1443, 0.0
        %v1450 = vadd.f32 %v1448, %v1449
        %1451 = vst.msk [vmem:[#allocation6] sm:$0xff] %vm492, %v1450
        %p1452 = scmp.ge.s32.totalorder %s964, 4
        // Predicated region
        $region77: #{tpu_custom_call.1} parent=55 // pred_check
          %p1453 = pneg %p1452
        $region78: #{tpu_custom_call.1} parent=55 // pred_check_branch
          %1455 = sbr.rel (%p1453) target = $region80
        $region79: #{tpu_custom_call.1} parent=55 // pred_region
          %v1456 = vld [vmem:[#allocation6] sm:$0xff]
          %v1457 = vlaneseq
          %v1458 = vshrl.u32 %v1457, 7
          %v1459 = vsub.s32 4, %v1458
          %v1460 = vrot.slane %v1392, %v1459
          %1462 = vbcast.lane.b32.xlu0 %v1460, 256
          %v1463 = vpop.permute.xlu0 %1462
          %v1464 = vlaneseq
          %v1465 = vshrl.u32 %v1464, 7
          %v1466 = vsub.s32 5, %v1465
          %v1467 = vrot.slane %v1392, %v1466
          %1469 = vbcast.lane.b32.xlu0 %v1467, 256
          %v1470 = vpop.permute.xlu0 %1469
          %v1471 = vlaneseq
          %v1472 = vshrl.u32 %v1471, 7
          %v1473 = vsub.s32 6, %v1472
          %v1474 = vrot.slane %v1392, %v1473
          %1476 = vbcast.lane.b32.xlu0 %v1474, 256
          %v1477 = vpop.permute.xlu0 %1476
          %v1478 = vlaneseq
          %v1479 = vshrl.u32 %v1478, 7
          %v1480 = vsub.s32 7, %v1479
          %v1481 = vrot.slane %v1392, %v1480
          %1483 = vbcast.lane.b32.xlu0 %v1481, 256
          %v1484 = vpop.permute.xlu0 %1483
          %s1485 = scalar_lea.vmem [#allocation4], 32
          %v1486 = vld [vmem:[%s1485] sm:$0xff]
          %v1487 = vld [vmem:[%s1485 + $0x8] sm:$0xff]
          %v1488 = vld [vmem:[%s1485 + $0x10] sm:$0xff]
          %v1489 = vld [vmem:[%s1485 + $0x18] sm:$0xff]
          %v1490 = vmul.f32 %v1463, %v1486
          %v1491 = vmul.f32 %v1470, %v1487
          %v1492 = vmul.f32 %v1477, %v1488
          %v1493 = vmul.f32 %v1484, %v1489
          %v1494 = vsel %vm492, %v1490, 0.0
          %v1495 = vsel %vm492, %v1491, 0.0
          %v1496 = vadd.f32 %v1494, %v1495
          %v1497 = vsel %vm492, %v1492, 0.0
          %v1498 = vadd.f32 %v1496, %v1497
          %v1499 = vsel %vm492, %v1493, 0.0
          %v1500 = vadd.f32 %v1498, %v1499
          %v1501 = vadd.f32 %v1456, %v1500
          %1502 = vst.msk [vmem:[#allocation6] sm:$0xff] %vm492, %v1501
        $region80: #{tpu_custom_call.1} parent=55 // pred_fallthru
          _
        %v1503 = vld [vmem:[#allocation6] sm:$0xff]
        %1505 = vrot.lane.b32.xlu0 %v1503, 96
        %v1506 = vpop.permute.xlu0 %1505
        %v1508 = vadd.f32 %v1292, %v1506
        %p1509 = scmp.lt.s32.totalorder %s1303, 8
        // Predicated region
        $region81: #{tpu_custom_call.1} parent=55 // pred_check
          %p1510 = pneg %p1509
        $region82: #{tpu_custom_call.1} parent=55 // pred_check_branch
          %1512 = sbr.rel (%p1510) target = $region84
        $region83: #{tpu_custom_call.1} parent=55 // pred_region
          %1514 = vrot.lane.b32.xlu0 %v1508, 32
          %v1515 = vpop.permute.xlu0 %1514
          %s1517 = smul.u32 %s1303, 8
          %s1518 = scalar_lea.vmem [#allocation4], %s1517
          %1519 = vst.msk [vmem:[%s1518] sm:$0xff] %vm492, %v1515
        $region84: #{tpu_custom_call.1} parent=55 // pred_fallthru
          _
        %v1520 = vtanh.pop %v1508
        %v1521 = vmul.f32 %v1520, %v841
        %1523 = vrot.lane.b32.xlu0 %v1521, 32
        %v1524 = vpop.permute.xlu0 %1523
        %v1526 = vsel %vm492, %v1524, 0.0
        %1527 = vadd.xlane.f32.xlu0 %v1526
        %v1528 = vpop.xlane.xlu0 %1527
        %vm1529 = vcmp.eq.s32.totalorder %v376, %v1304
        %v1530 = vsel %vm1529, %v1528, %v1191
        %1532 = vrot.lane.b32.xlu0 %v1508, 32
        %v1533 = vpop.permute.xlu0 %1532
        %v1534 = vsel %vm492, %v1533, 0
        %1536 = vmatprep.subr.mxu0 0.0
        %1537 = vmatpush1.msra.mxu0 %v353
        %1538 = vmatprep.subr.mxu0 0.0
        %1539 = vmatpush1.msra.mxu0 %v354
        %1540 = vmatprep.subr.mxu0 0.0
        %1541 = vmatpush1.msra.mxu0 %v355
        %1542 = vmatprep.subr.mxu0 0.0
        %1543 = vmatpush1.msra.mxu0 %v356
        %1544 = vmatprep.subr.mxu0 0.0
        %1545 = vmatpush1.msra.mxu0 0.0
        %1546 = vmatprep.subr.mxu0 0.0
        %1547 = vmatpush1.msra.mxu0 0.0
        %1548 = vmatprep.subr.mxu0 0.0
        %1549 = vmatpush1.msra.mxu0 0.0
        %1550 = vmatprep.subr.mxu0 0.0
        %1551 = vmatpush1.msra.mxu0 0.0
        %1552 = vmatprep.subr.mxu0 0.0
        %1553 = vmatpush1.msra.mxu0 0.0
        %1554 = vmatprep.subr.mxu0 0.0
        %1555 = vmatpush1.msra.mxu0 0.0
        %1556 = vmatprep.subr.mxu0 0.0
        %1557 = vmatpush1.msra.mxu0 0.0
        %1558 = vmatprep.subr.mxu0 0.0
        %1559 = vmatpush1.msra.mxu0 0.0
        %1560 = vmatprep.subr.mxu0 0.0
        %1561 = vmatpush1.msra.mxu0 0.0
        %1562 = vmatprep.subr.mxu0 0.0
        %1563 = vmatpush1.msra.mxu0 0.0
        %1564 = vmatprep.subr.mxu0 0.0
        %1565 = vmatpush1.msra.mxu0 0.0
        %1566 = vmatprep.subr.mxu0 0.0
        %1567 = vmatpush1.msra.mxu0 0.0
        %1568 = vmatprep.subr.mxu0 0.0
        %1569 = vmatpush1.msra.mxu0 0.0
        %1570 = vmatprep.subr.mxu0 0.0
        %1571 = vmatpush1.msra.mxu0 0.0
        %1572 = vmatprep.subr.mxu0 0.0
        %1573 = vmatpush1.msra.mxu0 0.0
        %1574 = vmatprep.subr.mxu0 0.0
        %1575 = vmatpush1.msra.mxu0 0.0
        %1576 = vmatprep.subr.mxu0 0.0
        %1577 = vmatpush1.msra.mxu0 0.0
        %1578 = vmatprep.subr.mxu0 0.0
        %1579 = vmatpush1.msra.mxu0 0.0
        %1580 = vmatprep.subr.mxu0 0.0
        %1581 = vmatpush1.msra.mxu0 0.0
        %1582 = vmatprep.subr.mxu0 0.0
        %1583 = vmatpush1.msra.mxu0 0.0
        %1584 = vmatprep.subr.mxu0 0.0
        %1585 = vmatpush1.msra.mxu0 0.0
        %1586 = vmatprep.subr.mxu0 0.0
        %1587 = vmatpush1.msra.mxu0 0.0
        %1588 = vmatprep.subr.mxu0 0.0
        %1589 = vmatpush1.msra.mxu0 0.0
        %1590 = vmatprep.subr.mxu0 0.0
        %1591 = vmatpush1.msra.mxu0 0.0
        %1592 = vmatprep.subr.mxu0 0.0
        %1593 = vmatpush1.msra.mxu0 0.0
        %1594 = vmatprep.subr.mxu0 0.0
        %1595 = vmatpush1.msra.mxu0 0.0
        %1596 = vmatprep.subr.mxu0 0.0
        %1597 = vmatpush1.msra.mxu0 0.0
        %1598 = vmatprep.subr.mxu0 0.0
        %1599 = vmatpush1.msra.mxu0 0.0
        %1600 = vmatprep.mubr.f32.mxu0 0.0
        %1601 = vmatmul.mubr.f32.gmra.mrb[0].mxu0 %v1534
        %v1602 = vpop.f32.mrb[0].mxu0
        %v1603 = vadd.f32 0.0, %v1602
        %v1604 = vpop.f32.mrb[0].mxu0
        %1605 = vdwg.mxu0
        %v1606 = vadd.f32 %v485, %v1603
        %v1607 = vtanh.pop %v1606
        %v1608 = vxor.u32 %v1606, 2147483648
        %v1609 = vmul.f32 %v1608, 1.442695
        %v1610 = vpow.pop %v1609
        %v1611 = vadd.f32 %v1610, 1.0
        %v1612 = vrcp.pop %v1611
        %v1613 = vmul.f32 1.0, %v1612
        %v1614 = vsel %vm575, %v1607, %v1613
        %v1615 = vmul.f32 %v1614, %v1286
        %1617 = vrot.lane.b32.xlu0 %v1614, 64
        %v1618 = vpop.permute.xlu0 %1617
        %v1620 = vmul.f32 %v1614, %v1618
        %1622 = vrot.lane.b32.xlu0 %v1620, 32
        %v1623 = vpop.permute.xlu0 %1622
        %v1625 = vadd.f32 %v1615, %v1623
        %v1626 = vtanh.pop %v1625
        %1628 = vrot.lane.b32.xlu0 %v1626, 64
        %v1629 = vpop.permute.xlu0 %1628
        %v1631 = vmul.f32 %v1614, %v1629
        %v1632 = vtanh.pop %v1631
        %v1633 = vmul.f32 %v1632, %v605
        %1635 = vrot.lane.b32.xlu0 %v1633, 32
        %v1636 = vpop.permute.xlu0 %1635
        %v1638 = vsel %vm492, %v1636, 0.0
        %1639 = vadd.xlane.f32.xlu0 %v1638
        %v1640 = vpop.xlane.xlu0 %1639
        %v1641 = vadd.f32 %v1640, %v1530
        %s1642 = sadd.s32 %s491, 4
        %v1643 = vstv %s1642
        %vm1644 = vcmp.lt.s32.totalorder %v376, %v1643
        %v1645 = vsel %vm1644, %v1641, -1e+30
        %v1646 = vsel %vm620, %v1645, -inf
        %1647 = vmax.xlane.f32.xlu0 %v1646
        %v1648 = vpop.xlane.xlu0 %1647
        %vm1649 = vcmp.eq.f32.partialorder %v1645, %v1648
        %v1650 = vsel %vm1649, %v376, 8
        %v1651 = vsel %vm620, %v1650, 2147483647
        %v1652 = vand.u32 %v1651, 65535
        %v1653 = vshra.s32 %v1651, 16
        %v1654 = vcvt.s32.f32 %v1652
        %v1655 = vcvt.s32.f32 %v1653
        %1656 = vmin.xlane.f32.xlu0 %v1655
        %v1657 = vpop.xlane.xlu0 %1656
        %vm1658 = vcmp.eq.f32.partialorder %v1655, %v1657
        %v1659 = vsel %vm1658, %v1654, inf
        %1660 = vmin.xlane.f32.xlu0 %v1659
        %v1661 = vpop.xlane.xlu0 %1660
        %v1662 = vcvt.f32.s32 %v1661
        %v1663 = vcvt.f32.s32 %v1657
        %v1664 = vshll.u32 %v1663, 16
        %v1665 = vadd.s32 %v1664, %v1662
        %vm1666 = vcmp.eq.s32.totalorder %v376, %v1665
        %v1667 = vsel %vm1666, -1e+30, %v1645
        %v1668 = vsel %vm620, %v1667, -inf
        %1669 = vmax.xlane.f32.xlu0 %v1668
        %v1670 = vpop.xlane.xlu0 %1669
        %vm1671 = vcmp.eq.f32.partialorder %v1667, %v1670
        %v1672 = vsel %vm1671, %v376, 8
        %v1673 = vsel %vm620, %v1672, 2147483647
        %v1674 = vand.u32 %v1673, 65535
        %v1675 = vshra.s32 %v1673, 16
        %v1676 = vcvt.s32.f32 %v1674
        %v1677 = vcvt.s32.f32 %v1675
        %1678 = vmin.xlane.f32.xlu0 %v1677
        %v1679 = vpop.xlane.xlu0 %1678
        %vm1680 = vcmp.eq.f32.partialorder %v1677, %v1679
        %v1681 = vsel %vm1680, %v1676, inf
        %1682 = vmin.xlane.f32.xlu0 %v1681
        %v1683 = vpop.xlane.xlu0 %1682
        %v1684 = vcvt.f32.s32 %v1683
        %v1685 = vcvt.f32.s32 %v1679
        %v1686 = vshll.u32 %v1685, 16
        %v1687 = vadd.s32 %v1686, %v1684
        %vm1688 = vcmp.eq.s32.totalorder %v376, %v1687
        %v1689 = vsel %vm1688, -1e+30, %v1667
        %v1690 = vsel %vm620, %v1689, -inf
        %1691 = vmax.xlane.f32.xlu0 %v1690
        %v1692 = vpop.xlane.xlu0 %1691
        %vm1693 = vcmp.le.f32.partialorder %v1692, -5e+29
        %v1694 = vsel %vm1693, 0.0, %v1692
        %v1695 = vadd.f32 %v1694, 1e-07
        %v1696 = vsub.f32 %v1641, %v1695
        %v1697 = vmax.f32 %v1696, 0.0
        %v1698 = vsel %vm1644, %v1697, 0.0
        %v1699 = vsel %vm620, %v1698, 0.0
        %1700 = vadd.xlane.f32.xlu0 %v1699
        %v1701 = vpop.xlane.xlu0 %1700
        %v1702 = vadd.f32 %v1701, 1e-07
        %v1703 = vrcp.pop %v1702
        %v1704 = vmul.f32 %v1698, %v1703
        %v1705 = vsel %vm1644, %v1641, 0.0
        %p1706 = scmp.gt.s32.totalorder %s1642, 3
        %s1707 = scalar_select %p1706, 1, 0
        %s1708 = scvt.s32.f32 %s1707
        %v1709 = vstv %s1708
        %v1710 = vmul.f32 %v1709, %v1704
        %s1711 = ssub.f32 1.0, %s1708
        %v1712 = vstv %s1711
        %v1713 = vmul.f32 %v1712, %v1705
        %v1714 = vadd.f32 %v1710, %v1713
        %1715 = vxpose.xlu0.b32.start [1/16] %v1714, 128
        %1716 = vxpose.xlu0.b32.cont [2/16] 0.0, 128
        %1717 = vxpose.xlu0.b32.cont [3/16] 0.0, 128
        %1718 = vxpose.xlu0.b32.cont [4/16] 0.0, 128
        %1719 = vxpose.xlu0.b32.cont [5/16] 0.0, 128
        %1720 = vxpose.xlu0.b32.cont [6/16] 0.0, 128
        %1721 = vxpose.xlu0.b32.cont [7/16] 0.0, 128
        %1722 = vxpose.xlu0.b32.cont [8/16] 0.0, 128
        %1723 = vxpose.xlu0.b32.cont [9/16] 0.0, 128
        %1724 = vxpose.xlu0.b32.cont [10/16] 0.0, 128
        %1725 = vxpose.xlu0.b32.cont [11/16] 0.0, 128
        %1726 = vxpose.xlu0.b32.cont [12/16] 0.0, 128
        %1727 = vxpose.xlu0.b32.cont [13/16] 0.0, 128
        %1728 = vxpose.xlu0.b32.cont [14/16] 0.0, 128
        %1729 = vxpose.xlu0.b32.cont [15/16] 0.0, 128
        %1730 = vxpose.xlu0.b32.end [16/16] 0.0, 128
        %v1731 = vpop.trf.xlu0
        %v1732 = vpop.trf.xlu0
        %v1733 = vpop.trf.xlu0
        %v1734 = vpop.trf.xlu0
        %v1735 = vpop.trf.xlu0
        %v1736 = vpop.trf.xlu0
        %v1737 = vpop.trf.xlu0
        %v1738 = vpop.trf.xlu0
        %v1739 = vpop.trf.xlu0
        %v1740 = vpop.trf.xlu0
        %v1741 = vpop.trf.xlu0
        %v1742 = vpop.trf.xlu0
        %v1743 = vpop.trf.xlu0
        %v1744 = vpop.trf.xlu0
        %v1745 = vpop.trf.xlu0
        %v1746 = vpop.trf.xlu0
        %v1747 = vlaneseq
        %v1748 = vshrl.u32 %v1747, 7
        %v1749 = vsub.s32 0, %v1748
        %v1750 = vrot.slane %v1731, %v1749
        %1752 = vbcast.lane.b32.xlu0 %v1750, 256
        %v1753 = vpop.permute.xlu0 %1752
        %v1754 = vlaneseq
        %v1755 = vshrl.u32 %v1754, 7
        %v1756 = vsub.s32 1, %v1755
        %v1757 = vrot.slane %v1731, %v1756
        %1759 = vbcast.lane.b32.xlu0 %v1757, 256
        %v1760 = vpop.permute.xlu0 %1759
        %v1761 = vlaneseq
        %v1762 = vshrl.u32 %v1761, 7
        %v1763 = vsub.s32 2, %v1762
        %v1764 = vrot.slane %v1731, %v1763
        %1766 = vbcast.lane.b32.xlu0 %v1764, 256
        %v1767 = vpop.permute.xlu0 %1766
        %v1768 = vlaneseq
        %v1769 = vshrl.u32 %v1768, 7
        %v1770 = vsub.s32 3, %v1769
        %v1771 = vrot.slane %v1731, %v1770
        %1773 = vbcast.lane.b32.xlu0 %v1771, 256
        %v1774 = vpop.permute.xlu0 %1773
        %v1775 = vld [vmem:[#allocation4] sm:$0xff]
        %v1776 = vld [vmem:[#allocation4 + $0x8] sm:$0xff]
        %v1777 = vld [vmem:[#allocation4 + $0x10] sm:$0xff]
        %v1778 = vld [vmem:[#allocation4 + $0x18] sm:$0xff]
        %v1779 = vmul.f32 %v1753, %v1775
        %v1780 = vmul.f32 %v1760, %v1776
        %v1781 = vmul.f32 %v1767, %v1777
        %v1782 = vmul.f32 %v1774, %v1778
        %v1783 = vsel %vm492, %v1779, 0.0
        %v1784 = vsel %vm492, %v1780, 0.0
        %v1785 = vadd.f32 %v1783, %v1784
        %v1786 = vsel %vm492, %v1781, 0.0
        %v1787 = vadd.f32 %v1785, %v1786
        %v1788 = vsel %vm492, %v1782, 0.0
        %v1789 = vadd.f32 %v1787, %v1788
        %1790 = vst.msk [vmem:[#allocation6] sm:$0xff] %vm492, %v1789
        %p1791 = scmp.ge.s32.totalorder %s1303, 4
        // Predicated region
        $region85: #{tpu_custom_call.1} parent=55 // pred_check
          %p1792 = pneg %p1791
        $region86: #{tpu_custom_call.1} parent=55 // pred_check_branch
          %1794 = sbr.rel (%p1792) target = $region88
        $region87: #{tpu_custom_call.1} parent=55 // pred_region
          %v1795 = vld [vmem:[#allocation6] sm:$0xff]
          %v1796 = vlaneseq
          %v1797 = vshrl.u32 %v1796, 7
          %v1798 = vsub.s32 4, %v1797
          %v1799 = vrot.slane %v1731, %v1798
          %1801 = vbcast.lane.b32.xlu0 %v1799, 256
          %v1802 = vpop.permute.xlu0 %1801
          %v1803 = vlaneseq
          %v1804 = vshrl.u32 %v1803, 7
          %v1805 = vsub.s32 5, %v1804
          %v1806 = vrot.slane %v1731, %v1805
          %1808 = vbcast.lane.b32.xlu0 %v1806, 256
          %v1809 = vpop.permute.xlu0 %1808
          %v1810 = vlaneseq
          %v1811 = vshrl.u32 %v1810, 7
          %v1812 = vsub.s32 6, %v1811
          %v1813 = vrot.slane %v1731, %v1812
          %1815 = vbcast.lane.b32.xlu0 %v1813, 256
          %v1816 = vpop.permute.xlu0 %1815
          %v1817 = vlaneseq
          %v1818 = vshrl.u32 %v1817, 7
          %v1819 = vsub.s32 7, %v1818
          %v1820 = vrot.slane %v1731, %v1819
          %1822 = vbcast.lane.b32.xlu0 %v1820, 256
          %v1823 = vpop.permute.xlu0 %1822
          %s1824 = scalar_lea.vmem [#allocation4], 32
          %v1825 = vld [vmem:[%s1824] sm:$0xff]
          %v1826 = vld [vmem:[%s1824 + $0x8] sm:$0xff]
          %v1827 = vld [vmem:[%s1824 + $0x10] sm:$0xff]
          %v1828 = vld [vmem:[%s1824 + $0x18] sm:$0xff]
          %v1829 = vmul.f32 %v1802, %v1825
          %v1830 = vmul.f32 %v1809, %v1826
          %v1831 = vmul.f32 %v1816, %v1827
          %v1832 = vmul.f32 %v1823, %v1828
          %v1833 = vsel %vm492, %v1829, 0.0
          %v1834 = vsel %vm492, %v1830, 0.0
          %v1835 = vadd.f32 %v1833, %v1834
          %v1836 = vsel %vm492, %v1831, 0.0
          %v1837 = vadd.f32 %v1835, %v1836
          %v1838 = vsel %vm492, %v1832, 0.0
          %v1839 = vadd.f32 %v1837, %v1838
          %v1840 = vadd.f32 %v1795, %v1839
          %1841 = vst.msk [vmem:[#allocation6] sm:$0xff] %vm492, %v1840
        $region88: #{tpu_custom_call.1} parent=55 // pred_fallthru
          _
        %v1842 = vld [vmem:[#allocation6] sm:$0xff]
        %1844 = vrot.lane.b32.xlu0 %v1842, 96
        %v1845 = vpop.permute.xlu0 %1844
        %v1847 = vadd.f32 %v1631, %v1845
        %p1848 = scmp.lt.s32.totalorder %s1642, 8
        // Predicated region
        $region89: #{tpu_custom_call.1} parent=55 // pred_check
          %p1849 = pneg %p1848
        $region90: #{tpu_custom_call.1} parent=55 // pred_check_branch
          %1851 = sbr.rel (%p1849) target = $region92
        $region91: #{tpu_custom_call.1} parent=55 // pred_region
          %1853 = vrot.lane.b32.xlu0 %v1847, 32
          %v1854 = vpop.permute.xlu0 %1853
          %s1856 = smul.u32 %s1642, 8
          %s1857 = scalar_lea.vmem [#allocation4], %s1856
          %1858 = vst.msk [vmem:[%s1857] sm:$0xff] %vm492, %v1854
        $region92: #{tpu_custom_call.1} parent=55 // pred_fallthru
          _
        %v1859 = vtanh.pop %v1847
        %v1860 = vmul.f32 %v1859, %v841
        %1862 = vrot.lane.b32.xlu0 %v1860, 32
        %v1863 = vpop.permute.xlu0 %1862
        %v1865 = vsel %vm492, %v1863, 0.0
        %1866 = vadd.xlane.f32.xlu0 %v1865
        %v1867 = vpop.xlane.xlu0 %1866
        %vm1868 = vcmp.eq.s32.totalorder %v376, %v1643
        %v1869 = vsel %vm1868, %v1867, %v1530
        %1871 = vrot.lane.b32.xlu0 %v1847, 32
        %v1872 = vpop.permute.xlu0 %1871
        %1874 = vst.msk [vmem:[#allocation2] sm:$0xff] %vm492, %v1872
        %1876 = vrot.lane.b32.xlu0 %v1625, 96
        %v1877 = vpop.permute.xlu0 %1876
        %1879 = vst.msk [vmem:[#allocation3] sm:$0xff] %vm492, %v1877
        %1880 = vst.msk [vmem:[#allocation5] sm:$0xff] %vm620, %v1869
        %v1882 = vlaneseq
        %v1883 = vshrl.u32 %v1882, 7
        %v1884 = vsub.s32 0, %v1883
        %v1885 = vrot.slane %v362, %v1884
        %1891 = vrot.lane.b32.xlu0 %v597, 32
        %v1892 = vpop.permute.xlu0 %1891
        %1893 = vrot.lane.b32.xlu0 %v953, 32
        %v1894 = vpop.permute.xlu0 %1893
        %1895 = vrot.lane.b32.xlu0 %v1292, 32
        %v1896 = vpop.permute.xlu0 %1895
        %1897 = vrot.lane.b32.xlu0 %v1631, 32
        %v1898 = vpop.permute.xlu0 %1897
        %v1899 = vsel %vm492, %v1892, 0
        %v1901 = vsel %vm492, %v1894, 0
        %v1903 = vsel %vm492, %v1896, 0
        %v1905 = vsel %vm492, %v1898, 0
        %1907 = vmatprep.subr.mxu0 0.0
        %1908 = vmatpush1.msra.mxu0 %v358
        %1909 = vmatprep.subr.mxu0 0.0
        %1910 = vmatpush1.msra.mxu0 %v359
        %1911 = vmatprep.subr.mxu0 0.0
        %1912 = vmatpush1.msra.mxu0 %v360
        %1913 = vmatprep.subr.mxu0 0.0
        %1914 = vmatpush1.msra.mxu0 %v361
        %1915 = vmatprep.subr.mxu0 0.0
        %1916 = vmatpush1.msra.mxu0 0.0
        %1917 = vmatprep.subr.mxu0 0.0
        %1918 = vmatpush1.msra.mxu0 0.0
        %1919 = vmatprep.subr.mxu0 0.0
        %1920 = vmatpush1.msra.mxu0 0.0
        %1921 = vmatprep.subr.mxu0 0.0
        %1922 = vmatpush1.msra.mxu0 0.0
        %1923 = vmatprep.subr.mxu0 0.0
        %1924 = vmatpush1.msra.mxu0 0.0
        %1925 = vmatprep.subr.mxu0 0.0
        %1926 = vmatpush1.msra.mxu0 0.0
        %1927 = vmatprep.subr.mxu0 0.0
        %1928 = vmatpush1.msra.mxu0 0.0
        %1929 = vmatprep.subr.mxu0 0.0
        %1930 = vmatpush1.msra.mxu0 0.0
        %1931 = vmatprep.subr.mxu0 0.0
        %1932 = vmatpush1.msra.mxu0 0.0
        %1933 = vmatprep.subr.mxu0 0.0
        %1934 = vmatpush1.msra.mxu0 0.0
        %1935 = vmatprep.subr.mxu0 0.0
        %1936 = vmatpush1.msra.mxu0 0.0
        %1937 = vmatprep.subr.mxu0 0.0
        %1938 = vmatpush1.msra.mxu0 0.0
        %1939 = vmatprep.subr.mxu0 0.0
        %1940 = vmatpush1.msra.mxu0 0.0
        %1941 = vmatprep.subr.mxu0 0.0
        %1942 = vmatpush1.msra.mxu0 0.0
        %1943 = vmatprep.subr.mxu0 0.0
        %1944 = vmatpush1.msra.mxu0 0.0
        %1945 = vmatprep.subr.mxu0 0.0
        %1946 = vmatpush1.msra.mxu0 0.0
        %1947 = vmatprep.subr.mxu0 0.0
        %1948 = vmatpush1.msra.mxu0 0.0
        %1949 = vmatprep.subr.mxu0 0.0
        %1950 = vmatpush1.msra.mxu0 0.0
        %1951 = vmatprep.subr.mxu0 0.0
        %1952 = vmatpush1.msra.mxu0 0.0
        %1953 = vmatprep.subr.mxu0 0.0
        %1954 = vmatpush1.msra.mxu0 0.0
        %1955 = vmatprep.subr.mxu0 0.0
        %1956 = vmatpush1.msra.mxu0 0.0
        %1957 = vmatprep.subr.mxu0 0.0
        %1958 = vmatpush1.msra.mxu0 0.0
        %1959 = vmatprep.subr.mxu0 0.0
        %1960 = vmatpush1.msra.mxu0 0.0
        %1961 = vmatprep.subr.mxu0 0.0
        %1962 = vmatpush1.msra.mxu0 0.0
        %1963 = vmatprep.subr.mxu0 0.0
        %1964 = vmatpush1.msra.mxu0 0.0
        %1965 = vmatprep.subr.mxu0 0.0
        %1966 = vmatpush1.msra.mxu0 0.0
        %1967 = vmatprep.subr.mxu0 0.0
        %1968 = vmatpush1.msra.mxu0 0.0
        %1969 = vmatprep.subr.mxu0 0.0
        %1970 = vmatpush1.msra.mxu0 0.0
        %1971 = vmatprep.mubr.f32.mxu0 0.0
        %1972 = vmatmul.mubr.f32.gmra.mrb[0].mxu0 %v1899
        %v1973 = vpop.f32.mrb[0].mxu0
        %v1974 = vadd.f32 %v1885, %v1973
        %v1975 = vpop.f32.mrb[0].mxu0
        %1976 = vmatprep.mubr.f32.mxu0 0.0
        %1977 = vmatmul.mubr.f32.gmra.mrb[0].mxu0 %v1901
        %v1978 = vpop.f32.mrb[0].mxu0
        %v1979 = vadd.f32 %v1885, %v1978
        %v1980 = vpop.f32.mrb[0].mxu0
        %1981 = vmatprep.mubr.f32.mxu0 0.0
        %1982 = vmatmul.mubr.f32.gmra.mrb[0].mxu0 %v1903
        %v1983 = vpop.f32.mrb[0].mxu0
        %v1984 = vadd.f32 %v1885, %v1983
        %v1985 = vpop.f32.mrb[0].mxu0
        %1986 = vmatprep.mubr.f32.mxu0 0.0
        %1987 = vmatmul.mubr.f32.gmra.mrb[0].mxu0 %v1905
        %v1988 = vpop.f32.mrb[0].mxu0
        %v1989 = vadd.f32 %v1885, %v1988
        %v1990 = vpop.f32.mrb[0].mxu0
        %1991 = vdwg.mxu0
        %v1992 = vsel %vm492, %v817, 0
        %v1994 = vsel %vm492, %v1164, 0
        %v1996 = vsel %vm492, %v1503, 0
        %v1998 = vsel %vm492, %v1842, 0
        %2000 = vmatprep.subr.mxu0 0.0
        %2001 = vmatpush1.msra.mxu0 %v370
        %2002 = vmatprep.subr.mxu0 0.0
        %2003 = vmatpush1.msra.mxu0 %v371
        %2004 = vmatprep.subr.mxu0 0.0
        %2005 = vmatpush1.msra.mxu0 %v372
        %2006 = vmatprep.subr.mxu0 0.0
        %2007 = vmatpush1.msra.mxu0 %v373
        %2008 = vmatprep.subr.mxu0 0.0
        %2009 = vmatpush1.msra.mxu0 0.0
        %2010 = vmatprep.subr.mxu0 0.0
        %2011 = vmatpush1.msra.mxu0 0.0
        %2012 = vmatprep.subr.mxu0 0.0
        %2013 = vmatpush1.msra.mxu0 0.0
        %2014 = vmatprep.subr.mxu0 0.0
        %2015 = vmatpush1.msra.mxu0 0.0
        %2016 = vmatprep.subr.mxu0 0.0
        %2017 = vmatpush1.msra.mxu0 0.0
        %2018 = vmatprep.subr.mxu0 0.0
        %2019 = vmatpush1.msra.mxu0 0.0
        %2020 = vmatprep.subr.mxu0 0.0
        %2021 = vmatpush1.msra.mxu0 0.0
        %2022 = vmatprep.subr.mxu0 0.0
        %2023 = vmatpush1.msra.mxu0 0.0
        %2024 = vmatprep.subr.mxu0 0.0
        %2025 = vmatpush1.msra.mxu0 0.0
        %2026 = vmatprep.subr.mxu0 0.0
        %2027 = vmatpush1.msra.mxu0 0.0
        %2028 = vmatprep.subr.mxu0 0.0
        %2029 = vmatpush1.msra.mxu0 0.0
        %2030 = vmatprep.subr.mxu0 0.0
        %2031 = vmatpush1.msra.mxu0 0.0
        %2032 = vmatprep.subr.mxu0 0.0
        %2033 = vmatpush1.msra.mxu0 0.0
        %2034 = vmatprep.subr.mxu0 0.0
        %2035 = vmatpush1.msra.mxu0 0.0
        %2036 = vmatprep.subr.mxu0 0.0
        %2037 = vmatpush1.msra.mxu0 0.0
        %2038 = vmatprep.subr.mxu0 0.0
        %2039 = vmatpush1.msra.mxu0 0.0
        %2040 = vmatprep.subr.mxu0 0.0
        %2041 = vmatpush1.msra.mxu0 0.0
        %2042 = vmatprep.subr.mxu0 0.0
        %2043 = vmatpush1.msra.mxu0 0.0
        %2044 = vmatprep.subr.mxu0 0.0
        %2045 = vmatpush1.msra.mxu0 0.0
        %2046 = vmatprep.subr.mxu0 0.0
        %2047 = vmatpush1.msra.mxu0 0.0
        %2048 = vmatprep.subr.mxu0 0.0
        %2049 = vmatpush1.msra.mxu0 0.0
        %2050 = vmatprep.subr.mxu0 0.0
        %2051 = vmatpush1.msra.mxu0 0.0
        %2052 = vmatprep.subr.mxu0 0.0
        %2053 = vmatpush1.msra.mxu0 0.0
        %2054 = vmatprep.subr.mxu0 0.0
        %2055 = vmatpush1.msra.mxu0 0.0
        %2056 = vmatprep.subr.mxu0 0.0
        %2057 = vmatpush1.msra.mxu0 0.0
        %2058 = vmatprep.subr.mxu0 0.0
        %2059 = vmatpush1.msra.mxu0 0.0
        %2060 = vmatprep.subr.mxu0 0.0
        %2061 = vmatpush1.msra.mxu0 0.0
        %2062 = vmatprep.subr.mxu0 0.0
        %2063 = vmatpush1.msra.mxu0 0.0
        %2064 = vmatprep.mubr.f32.mxu0 0.0
        %2065 = vmatmul.mubr.f32.gmra.mrb[0].mxu0 %v1992
        %v2066 = vpop.f32.mrb[0].mxu0
        %v2067 = vadd.f32 0.0, %v2066
        %v2068 = vpop.f32.mrb[0].mxu0
        %2069 = vmatprep.mubr.f32.mxu0 0.0
        %2070 = vmatmul.mubr.f32.gmra.mrb[0].mxu0 %v1994
        %v2071 = vpop.f32.mrb[0].mxu0
        %v2072 = vadd.f32 0.0, %v2071
        %v2073 = vpop.f32.mrb[0].mxu0
        %2074 = vmatprep.mubr.f32.mxu0 0.0
        %2075 = vmatmul.mubr.f32.gmra.mrb[0].mxu0 %v1996
        %v2076 = vpop.f32.mrb[0].mxu0
        %v2077 = vadd.f32 0.0, %v2076
        %v2078 = vpop.f32.mrb[0].mxu0
        %2079 = vmatprep.mubr.f32.mxu0 0.0
        %2080 = vmatmul.mubr.f32.gmra.mrb[0].mxu0 %v1998
        %v2081 = vpop.f32.mrb[0].mxu0
        %v2082 = vadd.f32 0.0, %v2081
        %v2083 = vpop.f32.mrb[0].mxu0
        %2084 = vdwg.mxu0
        %v2085 = vsel %vm492, %v1872, 0
        %2087 = vmatprep.subr.mxu0 0.0
        %2088 = vmatpush1.msra.mxu0 %v365
        %2089 = vmatprep.subr.mxu0 0.0
        %2090 = vmatpush1.msra.mxu0 %v366
        %2091 = vmatprep.subr.mxu0 0.0
        %2092 = vmatpush1.msra.mxu0 %v367
        %2093 = vmatprep.subr.mxu0 0.0
        %2094 = vmatpush1.msra.mxu0 %v368
        %2095 = vmatprep.subr.mxu0 0.0
        %2096 = vmatpush1.msra.mxu0 0.0
        %2097 = vmatprep.subr.mxu0 0.0
        %2098 = vmatpush1.msra.mxu0 0.0
        %2099 = vmatprep.subr.mxu0 0.0
        %2100 = vmatpush1.msra.mxu0 0.0
        %2101 = vmatprep.subr.mxu0 0.0
        %2102 = vmatpush1.msra.mxu0 0.0
        %2103 = vmatprep.subr.mxu0 0.0
        %2104 = vmatpush1.msra.mxu0 0.0
        %2105 = vmatprep.subr.mxu0 0.0
        %2106 = vmatpush1.msra.mxu0 0.0
        %2107 = vmatprep.subr.mxu0 0.0
        %2108 = vmatpush1.msra.mxu0 0.0
        %2109 = vmatprep.subr.mxu0 0.0
        %2110 = vmatpush1.msra.mxu0 0.0
        %2111 = vmatprep.subr.mxu0 0.0
        %2112 = vmatpush1.msra.mxu0 0.0
        %2113 = vmatprep.subr.mxu0 0.0
        %2114 = vmatpush1.msra.mxu0 0.0
        %2115 = vmatprep.subr.mxu0 0.0
        %2116 = vmatpush1.msra.mxu0 0.0
        %2117 = vmatprep.subr.mxu0 0.0
        %2118 = vmatpush1.msra.mxu0 0.0
        %2119 = vmatprep.subr.mxu0 0.0
        %2120 = vmatpush1.msra.mxu0 0.0
        %2121 = vmatprep.subr.mxu0 0.0
        %2122 = vmatpush1.msra.mxu0 0.0
        %2123 = vmatprep.subr.mxu0 0.0
        %2124 = vmatpush1.msra.mxu0 0.0
        %2125 = vmatprep.subr.mxu0 0.0
        %2126 = vmatpush1.msra.mxu0 0.0
        %2127 = vmatprep.subr.mxu0 0.0
        %2128 = vmatpush1.msra.mxu0 0.0
        %2129 = vmatprep.subr.mxu0 0.0
        %2130 = vmatpush1.msra.mxu0 0.0
        %2131 = vmatprep.subr.mxu0 0.0
        %2132 = vmatpush1.msra.mxu0 0.0
        %2133 = vmatprep.subr.mxu0 0.0
        %2134 = vmatpush1.msra.mxu0 0.0
        %2135 = vmatprep.subr.mxu0 0.0
        %2136 = vmatpush1.msra.mxu0 0.0
        %2137 = vmatprep.subr.mxu0 0.0
        %2138 = vmatpush1.msra.mxu0 0.0
        %2139 = vmatprep.subr.mxu0 0.0
        %2140 = vmatpush1.msra.mxu0 0.0
        %2141 = vmatprep.subr.mxu0 0.0
        %2142 = vmatpush1.msra.mxu0 0.0
        %2143 = vmatprep.subr.mxu0 0.0
        %2144 = vmatpush1.msra.mxu0 0.0
        %2145 = vmatprep.subr.mxu0 0.0
        %2146 = vmatpush1.msra.mxu0 0.0
        %2147 = vmatprep.subr.mxu0 0.0
        %2148 = vmatpush1.msra.mxu0 0.0
        %2149 = vmatprep.subr.mxu0 0.0
        %2150 = vmatpush1.msra.mxu0 0.0
        %2151 = vmatprep.mubr.f32.mxu0 0.0
        %2152 = vmatmul.mubr.f32.gmra.mrb[0].mxu0 %v856
        %v2153 = vpop.f32.mrb[0].mxu0
        %v2154 = vadd.f32 %v2067, %v2153
        %v2155 = vpop.f32.mrb[0].mxu0
        %2156 = vmatprep.mubr.f32.mxu0 0.0
        %2157 = vmatmul.mubr.f32.gmra.mrb[0].mxu0 %v1195
        %v2158 = vpop.f32.mrb[0].mxu0
        %v2159 = vadd.f32 %v2072, %v2158
        %v2160 = vpop.f32.mrb[0].mxu0
        %2161 = vmatprep.mubr.f32.mxu0 0.0
        %2162 = vmatmul.mubr.f32.gmra.mrb[0].mxu0 %v1534
        %v2163 = vpop.f32.mrb[0].mxu0
        %v2164 = vadd.f32 %v2077, %v2163
        %v2165 = vpop.f32.mrb[0].mxu0
        %2166 = vmatprep.mubr.f32.mxu0 0.0
        %2167 = vmatmul.mubr.f32.gmra.mrb[0].mxu0 %v2085
        %v2168 = vpop.f32.mrb[0].mxu0
        %v2169 = vadd.f32 %v2082, %v2168
        %v2170 = vpop.f32.mrb[0].mxu0
        %2171 = vdwg.mxu0
        %v2173 = vlaneseq
        %v2174 = vshrl.u32 %v2173, 7
        %v2175 = vsub.s32 0, %v2174
        %v2176 = vrot.slane %v374, %v2175
        %v2178 = vadd.f32 %v2154, %v2176
        %v2179 = vadd.f32 %v2159, %v2176
        %v2180 = vadd.f32 %v2164, %v2176
        %v2181 = vadd.f32 %v2169, %v2176
        %2182 = vrot.lane.b32.xlu0 %v822, 64
        %v2183 = vpop.permute.xlu0 %2182
        %2184 = vrot.lane.b32.xlu0 %v1169, 64
        %v2185 = vpop.permute.xlu0 %2184
        %2186 = vrot.lane.b32.xlu0 %v1508, 64
        %v2187 = vpop.permute.xlu0 %2186
        %2188 = vrot.lane.b32.xlu0 %v1847, 64
        %v2189 = vpop.permute.xlu0 %2188
        %2198 = vrot.lane.b32.xlu0 %v2178, 64
        %v2199 = vpop.permute.xlu0 %2198
        %2200 = vrot.lane.b32.xlu0 %v2179, 64
        %v2201 = vpop.permute.xlu0 %2200
        %2202 = vrot.lane.b32.xlu0 %v2180, 64
        %v2203 = vpop.permute.xlu0 %2202
        %2204 = vrot.lane.b32.xlu0 %v2181, 64
        %v2205 = vpop.permute.xlu0 %2204
        %v2210 = vsel %vm492, %v1974, %v2183
        %v2211 = vsel %vm492, %v1979, %v2185
        %v2212 = vsel %vm492, %v1984, %v2187
        %v2213 = vsel %vm492, %v1989, %v2189
        %vm2214 = vcmask 523264
        %v2215 = vsel %vm2214, %v2210, %v2199
        %v2216 = vsel %vm2214, %v2211, %v2201
        %v2217 = vsel %vm2214, %v2212, %v2203
        %v2218 = vsel %vm2214, %v2213, %v2205
        %vm2219 = vcmask 556032
        %v2220 = vsel %vm2219, %v2215, 0.0
        %v2221 = vsel %vm2219, %v2216, 0.0
        %v2222 = vsel %vm2219, %v2217, 0.0
        %v2223 = vsel %vm2219, %v2218, 0.0
        %2224 = vst [vmem:[%s326] sm:$0xff] %v2220
        %2225 = vst [vmem:[%s326 + $0x8] sm:$0xff] %v2221
        %2226 = vst [vmem:[%s326 + $0x10] sm:$0xff] %v2222
        %2227 = vst [vmem:[%s326 + $0x18] sm:$0xff] %v2223
        %s2228 = sand.u32 %s225, 1
        %s2229 = scalar_lea.sflag [#allocation8], %s2228
        %s2230 = sand.u32 %s225, 1
        %s2231 = smul.addr %s2230, 32
        %s2232 = scalar_lea.vmem [#allocation7], %s2231
        // Predicated region
        $region93: #{tpu_custom_call.1} parent=55 // pred_check
          %p2233 = pneg %p235
        $region94: #{tpu_custom_call.1} parent=55 // pred_check_branch
          %2235 = sbr.rel (%p2233) target = $region96
        $region95: #{tpu_custom_call.1} parent=55 // pred_region
          %s2236 = smul.u32 4, %s23
          %s2238 = ssub.s32 512, 512
          %2239 = vsyncadd %s2229, %s2238
          %s2240 = smul.addr %s2236, 128
          %s2241 = scalar_lea.hbm %s9, %s2240
          %s2242 = sshll.u32 %s2232, 4
          %s2243 = int_to_ptr.vmem [resolvable:$true] %s2242
          %2248 = dma.vmem_to_hbm [thread:$0]  %s2243, 512, %s2241, %s2229, 128, 128, 8
        $region96: #{tpu_custom_call.1} parent=55 // pred_fallthru
          _
      $region56: #{tpu_custom_call.1} parent=5 // pred_fallthru
        _
      %p2249 = scmp.le.s32.totalorder 2, %s18
      // Predicated region
      $region97: #{tpu_custom_call.1} parent=5 // pred_check
        %p2250 = pneg %p2249
      $region98: #{tpu_custom_call.1} parent=5 // pred_check_branch
        %2252 = sbr.rel (%p2250) target = $region100
      $region99: #{tpu_custom_call.1} parent=5 // pred_region
        %s2253 = ssub.s32 %s18, 2
        // Predicated region
        $region101: #{tpu_custom_call.1} parent=99 // pred_check
          %p2254 = pneg %p241
        $region102: #{tpu_custom_call.1} parent=99 // pred_check_branch
          %2256 = sbr.rel (%p2254) target = $region104
        $region103: #{tpu_custom_call.1} parent=99 // pred_region
          %s2257 = sand.u32 %s226, 1
          %s2258 = scalar_lea.sflag [#allocation8], %s2257
          %s2259 = sand.u32 %s226, 1
          %s2260 = smul.addr %s2259, 32
          %s2261 = scalar_lea.vmem [#allocation7], %s2260
          %2262 = dma.done %s2258, 512
        $region104: #{tpu_custom_call.1} parent=99 // pred_fallthru
          _
      $region100: #{tpu_custom_call.1} parent=5 // pred_fallthru
        _
    $region6: #{tpu_custom_call.1} parent=1 // loop_footer
      %s22 = sadd.s32 1, %s18
    $region7: #{tpu_custom_call.1} parent=1 // loop_footer_branch
      %17 = sbr.rel target = $region3
    $region8: #{tpu_custom_call.1} parent=1 // loop_exit
      _
    %2263 = vsyncpa [#allocation8], 1
    %s2264 = scalar_lea.sflag [#allocation8], 1
    %2265 = vsyncpa %s2264, 1

</llo_original>
